<compile_context>
chip_gen: v7x
topology: tpu7x:2x2x1
jax: 0.10.0
libtpu: 0.0.40
codegen_flags: <defaults>
</compile_context>

<pallas_src>
import jax
import jax.numpy as jnp
from jax.experimental import pallas as pl
from jax.experimental.pallas import tpu as pltpu

EPSILON = 1e-8        # interpolation epsilon (module constant)
GN_EPS = 1e-5         # torch.nn.GroupNorm default eps
GROUP_SIZE = 16       # out_channels // 16 groups => 16 channels per group
K_NEIGHBORS = 3       # pointops.nearestneighbor returns 3-NN


def _group_pool_matrix(cout):
    """(Cout, Cout) 0/1 matrix; P[c, c'] = 1 iff c, c' share a GroupNorm group."""
    g = jnp.arange(cout) // GROUP_SIZE
    return (g[:, None] == g[None, :]).astype(jnp.float32)


def _gn_relu(h, pool, gamma, beta):
    """GroupNorm (contiguous groups of 16 channels) + ReLU on h: (Cout, N) f32."""
    n = h.shape[1]
    count = jnp.float32(n * GROUP_SIZE)
    # centered two-pass statistics in f32 (avoids E[x^2]-E[x]^2 cancellation)
    mean_c = jnp.dot(pool, jnp.sum(h, axis=1, keepdims=True),
                     preferred_element_type=jnp.float32) / count      # (Cout, 1)
    hc = h - mean_c
    var_c = jnp.dot(pool, jnp.sum(hc * hc, axis=1, keepdims=True),
                    preferred_element_type=jnp.float32) / count       # (Cout, 1)
    y = hc * jax.lax.rsqrt(var_c + GN_EPS) * gamma + beta
    return jnp.maximum(y, 0.0)


# --------------------------------------------------------------------------
# Kernel 1: fused Conv1d(kernel_size=1, bias=False) + GroupNorm + ReLU
# (C, N) layout, one grid step per batch element (used for linear2 / x2).
# --------------------------------------------------------------------------
def _linear_gn_relu_kernel(x_ref, w_ref, pool_ref, gamma_ref, beta_ref, o_ref):
    x = x_ref[0]                     # (Cin, N)
    w = w_ref[...]                   # (Cout, Cin)
    # 1x1 conv == channel matmul; bf16 operands, f32 accumulate
    h = jnp.dot(w.astype(jnp.bfloat16), x.astype(jnp.bfloat16),
                preferred_element_type=jnp.float32)                   # (Cout, N)
    o_ref[0] = _gn_relu(h, pool_ref[...], gamma_ref[...], beta_ref[...])


def linear_gn_relu(x_cn, w, gamma, beta):
    """x_cn: (B, Cin, N) NCW -> (B, Cout, N) NCW."""
    B, Cin, N = x_cn.shape
    Cout = w.shape[0]
    pool = _group_pool_matrix(Cout)
    # NOTE: for very large N*Cout this kernel should be N-tiled with a
    # stats-accumulation pass; at point-transformer sizes a full (Cout, N)
    # block per batch element fits comfortably in VMEM.
    return pl.pallas_call(
        _linear_gn_relu_kernel,
        out_shape=jax.ShapeDtypeStruct((B, Cout, N), jnp.float32),
        grid=(B,),
        in_specs=[
            pl.BlockSpec((1, Cin, N), lambda b: (b, 0, 0)),
            pl.BlockSpec((Cout, Cin), lambda b: (0, 0)),
            pl.BlockSpec((Cout, Cout), lambda b: (0, 0)),
            pl.BlockSpec((Cout, 1), lambda b: (0, 0)),
            pl.BlockSpec((Cout, 1), lambda b: (0, 0)),
        ],
        out_specs=pl.BlockSpec((1, Cout, N), lambda b: (b, 0, 0)),
        compiler_params=pltpu.CompilerParams(dimension_semantics=("parallel",)),
    )(x_cn, w, pool, gamma.reshape(Cout, 1), beta.reshape(Cout, 1))


# --------------------------------------------------------------------------
# Kernel 2 (fused): linear1 (once per batch, into VMEM scratch) + 3-NN +
# inverse-distance interpolation + skip add, tiled over N2.
# --------------------------------------------------------------------------
def _fused_up_kernel(x1_ref, w1_ref, pool_ref, gamma1_ref, beta1_ref,
                     p1_ref, p2t_ref, f2_ref, o_ref, f1_sc):
    # ---- linear1: Conv1x1 + GroupNorm + ReLU, once per batch element -------
    @pl.when(pl.program_id(1) == 0)
    def _():
        h = jnp.dot(w1_ref[...].astype(jnp.bfloat16),
                    x1_ref[0].astype(jnp.bfloat16),
                    preferred_element_type=jnp.float32)               # (Cout, N1)
        f1 = _gn_relu(h, pool_ref[...], gamma1_ref[...], beta1_ref[...])
        f1_sc[...] = f1.astype(jnp.bfloat16)

    p1 = p1_ref[0]                   # (N1, 3)  reference (coarse) points
    p2t = p2t_ref[0]                 # (3, T)   query (dense) points, transposed
    n1 = p1.shape[0]
    t = p2t.shape[1]

    # ---- squared pairwise distances, pure VPU (no K=3 MXU contraction) -----
    d = jnp.zeros((n1, t), jnp.float32)
    for c in range(3):
        diff = p1[:, c:c + 1] - p2t[c:c + 1, :]                       # (N1, T)
        d = d + diff * diff

    # ---- 3-NN selection (first-index-wins on ties, matching pointops) ------
    row = jax.lax.broadcasted_iota(jnp.int32, (n1, t), 0)
    wmat = jnp.zeros((n1, t), jnp.float32)
    wsum = jnp.zeros((1, t), jnp.float32)
    big = jnp.float32(1e30)
    for _ in range(K_NEIGHBORS):
        dmin = jnp.min(d, axis=0, keepdims=True)                      # (1, T)
        first = jnp.min(jnp.where(d <= dmin, row, n1), axis=0, keepdims=True)
        sel = row == first                                            # one-hot/col
        w = 1.0 / (dmin + EPSILON)                                    # dist_recip
        wmat = wmat + jnp.where(sel, w, 0.0)                          # VPU only
        wsum = wsum + w
        d = jnp.where(sel, big, d)                                    # mask out

    # ---- single gather matmul + skip add ------------------------------------
    wnorm = (wmat * (1.0 / wsum)).astype(jnp.bfloat16)                # (N1, T)
    up = jnp.dot(f1_sc[...], wnorm, preferred_element_type=jnp.float32)  # (Cout, T)
    o_ref[0] = f2_ref[0] + up


def _pick_tile(n2):
    for t in (512, 256, 128):
        if n2 % t == 0:
            return t
    return n2            # fallback: single full-extent block


def fused_interp_up(p1, p2, x1, f2, w1, gamma1, beta1):
    """p1:(B,N1,3)  p2:(B,N2,3)  x1:(B,Cin,N1)  f2:(B,Cout,N2) -> (B,Cout,N2)."""
    B, Cin, N1 = x1.shape
    Cout = w1.shape[0]
    N2 = f2.shape[-1]
    tile = _pick_tile(N2)
    pool = _group_pool_matrix(Cout)
    p2t = jnp.transpose(p2, (0, 2, 1))          # (B, 3, N2): tiny coord transpose

    return pl.pallas_call(
        _fused_up_kernel,
        out_shape=jax.ShapeDtypeStruct((B, Cout, N2), jnp.float32),
        grid=(B, N2 // tile),
        in_specs=[
            pl.BlockSpec((1, Cin, N1), lambda b, j: (b, 0, 0)),       # x1 (resident)
            pl.BlockSpec((Cout, Cin), lambda b, j: (0, 0)),           # w1
            pl.BlockSpec((Cout, Cout), lambda b, j: (0, 0)),          # group pool
            pl.BlockSpec((Cout, 1), lambda b, j: (0, 0)),             # gamma1
            pl.BlockSpec((Cout, 1), lambda b, j: (0, 0)),             # beta1
            pl.BlockSpec((1, N1, 3), lambda b, j: (b, 0, 0)),         # p1 (resident)
            pl.BlockSpec((1, 3, tile), lambda b, j: (b, 0, j)),       # p2 tile
            pl.BlockSpec((1, Cout, tile), lambda b, j: (b, 0, j)),    # f2 tile
        ],
        out_specs=pl.BlockSpec((1, Cout, tile), lambda b, j: (b, 0, j)),
        scratch_shapes=[pltpu.VMEM((Cout, N1), jnp.bfloat16)],        # f1 resident
        compiler_params=pltpu.CompilerParams(
            dimension_semantics=("parallel", "arbitrary")),
    )(x1, w1, pool, gamma1.reshape(Cout, 1), beta1.reshape(Cout, 1), p1, p2t, f2)


# --------------------------------------------------------------------------
# TransitionUp forward
# --------------------------------------------------------------------------
def transition_up(p1, x1, p2, x2, params):
    """
    p1: (B, N1, 3) coarse points,   x1: (B, Cin,  N1)  (PyTorch NCW)
    p2: (B, N2, 3) dense points,    x2: (B, Cskip, N2) (PyTorch NCW)
    returns [p2, y] with y: (B, Cout, N2) (PyTorch NCW)
    """
    f2 = linear_gn_relu(x2, params["w2"], params["gamma2"], params["beta2"])
    y = fused_interp_up(p1, p2, x1, f2,
                        params["w1"], params["gamma1"], params["beta1"])
    return [p2, y]


if __name__ == "__main__":
    key = jax.random.PRNGKey(0)
    B = 2
    Cin, Cskip, Cout = 32, 32, 32      # must be multiples of 16
    N1, N2 = 128, 256                  # coarse / dense point counts

    ks = jax.random.split(key, 10)
    p1 = jax.random.normal(ks[0], (B, N1, 3), jnp.float32)
    p2 = jax.random.normal(ks[1], (B, N2, 3), jnp.float32)
    x1 = jax.random.normal(ks[2], (B, Cin, N1), jnp.float32)
    x2 = jax.random.normal(ks[3], (B, Cskip, N2), jnp.float32)

    params = {
        # Conv1d weight (Cout, Cin, 1) stored as (Cout, Cin)
        "w1": 0.1 * jax.random.normal(ks[4], (Cout, Cin), jnp.float32),
        "gamma1": 1.0 + 0.05 * jax.random.normal(ks[5], (Cout,), jnp.float32),
        "beta1": 0.05 * jax.random.normal(ks[6], (Cout,), jnp.float32),
        "w2": 0.1 * jax.random.normal(ks[7], (Cout, Cskip), jnp.float32),
        "gamma2": 1.0 + 0.05 * jax.random.normal(ks[8], (Cout,), jnp.float32),
        "beta2": 0.05 * jax.random.normal(ks[9], (Cout,), jnp.float32),
    }

    p_out, y = jax.jit(transition_up)(p1, x1, p2, x2, params)
    jax.block_until_ready(y)

    assert p_out.shape == (B, N2, 3)
    assert y.shape == (B, Cout, N2)
    assert bool(jnp.all(jnp.isfinite(y)))
    print("KERNEL_OK")
</pallas_src>

<mosaic_0001>
module attributes {stable_mosaic.version = 11 : i64} {
  func.func @_linear_gn_relu_kernel(%arg0: i32, %arg1: memref<1x32x256xf32, #tpu.memory_space<vmem>>, %arg2: memref<32x32xf32, #tpu.memory_space<vmem>>, %arg3: memref<32x32xf32, #tpu.memory_space<vmem>>, %arg4: memref<32x1xf32, #tpu.memory_space<vmem>>, %arg5: memref<32x1xf32, #tpu.memory_space<vmem>>, %arg6: memref<1x32x256xf32, #tpu.memory_space<vmem>>) attributes {dimension_semantics = [#tpu.dimension_semantics<parallel>], iteration_bounds = array<i64: 2>, scalar_prefetch = 0 : i64, scratch_operands = 0 : i64, tpu.core_type = #tpu.core_type<tc>, window_params = [{transform_indices = @transform_0, window_bounds = array<i64: 1, 32, 256>}, {pipeline_mode = #tpu.pipeline_mode<synchronous>, transform_indices = @transform_1, window_bounds = array<i64: 32, 32>}, {pipeline_mode = #tpu.pipeline_mode<synchronous>, transform_indices = @transform_2, window_bounds = array<i64: 32, 32>}, {pipeline_mode = #tpu.pipeline_mode<synchronous>, transform_indices = @transform_3, window_bounds = array<i64: 32, 1>}, {pipeline_mode = #tpu.pipeline_mode<synchronous>, transform_indices = @transform_4, window_bounds = array<i64: 32, 1>}, {transform_indices = @transform_5, window_bounds = array<i64: 1, 32, 256>}]} {
    %c0 = arith.constant 0 : index
    %c0_0 = arith.constant 0 : index
    %c0_1 = arith.constant 0 : index
    %0 = vector.load %arg1[%c0, %c0_0, %c0_1] : memref<1x32x256xf32, #tpu.memory_space<vmem>>, vector<1x32x256xf32>
    %1 = vector.shape_cast %0 : vector<1x32x256xf32> to vector<32x256xf32>
    %c0_2 = arith.constant 0 : index
    %c0_3 = arith.constant 0 : index
    %2 = vector.load %arg2[%c0_2, %c0_3] : memref<32x32xf32, #tpu.memory_space<vmem>>, vector<32x32xf32>
    %3 = arith.truncf %2 : vector<32x32xf32> to vector<32x32xbf16>
    %4 = arith.truncf %1 : vector<32x256xf32> to vector<32x256xbf16>
    %cst = arith.constant dense<0.000000e+00> : vector<32x256xf32>
    %5 = tpu.matmul %3, %4, %cst {dimension_numbers = #tpu.dot_dimension_numbers<[1], [0], [0], [1], [0, 0, 1, 1], [], []>} : vector<32x32xbf16>, vector<32x256xbf16>, vector<32x256xf32> -> vector<32x256xf32>
    %c0_4 = arith.constant 0 : index
    %c0_5 = arith.constant 0 : index
    %6 = vector.load %arg3[%c0_4, %c0_5] : memref<32x32xf32, #tpu.memory_space<vmem>>, vector<32x32xf32>
    %c0_6 = arith.constant 0 : index
    %c0_7 = arith.constant 0 : index
    %7 = vector.load %arg4[%c0_6, %c0_7] : memref<32x1xf32, #tpu.memory_space<vmem>>, vector<32x1xf32>
    %c0_8 = arith.constant 0 : index
    %c0_9 = arith.constant 0 : index
    %8 = vector.load %arg5[%c0_8, %c0_9] : memref<32x1xf32, #tpu.memory_space<vmem>>, vector<32x1xf32>
    %cst_10 = arith.constant dense<0.000000e+00> : vector<32xf32>
    %9 = vector.multi_reduction <add>, %5, %cst_10 [1] : vector<32x256xf32> to vector<32xf32>
    %10 = vector.shape_cast %9 : vector<32xf32> to vector<32x1xf32>
    %cst_11 = arith.constant dense<0.000000e+00> : vector<32x1xf32>
    %11 = tpu.matmul %6, %10, %cst_11 {dimension_numbers = #tpu.dot_dimension_numbers<[1], [0], [0], [1], [0, 0, 1, 1], [], []>} : vector<32x32xf32>, vector<32x1xf32>, vector<32x1xf32> -> vector<32x1xf32>
    %cst_12 = arith.constant 4.096000e+03 : f32
    %12 = vector.broadcast %cst_12 : f32 to vector<32x1xf32>
    %13 = arith.divf %11, %12 : vector<32x1xf32>
    %14 = vector.broadcast %13 : vector<32x1xf32> to vector<32x256xf32>
    %15 = arith.subf %5, %14 : vector<32x256xf32>
    %16 = arith.mulf %15, %15 : vector<32x256xf32>
    %cst_13 = arith.constant dense<0.000000e+00> : vector<32xf32>
    %17 = vector.multi_reduction <add>, %16, %cst_13 [1] : vector<32x256xf32> to vector<32xf32>
    %18 = vector.shape_cast %17 : vector<32xf32> to vector<32x1xf32>
    %cst_14 = arith.constant dense<0.000000e+00> : vector<32x1xf32>
    %19 = tpu.matmul %6, %18, %cst_14 {dimension_numbers = #tpu.dot_dimension_numbers<[1], [0], [0], [1], [0, 0, 1, 1], [], []>} : vector<32x32xf32>, vector<32x1xf32>, vector<32x1xf32> -> vector<32x1xf32>
    %cst_15 = arith.constant 4.096000e+03 : f32
    %20 = vector.broadcast %cst_15 : f32 to vector<32x1xf32>
    %21 = arith.divf %19, %20 : vector<32x1xf32>
    %cst_16 = arith.constant 9.99999974E-6 : f32
    %22 = vector.broadcast %cst_16 : f32 to vector<32x1xf32>
    %23 = arith.addf %21, %22 : vector<32x1xf32>
    %24 = math.rsqrt %23 : vector<32x1xf32>
    %25 = vector.broadcast %24 : vector<32x1xf32> to vector<32x256xf32>
    %26 = arith.mulf %15, %25 : vector<32x256xf32>
    %27 = vector.broadcast %7 : vector<32x1xf32> to vector<32x256xf32>
    %28 = arith.mulf %26, %27 : vector<32x256xf32>
    %29 = vector.broadcast %8 : vector<32x1xf32> to vector<32x256xf32>
    %30 = arith.addf %28, %29 : vector<32x256xf32>
    %cst_17 = arith.constant 0.000000e+00 : f32
    %31 = vector.broadcast %cst_17 : f32 to vector<32x256xf32>
    %32 = arith.maximumf %30, %31 : vector<32x256xf32>
    %c0_18 = arith.constant 0 : index
    %c0_19 = arith.constant 0 : index
    %c0_20 = arith.constant 0 : index
    %33 = vector.load %arg6[%c0_18, %c0_19, %c0_20] : memref<1x32x256xf32, #tpu.memory_space<vmem>>, vector<1x32x256xf32>
    %34 = vector.shape_cast %33 : vector<1x32x256xf32> to vector<32x256xf32>
    %35 = vector.shape_cast %32 : vector<32x256xf32> to vector<1x32x256xf32>
    tpu.vector_store %arg6[%c0_18, %c0_19, %c0_20], %35 {strides = array<i32>} : memref<1x32x256xf32, #tpu.memory_space<vmem>>, vector<1x32x256xf32>,
    return
  }
  func.func @transform_0(%arg0: i32) -> (i32, i32, i32) {
    %c0_i32 = arith.constant 0 : i32
    %c0_i32_0 = arith.constant 0 : i32
    %c0_i32_1 = arith.constant 0 : i32
    return %arg0, %c0_i32, %c0_i32_0 : i32, i32, i32
  }
  func.func @transform_1(%arg0: i32) -> (i32, i32) {
    %c0_i32 = arith.constant 0 : i32
    %c0_i32_0 = arith.constant 0 : i32
    %c0_i32_1 = arith.constant 0 : i32
    return %c0_i32, %c0_i32_0 : i32, i32
  }
  func.func @transform_2(%arg0: i32) -> (i32, i32) {
    %c0_i32 = arith.constant 0 : i32
    %c0_i32_0 = arith.constant 0 : i32
    %c0_i32_1 = arith.constant 0 : i32
    return %c0_i32, %c0_i32_0 : i32, i32
  }
  func.func @transform_3(%arg0: i32) -> (i32, i32) {
    %c0_i32 = arith.constant 0 : i32
    %c0_i32_0 = arith.constant 0 : i32
    %c0_i32_1 = arith.constant 0 : i32
    return %c0_i32, %c0_i32_0 : i32, i32
  }
  func.func @transform_4(%arg0: i32) -> (i32, i32) {
    %c0_i32 = arith.constant 0 : i32
    %c0_i32_0 = arith.constant 0 : i32
    %c0_i32_1 = arith.constant 0 : i32
    return %c0_i32, %c0_i32_0 : i32, i32
  }
  func.func @transform_5(%arg0: i32) -> (i32, i32, i32) {
    %c0_i32 = arith.constant 0 : i32
    %c0_i32_0 = arith.constant 0 : i32
    %c0_i32_1 = arith.constant 0 : i32
    return %arg0, %c0_i32, %c0_i32_0 : i32, i32, i32
  }
}

module attributes {stable_mosaic.version = 11 : i64} {
  func.func @_fused_up_kernel(%arg0: i32, %arg1: i32, %arg2: memref<1x32x128xf32, #tpu.memory_space<vmem>>, %arg3: memref<32x32xf32, #tpu.memory_space<vmem>>, %arg4: memref<32x32xf32, #tpu.memory_space<vmem>>, %arg5: memref<32x1xf32, #tpu.memory_space<vmem>>, %arg6: memref<32x1xf32, #tpu.memory_space<vmem>>, %arg7: memref<1x128x3xf32, #tpu.memory_space<vmem>>, %arg8: memref<1x3x256xf32, #tpu.memory_space<vmem>>, %arg9: memref<1x32x256xf32, #tpu.memory_space<vmem>>, %arg10: memref<1x32x256xf32, #tpu.memory_space<vmem>>, %arg11: memref<32x128xbf16, #tpu.memory_space<vmem>>) attributes {dimension_semantics = [#tpu.dimension_semantics<parallel>, #tpu.dimension_semantics<arbitrary>], iteration_bounds = array<i64: 2, 1>, scalar_prefetch = 0 : i64, scratch_operands = 1 : i64, tpu.core_type = #tpu.core_type<tc>, window_params = [{transform_indices = @transform_0, window_bounds = array<i64: 1, 32, 128>}, {pipeline_mode = #tpu.pipeline_mode<synchronous>, transform_indices = @transform_1, window_bounds = array<i64: 32, 32>}, {pipeline_mode = #tpu.pipeline_mode<synchronous>, transform_indices = @transform_2, window_bounds = array<i64: 32, 32>}, {pipeline_mode = #tpu.pipeline_mode<synchronous>, transform_indices = @transform_3, window_bounds = array<i64: 32, 1>}, {pipeline_mode = #tpu.pipeline_mode<synchronous>, transform_indices = @transform_4, window_bounds = array<i64: 32, 1>}, {transform_indices = @transform_5, window_bounds = array<i64: 1, 128, 3>}, {transform_indices = @transform_6, window_bounds = array<i64: 1, 3, 256>}, {transform_indices = @transform_7, window_bounds = array<i64: 1, 32, 256>}, {transform_indices = @transform_8, window_bounds = array<i64: 1, 32, 256>}]} {
    %c0_i32 = arith.constant 0 : i32
    %0 = arith.cmpi eq, %arg1, %c0_i32 : i32
    %1 = arith.extui %0 : i1 to i32
    %c0_i32_0 = arith.constant 0 : i32
    %2 = arith.cmpi ne, %1, %c0_i32_0 : i32
    scf.if %2 {
      %c0_37 = arith.constant 0 : index
      %c0_38 = arith.constant 0 : index
      %109 = vector.load %arg3[%c0_37, %c0_38] : memref<32x32xf32, #tpu.memory_space<vmem>>, vector<32x32xf32>
      %110 = arith.truncf %109 : vector<32x32xf32> to vector<32x32xbf16>
      %c0_39 = arith.constant 0 : index
      %c0_40 = arith.constant 0 : index
      %c0_41 = arith.constant 0 : index
      %111 = vector.load %arg2[%c0_39, %c0_40, %c0_41] : memref<1x32x128xf32, #tpu.memory_space<vmem>>, vector<1x32x128xf32>
      %112 = vector.shape_cast %111 : vector<1x32x128xf32> to vector<32x128xf32>
      %113 = arith.truncf %112 : vector<32x128xf32> to vector<32x128xbf16>
      %cst_42 = arith.constant dense<0.000000e+00> : vector<32x128xf32>
      %114 = tpu.matmul %110, %113, %cst_42 {dimension_numbers = #tpu.dot_dimension_numbers<[1], [0], [0], [1], [0, 0, 1, 1], [], []>} : vector<32x32xbf16>, vector<32x128xbf16>, vector<32x128xf32> -> vector<32x128xf32>
      %c0_43 = arith.constant 0 : index
      %c0_44 = arith.constant 0 : index
      %115 = vector.load %arg4[%c0_43, %c0_44] : memref<32x32xf32, #tpu.memory_space<vmem>>, vector<32x32xf32>
      %c0_45 = arith.constant 0 : index
      %c0_46 = arith.constant 0 : index
      %116 = vector.load %arg5[%c0_45, %c0_46] : memref<32x1xf32, #tpu.memory_space<vmem>>, vector<32x1xf32>
      %c0_47 = arith.constant 0 : index
      %c0_48 = arith.constant 0 : index
      %117 = vector.load %arg6[%c0_47, %c0_48] : memref<32x1xf32, #tpu.memory_space<vmem>>, vector<32x1xf32>
      %cst_49 = arith.constant dense<0.000000e+00> : vector<32xf32>
      %118 = vector.multi_reduction <add>, %114, %cst_49 [1] : vector<32x128xf32> to vector<32xf32>
      %119 = vector.shape_cast %118 : vector<32xf32> to vector<32x1xf32>
      %cst_50 = arith.constant dense<0.000000e+00> : vector<32x1xf32>
      %120 = tpu.matmul %115, %119, %cst_50 {dimension_numbers = #tpu.dot_dimension_numbers<[1], [0], [0], [1], [0, 0, 1, 1], [], []>} : vector<32x32xf32>, vector<32x1xf32>, vector<32x1xf32> -> vector<32x1xf32>
      %cst_51 = arith.constant 2.048000e+03 : f32
      %121 = vector.broadcast %cst_51 : f32 to vector<32x1xf32>
      %122 = arith.divf %120, %121 : vector<32x1xf32>
      %123 = vector.broadcast %122 : vector<32x1xf32> to vector<32x128xf32>
      %124 = arith.subf %114, %123 : vector<32x128xf32>
      %125 = arith.mulf %124, %124 : vector<32x128xf32>
      %cst_52 = arith.constant dense<0.000000e+00> : vector<32xf32>
      %126 = vector.multi_reduction <add>, %125, %cst_52 [1] : vector<32x128xf32> to vector<32xf32>
      %127 = vector.shape_cast %126 : vector<32xf32> to vector<32x1xf32>
      %cst_53 = arith.constant dense<0.000000e+00> : vector<32x1xf32>
      %128 = tpu.matmul %115, %127, %cst_53 {dimension_numbers = #tpu.dot_dimension_numbers<[1], [0], [0], [1], [0, 0, 1, 1], [], []>} : vector<32x32xf32>, vector<32x1xf32>, vector<32x1xf32> -> vector<32x1xf32>
      %cst_54 = arith.constant 2.048000e+03 : f32
      %129 = vector.broadcast %cst_54 : f32 to vector<32x1xf32>
      %130 = arith.divf %128, %129 : vector<32x1xf32>
      %cst_55 = arith.constant 9.99999974E-6 : f32
      %131 = vector.broadcast %cst_55 : f32 to vector<32x1xf32>
      %132 = arith.addf %130, %131 : vector<32x1xf32>
      %133 = math.rsqrt %132 : vector<32x1xf32>
      %134 = vector.broadcast %133 : vector<32x1xf32> to vector<32x128xf32>
      %135 = arith.mulf %124, %134 : vector<32x128xf32>
      %136 = vector.broadcast %116 : vector<32x1xf32> to vector<32x128xf32>
      %137 = arith.mulf %135, %136 : vector<32x128xf32>
      %138 = vector.broadcast %117 : vector<32x1xf32> to vector<32x128xf32>
      %139 = arith.addf %137, %138 : vector<32x128xf32>
      %cst_56 = arith.constant 0.000000e+00 : f32
      %140 = vector.broadcast %cst_56 : f32 to vector<32x128xf32>
      %141 = arith.maximumf %139, %140 : vector<32x128xf32>
      %142 = arith.truncf %141 : vector<32x128xf32> to vector<32x128xbf16>
      %c0_57 = arith.constant 0 : index
      %c0_58 = arith.constant 0 : index
      %143 = vector.load %arg11[%c0_57, %c0_58] : memref<32x128xbf16, #tpu.memory_space<vmem>>, vector<32x128xbf16>
      tpu.vector_store %arg11[%c0_57, %c0_58], %142 {strides = array<i32>} : memref<32x128xbf16, #tpu.memory_space<vmem>>, vector<32x128xbf16>,
    } else {
    }
    %c0 = arith.constant 0 : index
    %c0_1 = arith.constant 0 : index
    %c0_2 = arith.constant 0 : index
    %3 = vector.load %arg7[%c0, %c0_1, %c0_2] : memref<1x128x3xf32, #tpu.memory_space<vmem>>, vector<1x128x3xf32>
    %4 = vector.shape_cast %3 : vector<1x128x3xf32> to vector<128x3xf32>
    %c0_3 = arith.constant 0 : index
    %c0_4 = arith.constant 0 : index
    %c0_5 = arith.constant 0 : index
    %5 = vector.load %arg8[%c0_3, %c0_4, %c0_5] : memref<1x3x256xf32, #tpu.memory_space<vmem>>, vector<1x3x256xf32>
    %6 = vector.shape_cast %5 : vector<1x3x256xf32> to vector<3x256xf32>
    %cst = arith.constant 0.000000e+00 : f32
    %7 = vector.broadcast %cst : f32 to vector<128x256xf32>
    %8 = vector.extract_strided_slice %4 {offsets = [0, 0], sizes = [128, 1], strides = [1, 1]} : vector<128x3xf32> to vector<128x1xf32>
    %9 = vector.extract_strided_slice %6 {offsets = [0, 0], sizes = [1, 256], strides = [1, 1]} : vector<3x256xf32> to vector<1x256xf32>
    %10 = vector.broadcast %8 : vector<128x1xf32> to vector<128x256xf32>
    %11 = vector.broadcast %9 : vector<1x256xf32> to vector<128x256xf32>
    %12 = arith.subf %10, %11 : vector<128x256xf32>
    %13 = arith.mulf %12, %12 : vector<128x256xf32>
    %14 = arith.addf %7, %13 : vector<128x256xf32>
    %15 = vector.extract_strided_slice %4 {offsets = [0, 1], sizes = [128, 1], strides = [1, 1]} : vector<128x3xf32> to vector<128x1xf32>
    %16 = vector.extract_strided_slice %6 {offsets = [1, 0], sizes = [1, 256], strides = [1, 1]} : vector<3x256xf32> to vector<1x256xf32>
    %17 = vector.broadcast %15 : vector<128x1xf32> to vector<128x256xf32>
    %18 = vector.broadcast %16 : vector<1x256xf32> to vector<128x256xf32>
    %19 = arith.subf %17, %18 : vector<128x256xf32>
    %20 = arith.mulf %19, %19 : vector<128x256xf32>
    %21 = arith.addf %14, %20 : vector<128x256xf32>
    %22 = vector.extract_strided_slice %4 {offsets = [0, 2], sizes = [128, 1], strides = [1, 1]} : vector<128x3xf32> to vector<128x1xf32>
    %23 = vector.extract_strided_slice %6 {offsets = [2, 0], sizes = [1, 256], strides = [1, 1]} : vector<3x256xf32> to vector<1x256xf32>
    %24 = vector.broadcast %22 : vector<128x1xf32> to vector<128x256xf32>
    %25 = vector.broadcast %23 : vector<1x256xf32> to vector<128x256xf32>
    %26 = arith.subf %24, %25 : vector<128x256xf32>
    %27 = arith.mulf %26, %26 : vector<128x256xf32>
    %28 = arith.addf %21, %27 : vector<128x256xf32>
    %29 = tpu.iota {dimensions = array<i32: 0>} : vector<128x256xi32>
    %cst_6 = arith.constant 0.000000e+00 : f32
    %30 = vector.broadcast %cst_6 : f32 to vector<128x256xf32>
    %cst_7 = arith.constant 0.000000e+00 : f32
    %31 = vector.broadcast %cst_7 : f32 to vector<1x256xf32>
    %cst_8 = arith.constant dense<0x7F800000> : vector<256xf32>
    %32 = vector.multi_reduction <minimumf>, %28, %cst_8 [0] : vector<128x256xf32> to vector<256xf32>
    %33 = vector.shape_cast %32 : vector<256xf32> to vector<1x256xf32>
    %34 = vector.broadcast %33 : vector<1x256xf32> to vector<128x256xf32>
    %35 = arith.cmpf ole, %28, %34 : vector<128x256xf32>
    %c128_i32 = arith.constant 128 : i32
    %36 = vector.broadcast %c128_i32 : i32 to vector<128x256xi32>
    %37 = arith.select %35, %29, %36 : vector<128x256xi1>, vector<128x256xi32>
    %cst_9 = arith.constant dense<2147483647> : vector<256xi32>
    %38 = vector.multi_reduction <minsi>, %37, %cst_9 [0] : vector<128x256xi32> to vector<256xi32>
    %39 = vector.shape_cast %38 : vector<256xi32> to vector<1x256xi32>
    %40 = vector.broadcast %39 : vector<1x256xi32> to vector<128x256xi32>
    %41 = arith.cmpi eq, %29, %40 : vector<128x256xi32>
    %cst_10 = arith.constant 9.99999993E-9 : f32
    %42 = vector.broadcast %cst_10 : f32 to vector<1x256xf32>
    %43 = arith.addf %33, %42 : vector<1x256xf32>
    %cst_11 = arith.constant 1.000000e+00 : f32
    %44 = vector.broadcast %cst_11 : f32 to vector<1x256xf32>
    %45 = arith.divf %44, %43 : vector<1x256xf32>
    %cst_12 = arith.constant 0.000000e+00 : f32
    %46 = vector.shape_cast %45 : vector<1x256xf32> to vector<1x256xf32>
    %47 = vector.broadcast %46 : vector<1x256xf32> to vector<128x256xf32>
    %48 = vector.broadcast %cst_12 : f32 to vector<128x256xf32>
    %49 = arith.select %41, %47, %48 : vector<128x256xi1>, vector<128x256xf32>
    %50 = arith.addf %30, %49 : vector<128x256xf32>
    %51 = arith.addf %31, %45 : vector<1x256xf32>
    %cst_13 = arith.constant 1.000000e+30 : f32
    %52 = vector.broadcast %cst_13 : f32 to vector<128x256xf32>
    %53 = arith.select %41, %52, %28 : vector<128x256xi1>, vector<128x256xf32>
    %cst_14 = arith.constant dense<0x7F800000> : vector<256xf32>
    %54 = vector.multi_reduction <minimumf>, %53, %cst_14 [0] : vector<128x256xf32> to vector<256xf32>
    %55 = vector.shape_cast %54 : vector<256xf32> to vector<1x256xf32>
    %56 = vector.broadcast %55 : vector<1x256xf32> to vector<128x256xf32>
    %57 = arith.cmpf ole, %53, %56 : vector<128x256xf32>
    %c128_i32_15 = arith.constant 128 : i32
    %58 = vector.broadcast %c128_i32_15 : i32 to vector<128x256xi32>
    %59 = arith.select %57, %29, %58 : vector<128x256xi1>, vector<128x256xi32>
    %cst_16 = arith.constant dense<2147483647> : vector<256xi32>
    %60 = vector.multi_reduction <minsi>, %59, %cst_16 [0] : vector<128x256xi32> to vector<256xi32>
    %61 = vector.shape_cast %60 : vector<256xi32> to vector<1x256xi32>
    %62 = vector.broadcast %61 : vector<1x256xi32> to vector<128x256xi32>
    %63 = arith.cmpi eq, %29, %62 : vector<128x256xi32>
    %cst_17 = arith.constant 9.99999993E-9 : f32
    %64 = vector.broadcast %cst_17 : f32 to vector<1x256xf32>
    %65 = arith.addf %55, %64 : vector<1x256xf32>
    %cst_18 = arith.constant 1.000000e+00 : f32
    %66 = vector.broadcast %cst_18 : f32 to vector<1x256xf32>
    %67 = arith.divf %66, %65 : vector<1x256xf32>
    %cst_19 = arith.constant 0.000000e+00 : f32
    %68 = vector.shape_cast %67 : vector<1x256xf32> to vector<1x256xf32>
    %69 = vector.broadcast %68 : vector<1x256xf32> to vector<128x256xf32>
    %70 = vector.broadcast %cst_19 : f32 to vector<128x256xf32>
    %71 = arith.select %63, %69, %70 : vector<128x256xi1>, vector<128x256xf32>
    %72 = arith.addf %50, %71 : vector<128x256xf32>
    %73 = arith.addf %51, %67 : vector<1x256xf32>
    %cst_20 = arith.constant 1.000000e+30 : f32
    %74 = vector.broadcast %cst_20 : f32 to vector<128x256xf32>
    %75 = arith.select %63, %74, %53 : vector<128x256xi1>, vector<128x256xf32>
    %cst_21 = arith.constant dense<0x7F800000> : vector<256xf32>
    %76 = vector.multi_reduction <minimumf>, %75, %cst_21 [0] : vector<128x256xf32> to vector<256xf32>
    %77 = vector.shape_cast %76 : vector<256xf32> to vector<1x256xf32>
    %78 = vector.broadcast %77 : vector<1x256xf32> to vector<128x256xf32>
    %79 = arith.cmpf ole, %75, %78 : vector<128x256xf32>
    %c128_i32_22 = arith.constant 128 : i32
    %80 = vector.broadcast %c128_i32_22 : i32 to vector<128x256xi32>
    %81 = arith.select %79, %29, %80 : vector<128x256xi1>, vector<128x256xi32>
    %cst_23 = arith.constant dense<2147483647> : vector<256xi32>
    %82 = vector.multi_reduction <minsi>, %81, %cst_23 [0] : vector<128x256xi32> to vector<256xi32>
    %83 = vector.shape_cast %82 : vector<256xi32> to vector<1x256xi32>
    %84 = vector.broadcast %83 : vector<1x256xi32> to vector<128x256xi32>
    %85 = arith.cmpi eq, %29, %84 : vector<128x256xi32>
    %cst_24 = arith.constant 9.99999993E-9 : f32
    %86 = vector.broadcast %cst_24 : f32 to vector<1x256xf32>
    %87 = arith.addf %77, %86 : vector<1x256xf32>
    %cst_25 = arith.constant 1.000000e+00 : f32
    %88 = vector.broadcast %cst_25 : f32 to vector<1x256xf32>
    %89 = arith.divf %88, %87 : vector<1x256xf32>
    %cst_26 = arith.constant 0.000000e+00 : f32
    %90 = vector.shape_cast %89 : vector<1x256xf32> to vector<1x256xf32>
    %91 = vector.broadcast %90 : vector<1x256xf32> to vector<128x256xf32>
    %92 = vector.broadcast %cst_26 : f32 to vector<128x256xf32>
    %93 = arith.select %85, %91, %92 : vector<128x256xi1>, vector<128x256xf32>
    %94 = arith.addf %72, %93 : vector<128x256xf32>
    %95 = arith.addf %73, %89 : vector<1x256xf32>
    %cst_27 = arith.constant 1.000000e+00 : f32
    %96 = vector.broadcast %cst_27 : f32 to vector<1x256xf32>
    %97 = arith.divf %96, %95 : vector<1x256xf32>
    %98 = vector.broadcast %97 : vector<1x256xf32> to vector<128x256xf32>
    %99 = arith.mulf %94, %98 : vector<128x256xf32>
    %100 = arith.truncf %99 : vector<128x256xf32> to vector<128x256xbf16>
    %c0_28 = arith.constant 0 : index
    %c0_29 = arith.constant 0 : index
    %101 = vector.load %arg11[%c0_28, %c0_29] : memref<32x128xbf16, #tpu.memory_space<vmem>>, vector<32x128xbf16>
    %cst_30 = arith.constant dense<0.000000e+00> : vector<32x256xf32>
    %102 = tpu.matmul %101, %100, %cst_30 {dimension_numbers = #tpu.dot_dimension_numbers<[1], [0], [0], [1], [0, 0, 1, 1], [], []>} : vector<32x128xbf16>, vector<128x256xbf16>, vector<32x256xf32> -> vector<32x256xf32>
    %c0_31 = arith.constant 0 : index
    %c0_32 = arith.constant 0 : index
    %c0_33 = arith.constant 0 : index
    %103 = vector.load %arg9[%c0_31, %c0_32, %c0_33] : memref<1x32x256xf32, #tpu.memory_space<vmem>>, vector<1x32x256xf32>
    %104 = vector.shape_cast %103 : vector<1x32x256xf32> to vector<32x256xf32>
    %105 = arith.addf %104, %102 : vector<32x256xf32>
    %c0_34 = arith.constant 0 : index
    %c0_35 = arith.constant 0 : index
    %c0_36 = arith.constant 0 : index
    %106 = vector.load %arg10[%c0_34, %c0_35, %c0_36] : memref<1x32x256xf32, #tpu.memory_space<vmem>>, vector<1x32x256xf32>
    %107 = vector.shape_cast %106 : vector<1x32x256xf32> to vector<32x256xf32>
    %108 = vector.shape_cast %105 : vector<32x256xf32> to vector<1x32x256xf32>
    tpu.vector_store %arg10[%c0_34, %c0_35, %c0_36], %108 {strides = array<i32>} : memref<1x32x256xf32, #tpu.memory_space<vmem>>, vector<1x32x256xf32>,
    return
  }
  func.func @transform_0(%arg0: i32, %arg1: i32) -> (i32, i32, i32) {
    %c0_i32 = arith.constant 0 : i32
    %c0_i32_0 = arith.constant 0 : i32
    %c0_i32_1 = arith.constant 0 : i32
    return %arg0, %c0_i32, %c0_i32_0 : i32, i32, i32
  }
  func.func @transform_1(%arg0: i32, %arg1: i32) -> (i32, i32) {
    %c0_i32 = arith.constant 0 : i32
    %c0_i32_0 = arith.constant 0 : i32
    %c0_i32_1 = arith.constant 0 : i32
    return %c0_i32, %c0_i32_0 : i32, i32
  }
  func.func @transform_2(%arg0: i32, %arg1: i32) -> (i32, i32) {
    %c0_i32 = arith.constant 0 : i32
    %c0_i32_0 = arith.constant 0 : i32
    %c0_i32_1 = arith.constant 0 : i32
    return %c0_i32, %c0_i32_0 : i32, i32
  }
  func.func @transform_3(%arg0: i32, %arg1: i32) -> (i32, i32) {
    %c0_i32 = arith.constant 0 : i32
    %c0_i32_0 = arith.constant 0 : i32
    %c0_i32_1 = arith.constant 0 : i32
    return %c0_i32, %c0_i32_0 : i32, i32
  }
  func.func @transform_4(%arg0: i32, %arg1: i32) -> (i32, i32) {
    %c0_i32 = arith.constant 0 : i32
    %c0_i32_0 = arith.constant 0 : i32
    %c0_i32_1 = arith.constant 0 : i32
    return %c0_i32, %c0_i32_0 : i32, i32
  }
  func.func @transform_5(%arg0: i32, %arg1: i32) -> (i32, i32, i32) {
    %c0_i32 = arith.constant 0 : i32
    %c0_i32_0 = arith.constant 0 : i32
    %c0_i32_1 = arith.constant 0 : i32
    return %arg0, %c0_i32, %c0_i32_0 : i32, i32, i32
  }
  func.func @transform_6(%arg0: i32, %arg1: i32) -> (i32, i32, i32) {
    %c0_i32 = arith.constant 0 : i32
    %c0_i32_0 = arith.constant 0 : i32
    return %arg0, %c0_i32, %arg1 : i32, i32, i32
  }
  func.func @transform_7(%arg0: i32, %arg1: i32) -> (i32, i32, i32) {
    %c0_i32 = arith.constant 0 : i32
    %c0_i32_0 = arith.constant 0 : i32
    return %arg0, %c0_i32, %arg1 : i32, i32, i32
  }
  func.func @transform_8(%arg0: i32, %arg1: i32) -> (i32, i32, i32) {
    %c0_i32 = arith.constant 0 : i32
    %c0_i32_0 = arith.constant 0 : i32
    return %arg0, %c0_i32, %arg1 : i32, i32, i32
  }
}

</mosaic_0001>

<llo_original>
// kernel: transition_up.2
$region0: #{transition_up.2}
  #allocation0 [shape = 'u32[]', space=smem, size = 0x4, offset = 0x4, fixed_abs, tag = 'smem constant byte address 0x4 - core index']
  #allocation1 [shape = 'u32[144,128]{1,0:T(1,128)}', space=vmem, size = 0x12000, scoped, tag = 'internal scratch']
  %s0 = inlined_call_operand.vmem [shape: f32[2,32,256], index: 0, kind: input, shape index: {}]
  %s1 = inlined_call_operand.hbm [shape: f32[32,32], index: 1, kind: input, shape index: {}]
  %s2 = inlined_call_operand.vmem [shape: f32[32,32], index: 2, kind: input, shape index: {}]
  %s3 = inlined_call_operand.vmem [shape: f32[32,1], index: 3, kind: input, shape index: {}]
  %s4 = inlined_call_operand.vmem [shape: f32[32,1], index: 4, kind: input, shape index: {}]
  %s5 = inlined_call_operand.vmem [shape: f32[2,32,256], index: 5, kind: output, shape index: {}]
  %s6 = sld [smem:[#allocation0]]
  $region57: #{transition_up.2} parent=0
    _
  %s8 = ssub.s32 1, %s6
  %s9 = scalar_select 0, %s8, %s6
  $region1: #{transition_up.2} parent=0
    #allocation2 [shape = 'u8[16384]{0}', space=vmem, size = 0x4000, scoped, tag = 'input window, operand 1, single buffered']
    #allocation3 [shape = 's32[2]{0}', space=sflag, size = 0x8, scoped, tag = 'scoped memory for transition_up.2']
    %10 = vsyncpa [#allocation3], 0
    loop: start=0, step=1, limit=4
    $region2: #{transition_up.2} parent=1 // loop_pre_header
      _
    $region3: #{transition_up.2} parent=1 // loop_header
      %s12 = sphi 0, %s16
      %p13 = scmp.ge.s32.totalorder %s12, 4
      %s22 = sphi 0, %s24
      %s25 = sphi 0, %s22
      %s26 = sphi 0, %s25
      %s42 = sphi 0, %s26
      %s46 = sphi 0, %s46
      %s48 = sphi 0, %s46
      %s49 = sphi 0, %s48
      %s63 = sphi 0, %s49
      %s67 = sphi 0, %s67
      %s69 = sphi 0, %s67
      %s70 = sphi 0, %s69
      %s84 = sphi 0, %s70
      %s88 = sphi 0, %s88
      %s90 = sphi 0, %s88
      %s91 = sphi 0, %s90
      %s105 = sphi 0, %s91
      %s109 = sphi 0, %s109
      %s111 = sphi 0, %s109
      %s112 = sphi 0, %s111
      %s126 = sphi 0, %s112
      %s132 = sphi 0, %s134
      %s135 = sphi 0, %s132
      %s136 = sphi 0, %s135
      %s152 = sphi 0, %s136
    $region4: #{transition_up.2} parent=1 // loop_header_branch
      %15 = sbr.rel (%p13) target = $region8
    $region5: #{transition_up.2} parent=1 // loop_body
      %s17 = ssub.s32 %s12, 1
      %s18 = ssub.s32 %s12, 2
      %s19 = sadd.s32 %s12, 1
      %s20 = ssub.s32 %s12, %s19
      %p21 = scmp.eq.s32.totalorder %s20, 0
      %s23 = sadd.s32 %s22, 1
      %s24 = scalar_select %p21, %s22, %s23
      %p27 = pneg %p21
      %p28 = scmp.eq.s32.totalorder %s12, 1
      %p29 = por %p27, %p28
      %p30 = scmp.ne.s32.totalorder %s22, %s25
      %p31 = scmp.eq.s32.totalorder %s12, 0
      %p32 = por %p30, %p31
      %p33 = scmp.ne.s32.totalorder %s22, %s25
      %p34 = scmp.eq.s32.totalorder %s17, 1
      %p35 = por %p33, %p34
      %p36 = scmp.ne.s32.totalorder %s25, %s26
      %p37 = scmp.eq.s32.totalorder %s17, 0
      %p38 = por %p36, %p37
      %p39 = scmp.ne.s32.totalorder %s25, %s26
      %p40 = scmp.eq.s32.totalorder %s18, 1
      %p41 = por %p39, %p40
      %p43 = scmp.ne.s32.totalorder %s26, %s42
      %p44 = scmp.eq.s32.totalorder %s18, 0
      %p45 = por %p43, %p44
      %s47 = sadd.s32 %s46, 1
      %p50 = scmp.eq.s32.totalorder %s12, 1
      %p51 = scmp.ne.s32.totalorder %s46, %s48
      %p52 = scmp.eq.s32.totalorder %s12, 0
      %p53 = por %p51, %p52
      %p54 = scmp.ne.s32.totalorder %s46, %s48
      %p55 = scmp.eq.s32.totalorder %s17, 1
      %p56 = por %p54, %p55
      %p57 = scmp.ne.s32.totalorder %s48, %s49
      %p58 = scmp.eq.s32.totalorder %s17, 0
      %p59 = por %p57, %p58
      %p60 = scmp.ne.s32.totalorder %s48, %s49
      %p61 = scmp.eq.s32.totalorder %s18, 1
      %p62 = por %p60, %p61
      %p64 = scmp.ne.s32.totalorder %s49, %s63
      %p65 = scmp.eq.s32.totalorder %s18, 0
      %p66 = por %p64, %p65
      %s68 = sadd.s32 %s67, 1
      %p71 = scmp.eq.s32.totalorder %s12, 1
      %p72 = scmp.ne.s32.totalorder %s67, %s69
      %p73 = scmp.eq.s32.totalorder %s12, 0
      %p74 = por %p72, %p73
      %p75 = scmp.ne.s32.totalorder %s67, %s69
      %p76 = scmp.eq.s32.totalorder %s17, 1
      %p77 = por %p75, %p76
      %p78 = scmp.ne.s32.totalorder %s69, %s70
      %p79 = scmp.eq.s32.totalorder %s17, 0
      %p80 = por %p78, %p79
      %p81 = scmp.ne.s32.totalorder %s69, %s70
      %p82 = scmp.eq.s32.totalorder %s18, 1
      %p83 = por %p81, %p82
      %p85 = scmp.ne.s32.totalorder %s70, %s84
      %p86 = scmp.eq.s32.totalorder %s18, 0
      %p87 = por %p85, %p86
      %s89 = sadd.s32 %s88, 1
      %p92 = scmp.eq.s32.totalorder %s12, 1
      %p93 = scmp.ne.s32.totalorder %s88, %s90
      %p94 = scmp.eq.s32.totalorder %s12, 0
      %p95 = por %p93, %p94
      %p96 = scmp.ne.s32.totalorder %s88, %s90
      %p97 = scmp.eq.s32.totalorder %s17, 1
      %p98 = por %p96, %p97
      %p99 = scmp.ne.s32.totalorder %s90, %s91
      %p100 = scmp.eq.s32.totalorder %s17, 0
      %p101 = por %p99, %p100
      %p102 = scmp.ne.s32.totalorder %s90, %s91
      %p103 = scmp.eq.s32.totalorder %s18, 1
      %p104 = por %p102, %p103
      %p106 = scmp.ne.s32.totalorder %s91, %s105
      %p107 = scmp.eq.s32.totalorder %s18, 0
      %p108 = por %p106, %p107
      %s110 = sadd.s32 %s109, 1
      %p113 = scmp.eq.s32.totalorder %s12, 1
      %p114 = scmp.ne.s32.totalorder %s109, %s111
      %p115 = scmp.eq.s32.totalorder %s12, 0
      %p116 = por %p114, %p115
      %p117 = scmp.ne.s32.totalorder %s109, %s111
      %p118 = scmp.eq.s32.totalorder %s17, 1
      %p119 = por %p117, %p118
      %p120 = scmp.ne.s32.totalorder %s111, %s112
      %p121 = scmp.eq.s32.totalorder %s17, 0
      %p122 = por %p120, %p121
      %p123 = scmp.ne.s32.totalorder %s111, %s112
      %p124 = scmp.eq.s32.totalorder %s18, 1
      %p125 = por %p123, %p124
      %p127 = scmp.ne.s32.totalorder %s112, %s126
      %p128 = scmp.eq.s32.totalorder %s18, 0
      %p129 = por %p127, %p128
      %s130 = ssub.s32 %s12, %s19
      %p131 = scmp.eq.s32.totalorder %s130, 0
      %s133 = sadd.s32 %s132, 1
      %s134 = scalar_select %p131, %s132, %s133
      %p137 = pneg %p131
      %p138 = scmp.eq.s32.totalorder %s12, 1
      %p139 = por %p137, %p138
      %p140 = scmp.ne.s32.totalorder %s132, %s135
      %p141 = scmp.eq.s32.totalorder %s12, 0
      %p142 = por %p140, %p141
      %p143 = scmp.ne.s32.totalorder %s132, %s135
      %p144 = scmp.eq.s32.totalorder %s17, 1
      %p145 = por %p143, %p144
      %p146 = scmp.ne.s32.totalorder %s135, %s136
      %p147 = scmp.eq.s32.totalorder %s17, 0
      %p148 = por %p146, %p147
      %p149 = scmp.ne.s32.totalorder %s135, %s136
      %p150 = scmp.eq.s32.totalorder %s18, 1
      %p151 = por %p149, %p150
      %p153 = scmp.ne.s32.totalorder %s136, %s152
      %p154 = scmp.eq.s32.totalorder %s18, 0
      %p155 = por %p153, %p154
      %p156 = scmp.le.s32.totalorder 1, %s12
      %p157 = scmp.lt.s32.totalorder %s12, 3
      %p158 = pnand %p156, %p157
      %p159 = pneg %p158
      // Predicated region
      $region9: #{transition_up.2} parent=5 // pred_check
        _
      $region10: #{transition_up.2} parent=5 // pred_check_branch
        %161 = sbr.rel (%p158) target = $region12
      $region11: #{transition_up.2} parent=5 // pred_region
        %s162 = ssub.s32 %s12, 1
        // Predicated region
        $region13: #{transition_up.2} parent=11 // pred_check
          %p163 = pneg %p59
        $region14: #{transition_up.2} parent=11 // pred_check_branch
          %165 = sbr.rel (%p163) target = $region16
        $region15: #{transition_up.2} parent=11 // pred_region
          %s167 = ssub.s32 512, 512
          %168 = vsyncadd [#allocation3], %s167
          %s169 = sshll.u32 [#allocation2], 4
          %s170 = int_to_ptr.vmem [resolvable:$true] %s169
          %175 = dma.hbm_to_vmem [thread:$0]  %s1, 512, %s170, [#allocation3], 128, 128, 8
        $region16: #{transition_up.2} parent=11 // pred_fallthru
          _
        // Predicated region
        $region17: #{transition_up.2} parent=11 // pred_check
          %p176 = pneg %p80
        $region18: #{transition_up.2} parent=11 // pred_check_branch
          %178 = sbr.rel (%p176) target = $region20
        $region19: #{transition_up.2} parent=11 // pred_region
          _
        $region20: #{transition_up.2} parent=11 // pred_fallthru
          _
        // Predicated region
        $region21: #{transition_up.2} parent=11 // pred_check
          %p179 = pneg %p101
        $region22: #{transition_up.2} parent=11 // pred_check_branch
          %181 = sbr.rel (%p179) target = $region24
        $region23: #{transition_up.2} parent=11 // pred_region
          _
        $region24: #{transition_up.2} parent=11 // pred_fallthru
          _
        // Predicated region
        $region25: #{transition_up.2} parent=11 // pred_check
          %p182 = pneg %p122
        $region26: #{transition_up.2} parent=11 // pred_check_branch
          %184 = sbr.rel (%p182) target = $region28
        $region27: #{transition_up.2} parent=11 // pred_region
          _
        $region28: #{transition_up.2} parent=11 // pred_fallthru
          _
      $region12: #{transition_up.2} parent=5 // pred_fallthru
        _
      %p185 = scmp.lt.s32.totalorder %s12, 2
      // Predicated region
      $region29: #{transition_up.2} parent=5 // pred_check
        %p186 = pneg %p185
      $region30: #{transition_up.2} parent=5 // pred_check_branch
        %188 = sbr.rel (%p186) target = $region32
      $region31: #{transition_up.2} parent=5 // pred_region
        // Predicated region
        $region33: #{transition_up.2} parent=31 // pred_check
          %p189 = pneg %p32
        $region34: #{transition_up.2} parent=31 // pred_check_branch
          %191 = sbr.rel (%p189) target = $region36
        $region35: #{transition_up.2} parent=31 // pred_region
          %p192 = scmp.lt.s32.totalorder %s12, 1
          %s193 = scalar_select %p192, %s12, 1
          %s194 = smul.addr %s193, 8
          %s195 = smul.addr %s194, 8
          %s196 = scalar_lea.vmem %s0, %s195
        $region36: #{transition_up.2} parent=31 // pred_fallthru
          _
      $region32: #{transition_up.2} parent=5 // pred_fallthru
        _
      %p197 = scmp.le.s32.totalorder 1, %s12
      %p198 = scmp.lt.s32.totalorder %s12, 3
      %p199 = pnand %p197, %p198
      %p200 = pneg %p199
      // Predicated region
      $region37: #{transition_up.2} parent=5 // pred_check
        _
      $region38: #{transition_up.2} parent=5 // pred_check_branch
        %202 = sbr.rel (%p199) target = $region40
      $region39: #{transition_up.2} parent=5 // pred_region
        %s203 = ssub.s32 %s12, 1
        // Predicated region
        $region41: #{transition_up.2} parent=39 // pred_check
          %p204 = pneg %p59
        $region42: #{transition_up.2} parent=39 // pred_check_branch
          %206 = sbr.rel (%p204) target = $region44
        $region43: #{transition_up.2} parent=39 // pred_region
          %207 = dma.done [#allocation3], 512
        $region44: #{transition_up.2} parent=39 // pred_fallthru
          _
        %p208 = scmp.lt.s32.totalorder %s17, 1
        %s209 = scalar_select %p208, %s17, 1
        %s210 = smul.addr %s209, 8
        %s211 = smul.addr %s210, 8
        %s212 = scalar_lea.vmem %s0, %s211
        %p213 = pneg %p38
        %p214 = pneg %p35
        %p215 = pneg %p59
        %p216 = pneg %p56
        %p217 = pneg %p80
        %p218 = pneg %p77
        %p219 = pneg %p101
        %p220 = pneg %p98
        %p221 = pneg %p122
        %p222 = pneg %p119
        %p223 = pneg %p148
        %p224 = pneg %p145
        %p225 = scmp.lt.s32.totalorder %s17, 1
        %s226 = scalar_select %p225, %s17, 1
        %s227 = smul.addr %s226, 8
        %s228 = smul.addr %s227, 8
        %s229 = scalar_lea.vmem %s5, %s228
        %p230 = scmp.lt.s32.totalorder %s17, 1
        %s231 = scalar_select %p230, %s17, 1
        %s232 = smul.addr %s231, 8
        %s233 = smul.addr %s232, 8
        %s234 = scalar_lea.vmem %s0, %s233
        %p235 = scmp.lt.s32.totalorder %s17, 1
        %s236 = scalar_select %p235, %s17, 1
        %s237 = smul.addr %s236, 8
        %s238 = smul.addr %s237, 8
        %s239 = scalar_lea.vmem %s5, %s238
        %v241 = vld [vmem:[%s234] sm:$0xff]
        %v242 = vld [vmem:[%s234 + $0x8] sm:$0xff]
        %v243 = vld [vmem:[%s234 + $0x10] sm:$0xff]
        %v244 = vld [vmem:[%s234 + $0x18] sm:$0xff]
        %v245 = vld [vmem:[%s234 + $0x20] sm:$0xff]
        %v246 = vld [vmem:[%s234 + $0x28] sm:$0xff]
        %v247 = vld [vmem:[%s234 + $0x30] sm:$0xff]
        %v248 = vld [vmem:[%s234 + $0x38] sm:$0xff]
        %v249 = vld [vmem:[#allocation2] sm:$0xff]
        %v250 = vld [vmem:[#allocation2 + $0x8] sm:$0xff]
        %v251 = vld [vmem:[#allocation2 + $0x10] sm:$0xff]
        %v252 = vld [vmem:[#allocation2 + $0x18] sm:$0xff]
        %v253 = vpack.c.bf16 %v250, %v249
        %v254 = vpack.c.bf16 %v252, %v251
        %v255 = vpack.c.bf16 %v243, %v241
        %v256 = vpack.c.bf16 %v244, %v242
        %v257 = vpack.c.bf16 %v247, %v245
        %v258 = vpack.c.bf16 %v248, %v246
        %vm259 = vcmask 261120
        %v261 = vsel %vm259, %v253, 0
        %v264 = vsel %vm259, %v254, 0
        %266 = vmatprep.subr.bf16.mxu0 %v256
        %267 = vmatpush1.bf16.msra.mxu0 %v255
        %268 = vmatprep.subr.bf16.mxu0 %v258
        %269 = vmatpush1.bf16.msra.mxu0 %v257
        %270 = vmatprep.subr.bf16.mxu0 0
        %271 = vmatpush1.bf16.msra.mxu0 0
        %272 = vmatprep.subr.bf16.mxu0 0
        %273 = vmatpush1.bf16.msra.mxu0 0
        %274 = vmatprep.subr.bf16.mxu0 0
        %275 = vmatpush1.bf16.msra.mxu0 0
        %276 = vmatprep.subr.bf16.mxu0 0
        %277 = vmatpush1.bf16.msra.mxu0 0
        %278 = vmatprep.subr.bf16.mxu0 0
        %279 = vmatpush1.bf16.msra.mxu0 0
        %280 = vmatprep.subr.bf16.mxu0 0
        %281 = vmatpush1.bf16.msra.mxu0 0
        %282 = vmatprep.subr.bf16.mxu0 0
        %283 = vmatpush1.bf16.msra.mxu0 0
        %284 = vmatprep.subr.bf16.mxu0 0
        %285 = vmatpush1.bf16.msra.mxu0 0
        %286 = vmatprep.subr.bf16.mxu0 0
        %287 = vmatpush1.bf16.msra.mxu0 0
        %288 = vmatprep.subr.bf16.mxu0 0
        %289 = vmatpush1.bf16.msra.mxu0 0
        %290 = vmatprep.subr.bf16.mxu0 0
        %291 = vmatpush1.bf16.msra.mxu0 0
        %292 = vmatprep.subr.bf16.mxu0 0
        %293 = vmatpush1.bf16.msra.mxu0 0
        %294 = vmatprep.subr.bf16.mxu0 0
        %295 = vmatpush1.bf16.msra.mxu0 0
        %296 = vmatprep.subr.bf16.mxu0 0
        %297 = vmatpush1.bf16.msra.mxu0 0
        %298 = vmatprep.mubr.bf16.mxu0 0
        %299 = vmatmul.mubr.bf16.gmra.mrb[0].mxu0 %v261
        %v300 = vpop.f32.mrb[0].mxu0
        %v301 = vadd.f32 0.0, %v300
        %v302 = vpop.f32.mrb[0].mxu0
        %v303 = vadd.f32 0.0, %v302
        %v304 = vpop.f32.mrb[0].mxu0
        %v305 = vadd.f32 0.0, %v304
        %v306 = vpop.f32.mrb[0].mxu0
        %v307 = vadd.f32 0.0, %v306
        %308 = vmatprep.mubr.bf16.mxu0 0
        %309 = vmatmul.mubr.bf16.gmra.mrb[0].mxu0 %v264
        %v310 = vpop.f32.mrb[0].mxu0
        %v311 = vadd.f32 0.0, %v310
        %v312 = vpop.f32.mrb[0].mxu0
        %v313 = vadd.f32 0.0, %v312
        %v314 = vpop.f32.mrb[0].mxu0
        %v315 = vadd.f32 0.0, %v314
        %v316 = vpop.f32.mrb[0].mxu0
        %v317 = vadd.f32 0.0, %v316
        %318 = vdwg.mxu0
        %v319 = vld [vmem:[%s2] sm:$0xff]
        %v320 = vld [vmem:[%s2 + $0x8] sm:$0xff]
        %v321 = vld [vmem:[%s2 + $0x10] sm:$0xff]
        %v322 = vld [vmem:[%s2 + $0x18] sm:$0xff]
        %v323 = vld [vmem:[%s3] sm:$0xff]
        %v324 = vld [vmem:[%s3 + $0x8] sm:$0xff]
        %v325 = vld [vmem:[%s3 + $0x10] sm:$0xff]
        %v326 = vld [vmem:[%s3 + $0x18] sm:$0xff]
        %v327 = vld [vmem:[%s4] sm:$0xff]
        %v328 = vld [vmem:[%s4 + $0x8] sm:$0xff]
        %v329 = vld [vmem:[%s4 + $0x10] sm:$0xff]
        %v330 = vld [vmem:[%s4 + $0x18] sm:$0xff]
        %v331 = vadd.f32 %v301, %v303
        %332 = vadd.xlane.f32.xlu0 %v331
        %v333 = vpop.xlane.xlu0 %332
        %v334 = vadd.f32 %v305, %v307
        %335 = vadd.xlane.f32.xlu0 %v334
        %v336 = vpop.xlane.xlu0 %335
        %v337 = vadd.f32 %v311, %v313
        %338 = vadd.xlane.f32.xlu0 %v337
        %v339 = vpop.xlane.xlu0 %338
        %v340 = vadd.f32 %v315, %v317
        %341 = vadd.xlane.f32.xlu0 %v340
        %v342 = vpop.xlane.xlu0 %341
        %v344 = vsel %vm259, %v319, 0
        %v347 = vsel %vm259, %v320, 0
        %v350 = vsel %vm259, %v321, 0
        %v353 = vsel %vm259, %v322, 0
        %355 = vmatprep.subr.mxu0 0.0
        %356 = vmatpush1.msra.mxu0 %v333
        %357 = vmatprep.subr.mxu0 0.0
        %358 = vmatpush1.msra.mxu0 %v336
        %359 = vmatprep.subr.mxu0 0.0
        %360 = vmatpush1.msra.mxu0 %v339
        %361 = vmatprep.subr.mxu0 0.0
        %362 = vmatpush1.msra.mxu0 %v342
        %363 = vmatprep.subr.mxu0 0.0
        %364 = vmatpush1.msra.mxu0 0.0
        %365 = vmatprep.subr.mxu0 0.0
        %366 = vmatpush1.msra.mxu0 0.0
        %367 = vmatprep.subr.mxu0 0.0
        %368 = vmatpush1.msra.mxu0 0.0
        %369 = vmatprep.subr.mxu0 0.0
        %370 = vmatpush1.msra.mxu0 0.0
        %371 = vmatprep.subr.mxu0 0.0
        %372 = vmatpush1.msra.mxu0 0.0
        %373 = vmatprep.subr.mxu0 0.0
        %374 = vmatpush1.msra.mxu0 0.0
        %375 = vmatprep.subr.mxu0 0.0
        %376 = vmatpush1.msra.mxu0 0.0
        %377 = vmatprep.subr.mxu0 0.0
        %378 = vmatpush1.msra.mxu0 0.0
        %379 = vmatprep.subr.mxu0 0.0
        %380 = vmatpush1.msra.mxu0 0.0
        %381 = vmatprep.subr.mxu0 0.0
        %382 = vmatpush1.msra.mxu0 0.0
        %383 = vmatprep.subr.mxu0 0.0
        %384 = vmatpush1.msra.mxu0 0.0
        %385 = vmatprep.subr.mxu0 0.0
        %386 = vmatpush1.msra.mxu0 0.0
        %387 = vmatprep.subr.mxu0 0.0
        %388 = vmatpush1.msra.mxu0 0.0
        %389 = vmatprep.subr.mxu0 0.0
        %390 = vmatpush1.msra.mxu0 0.0
        %391 = vmatprep.subr.mxu0 0.0
        %392 = vmatpush1.msra.mxu0 0.0
        %393 = vmatprep.subr.mxu0 0.0
        %394 = vmatpush1.msra.mxu0 0.0
        %395 = vmatprep.subr.mxu0 0.0
        %396 = vmatpush1.msra.mxu0 0.0
        %397 = vmatprep.subr.mxu0 0.0
        %398 = vmatpush1.msra.mxu0 0.0
        %399 = vmatprep.subr.mxu0 0.0
        %400 = vmatpush1.msra.mxu0 0.0
        %401 = vmatprep.subr.mxu0 0.0
        %402 = vmatpush1.msra.mxu0 0.0
        %403 = vmatprep.subr.mxu0 0.0
        %404 = vmatpush1.msra.mxu0 0.0
        %405 = vmatprep.subr.mxu0 0.0
        %406 = vmatpush1.msra.mxu0 0.0
        %407 = vmatprep.subr.mxu0 0.0
        %408 = vmatpush1.msra.mxu0 0.0
        %409 = vmatprep.subr.mxu0 0.0
        %410 = vmatpush1.msra.mxu0 0.0
        %411 = vmatprep.subr.mxu0 0.0
        %412 = vmatpush1.msra.mxu0 0.0
        %413 = vmatprep.subr.mxu0 0.0
        %414 = vmatpush1.msra.mxu0 0.0
        %415 = vmatprep.subr.mxu0 0.0
        %416 = vmatpush1.msra.mxu0 0.0
        %417 = vmatprep.subr.mxu0 0.0
        %418 = vmatpush1.msra.mxu0 0.0
        %419 = vmatprep.mubr.f32.mxu0 0.0
        %420 = vmatmul.mubr.f32.gmra.mrb[0].mxu0 %v344
        %v421 = vpop.f32.mrb[0].mxu0
        %v422 = vadd.f32 0.0, %v421
        %v423 = vpop.f32.mrb[0].mxu0
        %424 = vmatprep.mubr.f32.mxu0 0.0
        %425 = vmatmul.mubr.f32.gmra.mrb[0].mxu0 %v347
        %v426 = vpop.f32.mrb[0].mxu0
        %v427 = vadd.f32 0.0, %v426
        %v428 = vpop.f32.mrb[0].mxu0
        %429 = vmatprep.mubr.f32.mxu0 0.0
        %430 = vmatmul.mubr.f32.gmra.mrb[0].mxu0 %v350
        %v431 = vpop.f32.mrb[0].mxu0
        %v432 = vadd.f32 0.0, %v431
        %v433 = vpop.f32.mrb[0].mxu0
        %434 = vmatprep.mubr.f32.mxu0 0.0
        %435 = vmatmul.mubr.f32.gmra.mrb[0].mxu0 %v353
        %v436 = vpop.f32.mrb[0].mxu0
        %v437 = vadd.f32 0.0, %v436
        %v438 = vpop.f32.mrb[0].mxu0
        %439 = vdwg.mxu0
        %v440 = vrcp.pop 4096.0
        %v441 = vmul.f32 %v422, %v440
        %v442 = vmul.f32 %v427, %v440
        %v443 = vmul.f32 %v432, %v440
        %v444 = vmul.f32 %v437, %v440
        %446 = vset.pattern.permute.xlu0 0
        %447 = vperm.xlu0 %446, %v441
        %v448 = vpop.permute.xlu0 %447
        %451 = vset.pattern.permute.xlu0 0
        %452 = vperm.xlu0 %451, %v442
        %v453 = vpop.permute.xlu0 %452
        %456 = vset.pattern.permute.xlu0 0
        %457 = vperm.xlu0 %456, %v443
        %v458 = vpop.permute.xlu0 %457
        %461 = vset.pattern.permute.xlu0 0
        %462 = vperm.xlu0 %461, %v444
        %v463 = vpop.permute.xlu0 %462
        %v465 = vsub.f32 %v301, %v448
        %v466 = vsub.f32 %v303, %v448
        %v467 = vsub.f32 %v305, %v453
        %v468 = vsub.f32 %v307, %v453
        %v469 = vsub.f32 %v311, %v458
        %v470 = vsub.f32 %v313, %v458
        %v471 = vsub.f32 %v315, %v463
        %v472 = vsub.f32 %v317, %v463
        %v473 = vmul.f32 %v465, %v465
        %v474 = vmul.f32 %v466, %v466
        %v475 = vmul.f32 %v467, %v467
        %v476 = vmul.f32 %v468, %v468
        %v477 = vmul.f32 %v469, %v469
        %v478 = vmul.f32 %v470, %v470
        %v479 = vmul.f32 %v471, %v471
        %v480 = vmul.f32 %v472, %v472
        %v481 = vadd.f32 %v473, %v474
        %482 = vadd.xlane.f32.xlu0 %v481
        %v483 = vpop.xlane.xlu0 %482
        %v484 = vadd.f32 %v475, %v476
        %485 = vadd.xlane.f32.xlu0 %v484
        %v486 = vpop.xlane.xlu0 %485
        %v487 = vadd.f32 %v477, %v478
        %488 = vadd.xlane.f32.xlu0 %v487
        %v489 = vpop.xlane.xlu0 %488
        %v490 = vadd.f32 %v479, %v480
        %491 = vadd.xlane.f32.xlu0 %v490
        %v492 = vpop.xlane.xlu0 %491
        %493 = vmatprep.subr.mxu0 0.0
        %494 = vmatpush1.msra.mxu0 %v483
        %495 = vmatprep.subr.mxu0 0.0
        %496 = vmatpush1.msra.mxu0 %v486
        %497 = vmatprep.subr.mxu0 0.0
        %498 = vmatpush1.msra.mxu0 %v489
        %499 = vmatprep.subr.mxu0 0.0
        %500 = vmatpush1.msra.mxu0 %v492
        %501 = vmatprep.subr.mxu0 0.0
        %502 = vmatpush1.msra.mxu0 0.0
        %503 = vmatprep.subr.mxu0 0.0
        %504 = vmatpush1.msra.mxu0 0.0
        %505 = vmatprep.subr.mxu0 0.0
        %506 = vmatpush1.msra.mxu0 0.0
        %507 = vmatprep.subr.mxu0 0.0
        %508 = vmatpush1.msra.mxu0 0.0
        %509 = vmatprep.subr.mxu0 0.0
        %510 = vmatpush1.msra.mxu0 0.0
        %511 = vmatprep.subr.mxu0 0.0
        %512 = vmatpush1.msra.mxu0 0.0
        %513 = vmatprep.subr.mxu0 0.0
        %514 = vmatpush1.msra.mxu0 0.0
        %515 = vmatprep.subr.mxu0 0.0
        %516 = vmatpush1.msra.mxu0 0.0
        %517 = vmatprep.subr.mxu0 0.0
        %518 = vmatpush1.msra.mxu0 0.0
        %519 = vmatprep.subr.mxu0 0.0
        %520 = vmatpush1.msra.mxu0 0.0
        %521 = vmatprep.subr.mxu0 0.0
        %522 = vmatpush1.msra.mxu0 0.0
        %523 = vmatprep.subr.mxu0 0.0
        %524 = vmatpush1.msra.mxu0 0.0
        %525 = vmatprep.subr.mxu0 0.0
        %526 = vmatpush1.msra.mxu0 0.0
        %527 = vmatprep.subr.mxu0 0.0
        %528 = vmatpush1.msra.mxu0 0.0
        %529 = vmatprep.subr.mxu0 0.0
        %530 = vmatpush1.msra.mxu0 0.0
        %531 = vmatprep.subr.mxu0 0.0
        %532 = vmatpush1.msra.mxu0 0.0
        %533 = vmatprep.subr.mxu0 0.0
        %534 = vmatpush1.msra.mxu0 0.0
        %535 = vmatprep.subr.mxu0 0.0
        %536 = vmatpush1.msra.mxu0 0.0
        %537 = vmatprep.subr.mxu0 0.0
        %538 = vmatpush1.msra.mxu0 0.0
        %539 = vmatprep.subr.mxu0 0.0
        %540 = vmatpush1.msra.mxu0 0.0
        %541 = vmatprep.subr.mxu0 0.0
        %542 = vmatpush1.msra.mxu0 0.0
        %543 = vmatprep.subr.mxu0 0.0
        %544 = vmatpush1.msra.mxu0 0.0
        %545 = vmatprep.subr.mxu0 0.0
        %546 = vmatpush1.msra.mxu0 0.0
        %547 = vmatprep.subr.mxu0 0.0
        %548 = vmatpush1.msra.mxu0 0.0
        %549 = vmatprep.subr.mxu0 0.0
        %550 = vmatpush1.msra.mxu0 0.0
        %551 = vmatprep.subr.mxu0 0.0
        %552 = vmatpush1.msra.mxu0 0.0
        %553 = vmatprep.subr.mxu0 0.0
        %554 = vmatpush1.msra.mxu0 0.0
        %555 = vmatprep.subr.mxu0 0.0
        %556 = vmatpush1.msra.mxu0 0.0
        %557 = vmatprep.mubr.f32.mxu0 0.0
        %558 = vmatmul.mubr.f32.gmra.mrb[0].mxu0 %v344
        %v559 = vpop.f32.mrb[0].mxu0
        %v560 = vadd.f32 0.0, %v559
        %v561 = vpop.f32.mrb[0].mxu0
        %562 = vmatprep.mubr.f32.mxu0 0.0
        %563 = vmatmul.mubr.f32.gmra.mrb[0].mxu0 %v347
        %v564 = vpop.f32.mrb[0].mxu0
        %v565 = vadd.f32 0.0, %v564
        %v566 = vpop.f32.mrb[0].mxu0
        %567 = vmatprep.mubr.f32.mxu0 0.0
        %568 = vmatmul.mubr.f32.gmra.mrb[0].mxu0 %v350
        %v569 = vpop.f32.mrb[0].mxu0
        %v570 = vadd.f32 0.0, %v569
        %v571 = vpop.f32.mrb[0].mxu0
        %572 = vmatprep.mubr.f32.mxu0 0.0
        %573 = vmatmul.mubr.f32.gmra.mrb[0].mxu0 %v353
        %v574 = vpop.f32.mrb[0].mxu0
        %v575 = vadd.f32 0.0, %v574
        %v576 = vpop.f32.mrb[0].mxu0
        %577 = vdwg.mxu0
        %v578 = vmul.f32 %v560, %v440
        %v579 = vmul.f32 %v565, %v440
        %v580 = vmul.f32 %v570, %v440
        %v581 = vmul.f32 %v575, %v440
        %v582 = vadd.f32 %v578, 1e-05
        %v583 = vadd.f32 %v579, 1e-05
        %v584 = vadd.f32 %v580, 1e-05
        %v585 = vadd.f32 %v581, 1e-05
        %v586 = vrsqrt.pop %v582
        %v587 = vrsqrt.pop %v583
        %v588 = vrsqrt.pop %v584
        %v589 = vrsqrt.pop %v585
        %591 = vset.pattern.permute.xlu0 0
        %592 = vperm.xlu0 %591, %v586
        %v593 = vpop.permute.xlu0 %592
        %596 = vset.pattern.permute.xlu0 0
        %597 = vperm.xlu0 %596, %v587
        %v598 = vpop.permute.xlu0 %597
        %601 = vset.pattern.permute.xlu0 0
        %602 = vperm.xlu0 %601, %v588
        %v603 = vpop.permute.xlu0 %602
        %606 = vset.pattern.permute.xlu0 0
        %607 = vperm.xlu0 %606, %v589
        %v608 = vpop.permute.xlu0 %607
        %v610 = vmul.f32 %v465, %v593
        %v611 = vmul.f32 %v466, %v593
        %v612 = vmul.f32 %v467, %v598
        %v613 = vmul.f32 %v468, %v598
        %v614 = vmul.f32 %v469, %v603
        %v615 = vmul.f32 %v470, %v603
        %v616 = vmul.f32 %v471, %v608
        %v617 = vmul.f32 %v472, %v608
        %619 = vset.pattern.permute.xlu0 0
        %620 = vperm.xlu0 %619, %v323
        %v621 = vpop.permute.xlu0 %620
        %624 = vset.pattern.permute.xlu0 0
        %625 = vperm.xlu0 %624, %v324
        %v626 = vpop.permute.xlu0 %625
        %629 = vset.pattern.permute.xlu0 0
        %630 = vperm.xlu0 %629, %v325
        %v631 = vpop.permute.xlu0 %630
        %634 = vset.pattern.permute.xlu0 0
        %635 = vperm.xlu0 %634, %v326
        %v636 = vpop.permute.xlu0 %635
        %v638 = vmul.f32 %v610, %v621
        %v639 = vmul.f32 %v611, %v621
        %v640 = vmul.f32 %v612, %v626
        %v641 = vmul.f32 %v613, %v626
        %v642 = vmul.f32 %v614, %v631
        %v643 = vmul.f32 %v615, %v631
        %v644 = vmul.f32 %v616, %v636
        %v645 = vmul.f32 %v617, %v636
        %647 = vset.pattern.permute.xlu0 0
        %648 = vperm.xlu0 %647, %v327
        %v649 = vpop.permute.xlu0 %648
        %652 = vset.pattern.permute.xlu0 0
        %653 = vperm.xlu0 %652, %v328
        %v654 = vpop.permute.xlu0 %653
        %657 = vset.pattern.permute.xlu0 0
        %658 = vperm.xlu0 %657, %v329
        %v659 = vpop.permute.xlu0 %658
        %662 = vset.pattern.permute.xlu0 0
        %663 = vperm.xlu0 %662, %v330
        %v664 = vpop.permute.xlu0 %663
        %v666 = vadd.f32 %v638, %v649
        %v667 = vadd.f32 %v639, %v649
        %v668 = vadd.f32 %v640, %v654
        %v669 = vadd.f32 %v641, %v654
        %v670 = vadd.f32 %v642, %v659
        %v671 = vadd.f32 %v643, %v659
        %v672 = vadd.f32 %v644, %v664
        %v673 = vadd.f32 %v645, %v664
        %v674 = vmax.f32 %v666, 0.0
        %v675 = vmax.f32 %v667, 0.0
        %v676 = vmax.f32 %v668, 0.0
        %v677 = vmax.f32 %v669, 0.0
        %v678 = vmax.f32 %v670, 0.0
        %v679 = vmax.f32 %v671, 0.0
        %v680 = vmax.f32 %v672, 0.0
        %v681 = vmax.f32 %v673, 0.0
        %682 = vst [vmem:[%s239] sm:$0xff] %v674
        %683 = vst [vmem:[%s239 + $0x8] sm:$0xff] %v675
        %684 = vst [vmem:[%s239 + $0x10] sm:$0xff] %v676
        %685 = vst [vmem:[%s239 + $0x18] sm:$0xff] %v677
        %686 = vst [vmem:[%s239 + $0x20] sm:$0xff] %v678
        %687 = vst [vmem:[%s239 + $0x28] sm:$0xff] %v679
        %688 = vst [vmem:[%s239 + $0x30] sm:$0xff] %v680
        %689 = vst [vmem:[%s239 + $0x38] sm:$0xff] %v681
        %p690 = scmp.lt.s32.totalorder %s17, 1
        %s691 = scalar_select %p690, %s17, 1
        %s692 = smul.addr %s691, 8
        %s693 = smul.addr %s692, 8
        %s694 = scalar_lea.vmem %s5, %s693
        // Predicated region
        $region45: #{transition_up.2} parent=39 // pred_check
          %p695 = pneg %p145
        $region46: #{transition_up.2} parent=39 // pred_check_branch
          %697 = sbr.rel (%p695) target = $region48
        $region47: #{transition_up.2} parent=39 // pred_region
          _
        $region48: #{transition_up.2} parent=39 // pred_fallthru
          _
      $region40: #{transition_up.2} parent=5 // pred_fallthru
        _
      %p698 = scmp.le.s32.totalorder 2, %s12
      // Predicated region
      $region49: #{transition_up.2} parent=5 // pred_check
        %p699 = pneg %p698
      $region50: #{transition_up.2} parent=5 // pred_check_branch
        %701 = sbr.rel (%p699) target = $region52
      $region51: #{transition_up.2} parent=5 // pred_region
        %s702 = ssub.s32 %s12, 2
        // Predicated region
        $region53: #{transition_up.2} parent=51 // pred_check
          %p703 = pneg %p151
        $region54: #{transition_up.2} parent=51 // pred_check_branch
          %705 = sbr.rel (%p703) target = $region56
        $region55: #{transition_up.2} parent=51 // pred_region
          %p706 = scmp.lt.s32.totalorder %s18, 1
          %s707 = scalar_select %p706, %s18, 1
          %s708 = smul.addr %s707, 8
          %s709 = smul.addr %s708, 8
          %s710 = scalar_lea.vmem %s5, %s709
        $region56: #{transition_up.2} parent=51 // pred_fallthru
          _
      $region52: #{transition_up.2} parent=5 // pred_fallthru
        _
    $region6: #{transition_up.2} parent=1 // loop_footer
      %s16 = sadd.s32 1, %s12
    $region7: #{transition_up.2} parent=1 // loop_footer_branch
      %11 = sbr.rel target = $region3
    $region8: #{transition_up.2} parent=1 // loop_exit
      _
    %711 = vsyncpa [#allocation3], 1
    %s712 = scalar_lea.sflag [#allocation3], 1
    %713 = vsyncpa %s712, 1

// kernel: transition_up.3
$region0: #{transition_up.3}
  #allocation0 [shape = 'u32[]', space=smem, size = 0x4, offset = 0x4, fixed_abs, tag = 'smem constant byte address 0x4 - core index']
  #allocation1 [shape = 'u32[144,128]{1,0:T(1,128)}', space=vmem, size = 0x12000, scoped, tag = 'internal scratch']
  #allocation2 [shape = 'bf16[32,128]{1,0:T(16,128)(2,1)}', space=vmem, size = 0x2000, scoped, tag = 'scratch operand']
  %s0 = inlined_call_operand.vmem [shape: f32[2,32,128], index: 0, kind: input, shape index: {}]
  %s1 = inlined_call_operand.vmem [shape: f32[32,32], index: 1, kind: input, shape index: {}]
  %s2 = inlined_call_operand.vmem [shape: f32[32,32], index: 2, kind: input, shape index: {}]
  %s3 = inlined_call_operand.vmem [shape: f32[32,1], index: 3, kind: input, shape index: {}]
  %s4 = inlined_call_operand.vmem [shape: f32[32,1], index: 4, kind: input, shape index: {}]
  %s5 = inlined_call_operand.vmem [shape: f32[2,128,3], index: 5, kind: input, shape index: {}]
  %s6 = inlined_call_operand.vmem [shape: f32[2,3,256], index: 6, kind: input, shape index: {}]
  %s7 = inlined_call_operand.vmem [shape: f32[2,32,256], index: 7, kind: input, shape index: {}]
  %s8 = inlined_call_operand.hbm [shape: f32[2,32,256], index: 8, kind: output, shape index: {}]
  %s9 = sld [smem:[#allocation0]]
  $region69: #{transition_up.3} parent=0
    _
  %s11 = ssub.s32 1, %s9
  %s12 = scalar_select 0, %s11, %s9
  $region1: #{transition_up.3} parent=0
    #allocation3 [shape = 'u8[65536]{0}', space=vmem, size = 0x10000, scoped, tag = 'output window, operand 0']
    #allocation4 [shape = 's32[2]{0}', space=sflag, size = 0x8, scoped, tag = 'scoped memory for transition_up.3']
    %13 = vsyncpa [#allocation4], 0
    %s14 = scalar_lea.sflag [#allocation4], 1
    %15 = vsyncpa %s14, 0
    loop: start=0, step=1, limit=4
    $region2: #{transition_up.3} parent=1 // loop_pre_header
      _
    $region3: #{transition_up.3} parent=1 // loop_header
      %s17 = sphi 0, %s21
      %p18 = scmp.ge.s32.totalorder %s17, 4
      %s24 = sphi 0, %s36
      %s25 = sphi 0, %s32
      %s26 = sphi 0, %s24
      %s27 = sphi 0, %s25
      %s28 = sphi 0, %s26
      %s29 = sphi 0, %s27
      %s39 = sphi 0, %s41
      %s42 = sphi 0, %s39
      %s43 = sphi 0, %s42
      %s59 = sphi 0, %s43
      %s63 = sphi 0, %s63
      %s65 = sphi 0, %s63
      %s66 = sphi 0, %s65
      %s80 = sphi 0, %s66
      %s84 = sphi 0, %s84
      %s86 = sphi 0, %s84
      %s87 = sphi 0, %s86
      %s101 = sphi 0, %s87
      %s105 = sphi 0, %s105
      %s107 = sphi 0, %s105
      %s108 = sphi 0, %s107
      %s122 = sphi 0, %s108
      %s126 = sphi 0, %s126
      %s128 = sphi 0, %s126
      %s129 = sphi 0, %s128
      %s143 = sphi 0, %s129
      %s149 = sphi 0, %s151
      %s152 = sphi 0, %s149
      %s153 = sphi 0, %s152
      %s169 = sphi 0, %s153
      %s177 = sphi 0, %s179
      %s180 = sphi 0, %s177
      %s181 = sphi 0, %s180
      %s197 = sphi 0, %s181
      %s205 = sphi 0, %s207
      %s208 = sphi 0, %s205
      %s209 = sphi 0, %s208
      %s225 = sphi 0, %s209
      %s233 = sphi 0, %s235
      %s236 = sphi 0, %s233
      %s237 = sphi 0, %s236
      %s253 = sphi 0, %s237
    $region4: #{transition_up.3} parent=1 // loop_header_branch
      %20 = sbr.rel (%p18) target = $region8
    $region5: #{transition_up.3} parent=1 // loop_body
      %s22 = ssub.s32 %s17, 1
      %s23 = ssub.s32 %s17, 2
      %s30 = sadd.s32 1, %s25
      %p31 = scmp.ge.s32.totalorder %s30, 1
      %s32 = scalar_select %p31, 0, %s30
      %s33 = sadd.s32 1, %s24
      %s34 = scalar_select %p31, %s33, %s24
      %p35 = scmp.ge.s32.totalorder %s34, 2
      %s36 = scalar_select %p35, 0, %s34
      %s37 = ssub.s32 %s24, %s36
      %p38 = scmp.eq.s32.totalorder %s37, 0
      %s40 = sadd.s32 %s39, 1
      %s41 = scalar_select %p38, %s39, %s40
      %p44 = pneg %p38
      %p45 = scmp.eq.s32.totalorder %s17, 1
      %p46 = por %p44, %p45
      %p47 = scmp.ne.s32.totalorder %s39, %s42
      %p48 = scmp.eq.s32.totalorder %s17, 0
      %p49 = por %p47, %p48
      %p50 = scmp.ne.s32.totalorder %s39, %s42
      %p51 = scmp.eq.s32.totalorder %s22, 1
      %p52 = por %p50, %p51
      %p53 = scmp.ne.s32.totalorder %s42, %s43
      %p54 = scmp.eq.s32.totalorder %s22, 0
      %p55 = por %p53, %p54
      %p56 = scmp.ne.s32.totalorder %s42, %s43
      %p57 = scmp.eq.s32.totalorder %s23, 1
      %p58 = por %p56, %p57
      %p60 = scmp.ne.s32.totalorder %s43, %s59
      %p61 = scmp.eq.s32.totalorder %s23, 0
      %p62 = por %p60, %p61
      %s64 = sadd.s32 %s63, 1
      %p67 = scmp.eq.s32.totalorder %s17, 1
      %p68 = scmp.ne.s32.totalorder %s63, %s65
      %p69 = scmp.eq.s32.totalorder %s17, 0
      %p70 = por %p68, %p69
      %p71 = scmp.ne.s32.totalorder %s63, %s65
      %p72 = scmp.eq.s32.totalorder %s22, 1
      %p73 = por %p71, %p72
      %p74 = scmp.ne.s32.totalorder %s65, %s66
      %p75 = scmp.eq.s32.totalorder %s22, 0
      %p76 = por %p74, %p75
      %p77 = scmp.ne.s32.totalorder %s65, %s66
      %p78 = scmp.eq.s32.totalorder %s23, 1
      %p79 = por %p77, %p78
      %p81 = scmp.ne.s32.totalorder %s66, %s80
      %p82 = scmp.eq.s32.totalorder %s23, 0
      %p83 = por %p81, %p82
      %s85 = sadd.s32 %s84, 1
      %p88 = scmp.eq.s32.totalorder %s17, 1
      %p89 = scmp.ne.s32.totalorder %s84, %s86
      %p90 = scmp.eq.s32.totalorder %s17, 0
      %p91 = por %p89, %p90
      %p92 = scmp.ne.s32.totalorder %s84, %s86
      %p93 = scmp.eq.s32.totalorder %s22, 1
      %p94 = por %p92, %p93
      %p95 = scmp.ne.s32.totalorder %s86, %s87
      %p96 = scmp.eq.s32.totalorder %s22, 0
      %p97 = por %p95, %p96
      %p98 = scmp.ne.s32.totalorder %s86, %s87
      %p99 = scmp.eq.s32.totalorder %s23, 1
      %p100 = por %p98, %p99
      %p102 = scmp.ne.s32.totalorder %s87, %s101
      %p103 = scmp.eq.s32.totalorder %s23, 0
      %p104 = por %p102, %p103
      %s106 = sadd.s32 %s105, 1
      %p109 = scmp.eq.s32.totalorder %s17, 1
      %p110 = scmp.ne.s32.totalorder %s105, %s107
      %p111 = scmp.eq.s32.totalorder %s17, 0
      %p112 = por %p110, %p111
      %p113 = scmp.ne.s32.totalorder %s105, %s107
      %p114 = scmp.eq.s32.totalorder %s22, 1
      %p115 = por %p113, %p114
      %p116 = scmp.ne.s32.totalorder %s107, %s108
      %p117 = scmp.eq.s32.totalorder %s22, 0
      %p118 = por %p116, %p117
      %p119 = scmp.ne.s32.totalorder %s107, %s108
      %p120 = scmp.eq.s32.totalorder %s23, 1
      %p121 = por %p119, %p120
      %p123 = scmp.ne.s32.totalorder %s108, %s122
      %p124 = scmp.eq.s32.totalorder %s23, 0
      %p125 = por %p123, %p124
      %s127 = sadd.s32 %s126, 1
      %p130 = scmp.eq.s32.totalorder %s17, 1
      %p131 = scmp.ne.s32.totalorder %s126, %s128
      %p132 = scmp.eq.s32.totalorder %s17, 0
      %p133 = por %p131, %p132
      %p134 = scmp.ne.s32.totalorder %s126, %s128
      %p135 = scmp.eq.s32.totalorder %s22, 1
      %p136 = por %p134, %p135
      %p137 = scmp.ne.s32.totalorder %s128, %s129
      %p138 = scmp.eq.s32.totalorder %s22, 0
      %p139 = por %p137, %p138
      %p140 = scmp.ne.s32.totalorder %s128, %s129
      %p141 = scmp.eq.s32.totalorder %s23, 1
      %p142 = por %p140, %p141
      %p144 = scmp.ne.s32.totalorder %s129, %s143
      %p145 = scmp.eq.s32.totalorder %s23, 0
      %p146 = por %p144, %p145
      %s147 = ssub.s32 %s24, %s36
      %p148 = scmp.eq.s32.totalorder %s147, 0
      %s150 = sadd.s32 %s149, 1
      %s151 = scalar_select %p148, %s149, %s150
      %p154 = pneg %p148
      %p155 = scmp.eq.s32.totalorder %s17, 1
      %p156 = por %p154, %p155
      %p157 = scmp.ne.s32.totalorder %s149, %s152
      %p158 = scmp.eq.s32.totalorder %s17, 0
      %p159 = por %p157, %p158
      %p160 = scmp.ne.s32.totalorder %s149, %s152
      %p161 = scmp.eq.s32.totalorder %s22, 1
      %p162 = por %p160, %p161
      %p163 = scmp.ne.s32.totalorder %s152, %s153
      %p164 = scmp.eq.s32.totalorder %s22, 0
      %p165 = por %p163, %p164
      %p166 = scmp.ne.s32.totalorder %s152, %s153
      %p167 = scmp.eq.s32.totalorder %s23, 1
      %p168 = por %p166, %p167
      %p170 = scmp.ne.s32.totalorder %s153, %s169
      %p171 = scmp.eq.s32.totalorder %s23, 0
      %p172 = por %p170, %p171
      %s173 = ssub.s32 %s24, %s36
      %s174 = ssub.s32 %s25, %s32
      %s175 = sor.u32 %s173, %s174
      %p176 = scmp.eq.s32.totalorder %s175, 0
      %s178 = sadd.s32 %s177, 1
      %s179 = scalar_select %p176, %s177, %s178
      %p182 = pneg %p176
      %p183 = scmp.eq.s32.totalorder %s17, 1
      %p184 = por %p182, %p183
      %p185 = scmp.ne.s32.totalorder %s177, %s180
      %p186 = scmp.eq.s32.totalorder %s17, 0
      %p187 = por %p185, %p186
      %p188 = scmp.ne.s32.totalorder %s177, %s180
      %p189 = scmp.eq.s32.totalorder %s22, 1
      %p190 = por %p188, %p189
      %p191 = scmp.ne.s32.totalorder %s180, %s181
      %p192 = scmp.eq.s32.totalorder %s22, 0
      %p193 = por %p191, %p192
      %p194 = scmp.ne.s32.totalorder %s180, %s181
      %p195 = scmp.eq.s32.totalorder %s23, 1
      %p196 = por %p194, %p195
      %p198 = scmp.ne.s32.totalorder %s181, %s197
      %p199 = scmp.eq.s32.totalorder %s23, 0
      %p200 = por %p198, %p199
      %s201 = ssub.s32 %s24, %s36
      %s202 = ssub.s32 %s25, %s32
      %s203 = sor.u32 %s201, %s202
      %p204 = scmp.eq.s32.totalorder %s203, 0
      %s206 = sadd.s32 %s205, 1
      %s207 = scalar_select %p204, %s205, %s206
      %p210 = pneg %p204
      %p211 = scmp.eq.s32.totalorder %s17, 1
      %p212 = por %p210, %p211
      %p213 = scmp.ne.s32.totalorder %s205, %s208
      %p214 = scmp.eq.s32.totalorder %s17, 0
      %p215 = por %p213, %p214
      %p216 = scmp.ne.s32.totalorder %s205, %s208
      %p217 = scmp.eq.s32.totalorder %s22, 1
      %p218 = por %p216, %p217
      %p219 = scmp.ne.s32.totalorder %s208, %s209
      %p220 = scmp.eq.s32.totalorder %s22, 0
      %p221 = por %p219, %p220
      %p222 = scmp.ne.s32.totalorder %s208, %s209
      %p223 = scmp.eq.s32.totalorder %s23, 1
      %p224 = por %p222, %p223
      %p226 = scmp.ne.s32.totalorder %s209, %s225
      %p227 = scmp.eq.s32.totalorder %s23, 0
      %p228 = por %p226, %p227
      %s229 = ssub.s32 %s24, %s36
      %s230 = ssub.s32 %s25, %s32
      %s231 = sor.u32 %s229, %s230
      %p232 = scmp.eq.s32.totalorder %s231, 0
      %s234 = sadd.s32 %s233, 1
      %s235 = scalar_select %p232, %s233, %s234
      %p238 = pneg %p232
      %p239 = scmp.eq.s32.totalorder %s17, 1
      %p240 = por %p238, %p239
      %p241 = scmp.ne.s32.totalorder %s233, %s236
      %p242 = scmp.eq.s32.totalorder %s17, 0
      %p243 = por %p241, %p242
      %p244 = scmp.ne.s32.totalorder %s233, %s236
      %p245 = scmp.eq.s32.totalorder %s22, 1
      %p246 = por %p244, %p245
      %p247 = scmp.ne.s32.totalorder %s236, %s237
      %p248 = scmp.eq.s32.totalorder %s22, 0
      %p249 = por %p247, %p248
      %p250 = scmp.ne.s32.totalorder %s236, %s237
      %p251 = scmp.eq.s32.totalorder %s23, 1
      %p252 = por %p250, %p251
      %p254 = scmp.ne.s32.totalorder %s237, %s253
      %p255 = scmp.eq.s32.totalorder %s23, 0
      %p256 = por %p254, %p255
      %p257 = scmp.le.s32.totalorder 1, %s17
      %p258 = scmp.lt.s32.totalorder %s17, 3
      %p259 = pnand %p257, %p258
      %p260 = pneg %p259
      // Predicated region
      $region9: #{transition_up.3} parent=5 // pred_check
        _
      $region10: #{transition_up.3} parent=5 // pred_check_branch
        %262 = sbr.rel (%p259) target = $region12
      $region11: #{transition_up.3} parent=5 // pred_region
        %s263 = ssub.s32 %s17, 1
        // Predicated region
        $region13: #{transition_up.3} parent=11 // pred_check
          %p264 = pneg %p76
        $region14: #{transition_up.3} parent=11 // pred_check_branch
          %266 = sbr.rel (%p264) target = $region16
        $region15: #{transition_up.3} parent=11 // pred_region
          _
        $region16: #{transition_up.3} parent=11 // pred_fallthru
          _
        // Predicated region
        $region17: #{transition_up.3} parent=11 // pred_check
          %p267 = pneg %p97
        $region18: #{transition_up.3} parent=11 // pred_check_branch
          %269 = sbr.rel (%p267) target = $region20
        $region19: #{transition_up.3} parent=11 // pred_region
          _
        $region20: #{transition_up.3} parent=11 // pred_fallthru
          _
        // Predicated region
        $region21: #{transition_up.3} parent=11 // pred_check
          %p270 = pneg %p118
        $region22: #{transition_up.3} parent=11 // pred_check_branch
          %272 = sbr.rel (%p270) target = $region24
        $region23: #{transition_up.3} parent=11 // pred_region
          _
        $region24: #{transition_up.3} parent=11 // pred_fallthru
          _
        // Predicated region
        $region25: #{transition_up.3} parent=11 // pred_check
          %p273 = pneg %p139
        $region26: #{transition_up.3} parent=11 // pred_check_branch
          %275 = sbr.rel (%p273) target = $region28
        $region27: #{transition_up.3} parent=11 // pred_region
          _
        $region28: #{transition_up.3} parent=11 // pred_fallthru
          _
      $region12: #{transition_up.3} parent=5 // pred_fallthru
        _
      %p276 = scmp.lt.s32.totalorder %s17, 2
      // Predicated region
      $region29: #{transition_up.3} parent=5 // pred_check
        %p277 = pneg %p276
      $region30: #{transition_up.3} parent=5 // pred_check_branch
        %279 = sbr.rel (%p277) target = $region32
      $region31: #{transition_up.3} parent=5 // pred_region
        // Predicated region
        $region33: #{transition_up.3} parent=31 // pred_check
          %p280 = pneg %p49
        $region34: #{transition_up.3} parent=31 // pred_check_branch
          %282 = sbr.rel (%p280) target = $region36
        $region35: #{transition_up.3} parent=31 // pred_region
          %p283 = scmp.lt.s32.totalorder %s24, 1
          %s284 = scalar_select %p283, %s24, 1
          %s285 = smul.addr %s284, 4
          %s286 = smul.addr %s285, 8
          %s287 = scalar_lea.vmem %s0, %s286
        $region36: #{transition_up.3} parent=31 // pred_fallthru
          _
        // Predicated region
        $region37: #{transition_up.3} parent=31 // pred_check
          %p288 = pneg %p159
        $region38: #{transition_up.3} parent=31 // pred_check_branch
          %290 = sbr.rel (%p288) target = $region40
        $region39: #{transition_up.3} parent=31 // pred_region
          %p291 = scmp.lt.s32.totalorder %s24, 1
          %s292 = scalar_select %p291, %s24, 1
          %s293 = smul.addr %s292, 16
          %s294 = smul.addr %s293, 8
          %s295 = scalar_lea.vmem %s5, %s294
        $region40: #{transition_up.3} parent=31 // pred_fallthru
          _
        // Predicated region
        $region41: #{transition_up.3} parent=31 // pred_check
          %p296 = pneg %p187
        $region42: #{transition_up.3} parent=31 // pred_check_branch
          %298 = sbr.rel (%p296) target = $region44
        $region43: #{transition_up.3} parent=31 // pred_region
          %s299 = smul.u32 2, %s25
          %p300 = scmp.lt.s32.totalorder %s24, 1
          %s301 = scalar_select %p300, %s24, 1
          %p302 = scmp.lt.s32.totalorder %s299, 1
          %s303 = scalar_select %p302, %s299, 1
          %s304 = smul.addr %s301, 2
          %s305 = sadd.s32 %s303, %s304
          %s306 = smul.addr %s305, 4
          %s307 = scalar_lea.vmem %s6, %s306
          %s308 = smul.u32 2, %s25
        $region44: #{transition_up.3} parent=31 // pred_fallthru
          _
        // Predicated region
        $region45: #{transition_up.3} parent=31 // pred_check
          %p309 = pneg %p215
        $region46: #{transition_up.3} parent=31 // pred_check_branch
          %311 = sbr.rel (%p309) target = $region48
        $region47: #{transition_up.3} parent=31 // pred_region
          %s312 = smul.u32 2, %s25
          %p313 = scmp.lt.s32.totalorder %s24, 1
          %s314 = scalar_select %p313, %s24, 1
          %p315 = scmp.lt.s32.totalorder %s312, 1
          %s316 = scalar_select %p315, %s312, 1
          %s317 = smul.addr %s314, 8
          %s318 = sadd.s32 %s316, %s317
          %s319 = smul.addr %s318, 8
          %s320 = scalar_lea.vmem %s7, %s319
          %s321 = smul.u32 2, %s25
        $region48: #{transition_up.3} parent=31 // pred_fallthru
          _
      $region32: #{transition_up.3} parent=5 // pred_fallthru
        _
      %p322 = scmp.le.s32.totalorder 1, %s17
      %p323 = scmp.lt.s32.totalorder %s17, 3
      %p324 = pnand %p322, %p323
      %p325 = pneg %p324
      // Predicated region
      $region49: #{transition_up.3} parent=5 // pred_check
        _
      $region50: #{transition_up.3} parent=5 // pred_check_branch
        %327 = sbr.rel (%p324) target = $region52
      $region51: #{transition_up.3} parent=5 // pred_region
        %s328 = ssub.s32 %s17, 1
        %p329 = scmp.lt.s32.totalorder %s26, 1
        %s330 = scalar_select %p329, %s26, 1
        %s331 = smul.addr %s330, 4
        %s332 = smul.addr %s331, 8
        %s333 = scalar_lea.vmem %s0, %s332
        %p334 = pneg %p55
        %p335 = pneg %p52
        %p336 = pneg %p76
        %p337 = pneg %p73
        %p338 = pneg %p97
        %p339 = pneg %p94
        %p340 = pneg %p118
        %p341 = pneg %p115
        %p342 = pneg %p139
        %p343 = pneg %p136
        %p344 = scmp.lt.s32.totalorder %s26, 1
        %s345 = scalar_select %p344, %s26, 1
        %s346 = smul.addr %s345, 16
        %s347 = smul.addr %s346, 8
        %s348 = scalar_lea.vmem %s5, %s347
        %p349 = pneg %p165
        %p350 = pneg %p162
        %s351 = smul.u32 2, %s27
        %p352 = scmp.lt.s32.totalorder %s26, 1
        %s353 = scalar_select %p352, %s26, 1
        %p354 = scmp.lt.s32.totalorder %s351, 1
        %s355 = scalar_select %p354, %s351, 1
        %s356 = smul.addr %s353, 2
        %s357 = sadd.s32 %s355, %s356
        %s358 = smul.addr %s357, 4
        %s359 = scalar_lea.vmem %s6, %s358
        %p360 = pneg %p193
        %p361 = pneg %p190
        %s362 = smul.u32 2, %s27
        %p363 = scmp.lt.s32.totalorder %s26, 1
        %s364 = scalar_select %p363, %s26, 1
        %p365 = scmp.lt.s32.totalorder %s362, 1
        %s366 = scalar_select %p365, %s362, 1
        %s367 = smul.addr %s364, 8
        %s368 = sadd.s32 %s366, %s367
        %s369 = smul.addr %s368, 8
        %s370 = scalar_lea.vmem %s7, %s369
        %p371 = pneg %p221
        %p372 = pneg %p218
        %p373 = pneg %p249
        %p374 = pneg %p246
        %s375 = sand.u32 %s236, 1
        %s376 = scalar_lea.sflag [#allocation4], %s375
        %s377 = sand.u32 %s236, 1
        %s378 = smul.addr %s377, 64
        %s379 = scalar_lea.vmem [#allocation3], %s378
        %p380 = scmp.lt.s32.totalorder %s26, 1
        %s381 = scalar_select %p380, %s26, 1
        %s382 = smul.addr %s381, 4
        %s383 = smul.addr %s382, 8
        %s384 = scalar_lea.vmem %s0, %s383
        %p385 = scmp.lt.s32.totalorder %s26, 1
        %s386 = scalar_select %p385, %s26, 1
        %s387 = smul.addr %s386, 16
        %s388 = smul.addr %s387, 8
        %s389 = scalar_lea.vmem %s5, %s388
        %s390 = smul.u32 2, %s27
        %p391 = scmp.lt.s32.totalorder %s26, 1
        %s392 = scalar_select %p391, %s26, 1
        %p393 = scmp.lt.s32.totalorder %s390, 1
        %s394 = scalar_select %p393, %s390, 1
        %s395 = smul.addr %s392, 2
        %s396 = sadd.s32 %s394, %s395
        %s397 = smul.addr %s396, 4
        %s398 = scalar_lea.vmem %s6, %s397
        %s399 = smul.u32 2, %s27
        %s400 = smul.u32 2, %s27
        %p401 = scmp.lt.s32.totalorder %s26, 1
        %s402 = scalar_select %p401, %s26, 1
        %p403 = scmp.lt.s32.totalorder %s400, 1
        %s404 = scalar_select %p403, %s400, 1
        %s405 = smul.addr %s402, 8
        %s406 = sadd.s32 %s404, %s405
        %s407 = smul.addr %s406, 8
        %s408 = scalar_lea.vmem %s7, %s407
        %s409 = smul.u32 2, %s27
        %s410 = smul.u32 2, %s27
        %p412 = scmp.eq.s32.totalorder %s27, 0
        // Predicated region
        $region53: #{transition_up.3} parent=51 // pred_check
          %p413 = pneg %p412
        $region54: #{transition_up.3} parent=51 // pred_check_branch
          %415 = sbr.rel (%p413) target = $region56
        $region55: #{transition_up.3} parent=51 // pred_region
          %v416 = vld [vmem:[%s1] sm:$0xff]
          %v417 = vld [vmem:[%s1 + $0x8] sm:$0xff]
          %v418 = vld [vmem:[%s1 + $0x10] sm:$0xff]
          %v419 = vld [vmem:[%s1 + $0x18] sm:$0xff]
          %v420 = vpack.c.bf16 %v417, %v416
          %v421 = vpack.c.bf16 %v419, %v418
          %v422 = vld [vmem:[%s384] sm:$0xff]
          %v423 = vld [vmem:[%s384 + $0x8] sm:$0xff]
          %v424 = vld [vmem:[%s384 + $0x10] sm:$0xff]
          %v425 = vld [vmem:[%s384 + $0x18] sm:$0xff]
          %v426 = vpack.c.bf16 %v423, %v422
          %v427 = vpack.c.bf16 %v425, %v424
          %vm428 = vcmask 261120
          %v430 = vsel %vm428, %v420, 0
          %v433 = vsel %vm428, %v421, 0
          %435 = vmatprep.subr.bf16.mxu0 0
          %436 = vmatpush1.bf16.msra.mxu0 %v426
          %437 = vmatprep.subr.bf16.mxu0 0
          %438 = vmatpush1.bf16.msra.mxu0 %v427
          %439 = vmatprep.subr.bf16.mxu0 0
          %440 = vmatpush1.bf16.msra.mxu0 0
          %441 = vmatprep.subr.bf16.mxu0 0
          %442 = vmatpush1.bf16.msra.mxu0 0
          %443 = vmatprep.subr.bf16.mxu0 0
          %444 = vmatpush1.bf16.msra.mxu0 0
          %445 = vmatprep.subr.bf16.mxu0 0
          %446 = vmatpush1.bf16.msra.mxu0 0
          %447 = vmatprep.subr.bf16.mxu0 0
          %448 = vmatpush1.bf16.msra.mxu0 0
          %449 = vmatprep.subr.bf16.mxu0 0
          %450 = vmatpush1.bf16.msra.mxu0 0
          %451 = vmatprep.subr.bf16.mxu0 0
          %452 = vmatpush1.bf16.msra.mxu0 0
          %453 = vmatprep.subr.bf16.mxu0 0
          %454 = vmatpush1.bf16.msra.mxu0 0
          %455 = vmatprep.subr.bf16.mxu0 0
          %456 = vmatpush1.bf16.msra.mxu0 0
          %457 = vmatprep.subr.bf16.mxu0 0
          %458 = vmatpush1.bf16.msra.mxu0 0
          %459 = vmatprep.subr.bf16.mxu0 0
          %460 = vmatpush1.bf16.msra.mxu0 0
          %461 = vmatprep.subr.bf16.mxu0 0
          %462 = vmatpush1.bf16.msra.mxu0 0
          %463 = vmatprep.subr.bf16.mxu0 0
          %464 = vmatpush1.bf16.msra.mxu0 0
          %465 = vmatprep.subr.bf16.mxu0 0
          %466 = vmatpush1.bf16.msra.mxu0 0
          %467 = vmatprep.mubr.bf16.mxu0 0
          %468 = vmatmul.mubr.bf16.gmra.mrb[0].mxu0 %v430
          %v469 = vpop.f32.mrb[0].mxu0
          %v470 = vadd.f32 0.0, %v469
          %v471 = vpop.f32.mrb[0].mxu0
          %v472 = vpop.f32.mrb[0].mxu0
          %v473 = vadd.f32 0.0, %v472
          %v474 = vpop.f32.mrb[0].mxu0
          %475 = vmatprep.mubr.bf16.mxu0 0
          %476 = vmatmul.mubr.bf16.gmra.mrb[0].mxu0 %v433
          %v477 = vpop.f32.mrb[0].mxu0
          %v478 = vadd.f32 0.0, %v477
          %v479 = vpop.f32.mrb[0].mxu0
          %v480 = vpop.f32.mrb[0].mxu0
          %v481 = vadd.f32 0.0, %v480
          %v482 = vpop.f32.mrb[0].mxu0
          %483 = vdwg.mxu0
          %v484 = vld [vmem:[%s2] sm:$0xff]
          %v485 = vld [vmem:[%s2 + $0x8] sm:$0xff]
          %v486 = vld [vmem:[%s2 + $0x10] sm:$0xff]
          %v487 = vld [vmem:[%s2 + $0x18] sm:$0xff]
          %v488 = vld [vmem:[%s3] sm:$0xff]
          %v489 = vld [vmem:[%s3 + $0x8] sm:$0xff]
          %v490 = vld [vmem:[%s3 + $0x10] sm:$0xff]
          %v491 = vld [vmem:[%s3 + $0x18] sm:$0xff]
          %v492 = vld [vmem:[%s4] sm:$0xff]
          %v493 = vld [vmem:[%s4 + $0x8] sm:$0xff]
          %v494 = vld [vmem:[%s4 + $0x10] sm:$0xff]
          %v495 = vld [vmem:[%s4 + $0x18] sm:$0xff]
          %496 = vadd.xlane.f32.xlu0 %v470
          %v497 = vpop.xlane.xlu0 %496
          %498 = vadd.xlane.f32.xlu0 %v473
          %v499 = vpop.xlane.xlu0 %498
          %500 = vadd.xlane.f32.xlu0 %v478
          %v501 = vpop.xlane.xlu0 %500
          %502 = vadd.xlane.f32.xlu0 %v481
          %v503 = vpop.xlane.xlu0 %502
          %v505 = vsel %vm428, %v484, 0
          %v508 = vsel %vm428, %v485, 0
          %v511 = vsel %vm428, %v486, 0
          %v514 = vsel %vm428, %v487, 0
          %516 = vmatprep.subr.mxu0 0.0
          %517 = vmatpush1.msra.mxu0 %v497
          %518 = vmatprep.subr.mxu0 0.0
          %519 = vmatpush1.msra.mxu0 %v499
          %520 = vmatprep.subr.mxu0 0.0
          %521 = vmatpush1.msra.mxu0 %v501
          %522 = vmatprep.subr.mxu0 0.0
          %523 = vmatpush1.msra.mxu0 %v503
          %524 = vmatprep.subr.mxu0 0.0
          %525 = vmatpush1.msra.mxu0 0.0
          %526 = vmatprep.subr.mxu0 0.0
          %527 = vmatpush1.msra.mxu0 0.0
          %528 = vmatprep.subr.mxu0 0.0
          %529 = vmatpush1.msra.mxu0 0.0
          %530 = vmatprep.subr.mxu0 0.0
          %531 = vmatpush1.msra.mxu0 0.0
          %532 = vmatprep.subr.mxu0 0.0
          %533 = vmatpush1.msra.mxu0 0.0
          %534 = vmatprep.subr.mxu0 0.0
          %535 = vmatpush1.msra.mxu0 0.0
          %536 = vmatprep.subr.mxu0 0.0
          %537 = vmatpush1.msra.mxu0 0.0
          %538 = vmatprep.subr.mxu0 0.0
          %539 = vmatpush1.msra.mxu0 0.0
          %540 = vmatprep.subr.mxu0 0.0
          %541 = vmatpush1.msra.mxu0 0.0
          %542 = vmatprep.subr.mxu0 0.0
          %543 = vmatpush1.msra.mxu0 0.0
          %544 = vmatprep.subr.mxu0 0.0
          %545 = vmatpush1.msra.mxu0 0.0
          %546 = vmatprep.subr.mxu0 0.0
          %547 = vmatpush1.msra.mxu0 0.0
          %548 = vmatprep.subr.mxu0 0.0
          %549 = vmatpush1.msra.mxu0 0.0
          %550 = vmatprep.subr.mxu0 0.0
          %551 = vmatpush1.msra.mxu0 0.0
          %552 = vmatprep.subr.mxu0 0.0
          %553 = vmatpush1.msra.mxu0 0.0
          %554 = vmatprep.subr.mxu0 0.0
          %555 = vmatpush1.msra.mxu0 0.0
          %556 = vmatprep.subr.mxu0 0.0
          %557 = vmatpush1.msra.mxu0 0.0
          %558 = vmatprep.subr.mxu0 0.0
          %559 = vmatpush1.msra.mxu0 0.0
          %560 = vmatprep.subr.mxu0 0.0
          %561 = vmatpush1.msra.mxu0 0.0
          %562 = vmatprep.subr.mxu0 0.0
          %563 = vmatpush1.msra.mxu0 0.0
          %564 = vmatprep.subr.mxu0 0.0
          %565 = vmatpush1.msra.mxu0 0.0
          %566 = vmatprep.subr.mxu0 0.0
          %567 = vmatpush1.msra.mxu0 0.0
          %568 = vmatprep.subr.mxu0 0.0
          %569 = vmatpush1.msra.mxu0 0.0
          %570 = vmatprep.subr.mxu0 0.0
          %571 = vmatpush1.msra.mxu0 0.0
          %572 = vmatprep.subr.mxu0 0.0
          %573 = vmatpush1.msra.mxu0 0.0
          %574 = vmatprep.subr.mxu0 0.0
          %575 = vmatpush1.msra.mxu0 0.0
          %576 = vmatprep.subr.mxu0 0.0
          %577 = vmatpush1.msra.mxu0 0.0
          %578 = vmatprep.subr.mxu0 0.0
          %579 = vmatpush1.msra.mxu0 0.0
          %580 = vmatprep.mubr.f32.mxu0 0.0
          %581 = vmatmul.mubr.f32.gmra.mrb[0].mxu0 %v505
          %v582 = vpop.f32.mrb[0].mxu0
          %v583 = vadd.f32 0.0, %v582
          %v584 = vpop.f32.mrb[0].mxu0
          %585 = vmatprep.mubr.f32.mxu0 0.0
          %586 = vmatmul.mubr.f32.gmra.mrb[0].mxu0 %v508
          %v587 = vpop.f32.mrb[0].mxu0
          %v588 = vadd.f32 0.0, %v587
          %v589 = vpop.f32.mrb[0].mxu0
          %590 = vmatprep.mubr.f32.mxu0 0.0
          %591 = vmatmul.mubr.f32.gmra.mrb[0].mxu0 %v511
          %v592 = vpop.f32.mrb[0].mxu0
          %v593 = vadd.f32 0.0, %v592
          %v594 = vpop.f32.mrb[0].mxu0
          %595 = vmatprep.mubr.f32.mxu0 0.0
          %596 = vmatmul.mubr.f32.gmra.mrb[0].mxu0 %v514
          %v597 = vpop.f32.mrb[0].mxu0
          %v598 = vadd.f32 0.0, %v597
          %v599 = vpop.f32.mrb[0].mxu0
          %600 = vdwg.mxu0
          %v601 = vrcp.pop 2048.0
          %v602 = vmul.f32 %v583, %v601
          %v603 = vmul.f32 %v588, %v601
          %v604 = vmul.f32 %v593, %v601
          %v605 = vmul.f32 %v598, %v601
          %607 = vset.pattern.permute.xlu0 0
          %608 = vperm.xlu0 %607, %v602
          %v609 = vpop.permute.xlu0 %608
          %612 = vset.pattern.permute.xlu0 0
          %613 = vperm.xlu0 %612, %v603
          %v614 = vpop.permute.xlu0 %613
          %617 = vset.pattern.permute.xlu0 0
          %618 = vperm.xlu0 %617, %v604
          %v619 = vpop.permute.xlu0 %618
          %622 = vset.pattern.permute.xlu0 0
          %623 = vperm.xlu0 %622, %v605
          %v624 = vpop.permute.xlu0 %623
          %v626 = vsub.f32 %v470, %v609
          %v627 = vsub.f32 %v473, %v614
          %v628 = vsub.f32 %v478, %v619
          %v629 = vsub.f32 %v481, %v624
          %v630 = vmul.f32 %v626, %v626
          %v631 = vmul.f32 %v627, %v627
          %v632 = vmul.f32 %v628, %v628
          %v633 = vmul.f32 %v629, %v629
          %634 = vadd.xlane.f32.xlu0 %v630
          %v635 = vpop.xlane.xlu0 %634
          %636 = vadd.xlane.f32.xlu0 %v631
          %v637 = vpop.xlane.xlu0 %636
          %638 = vadd.xlane.f32.xlu0 %v632
          %v639 = vpop.xlane.xlu0 %638
          %640 = vadd.xlane.f32.xlu0 %v633
          %v641 = vpop.xlane.xlu0 %640
          %642 = vmatprep.subr.mxu0 0.0
          %643 = vmatpush1.msra.mxu0 %v635
          %644 = vmatprep.subr.mxu0 0.0
          %645 = vmatpush1.msra.mxu0 %v637
          %646 = vmatprep.subr.mxu0 0.0
          %647 = vmatpush1.msra.mxu0 %v639
          %648 = vmatprep.subr.mxu0 0.0
          %649 = vmatpush1.msra.mxu0 %v641
          %650 = vmatprep.subr.mxu0 0.0
          %651 = vmatpush1.msra.mxu0 0.0
          %652 = vmatprep.subr.mxu0 0.0
          %653 = vmatpush1.msra.mxu0 0.0
          %654 = vmatprep.subr.mxu0 0.0
          %655 = vmatpush1.msra.mxu0 0.0
          %656 = vmatprep.subr.mxu0 0.0
          %657 = vmatpush1.msra.mxu0 0.0
          %658 = vmatprep.subr.mxu0 0.0
          %659 = vmatpush1.msra.mxu0 0.0
          %660 = vmatprep.subr.mxu0 0.0
          %661 = vmatpush1.msra.mxu0 0.0
          %662 = vmatprep.subr.mxu0 0.0
          %663 = vmatpush1.msra.mxu0 0.0
          %664 = vmatprep.subr.mxu0 0.0
          %665 = vmatpush1.msra.mxu0 0.0
          %666 = vmatprep.subr.mxu0 0.0
          %667 = vmatpush1.msra.mxu0 0.0
          %668 = vmatprep.subr.mxu0 0.0
          %669 = vmatpush1.msra.mxu0 0.0
          %670 = vmatprep.subr.mxu0 0.0
          %671 = vmatpush1.msra.mxu0 0.0
          %672 = vmatprep.subr.mxu0 0.0
          %673 = vmatpush1.msra.mxu0 0.0
          %674 = vmatprep.subr.mxu0 0.0
          %675 = vmatpush1.msra.mxu0 0.0
          %676 = vmatprep.subr.mxu0 0.0
          %677 = vmatpush1.msra.mxu0 0.0
          %678 = vmatprep.subr.mxu0 0.0
          %679 = vmatpush1.msra.mxu0 0.0
          %680 = vmatprep.subr.mxu0 0.0
          %681 = vmatpush1.msra.mxu0 0.0
          %682 = vmatprep.subr.mxu0 0.0
          %683 = vmatpush1.msra.mxu0 0.0
          %684 = vmatprep.subr.mxu0 0.0
          %685 = vmatpush1.msra.mxu0 0.0
          %686 = vmatprep.subr.mxu0 0.0
          %687 = vmatpush1.msra.mxu0 0.0
          %688 = vmatprep.subr.mxu0 0.0
          %689 = vmatpush1.msra.mxu0 0.0
          %690 = vmatprep.subr.mxu0 0.0
          %691 = vmatpush1.msra.mxu0 0.0
          %692 = vmatprep.subr.mxu0 0.0
          %693 = vmatpush1.msra.mxu0 0.0
          %694 = vmatprep.subr.mxu0 0.0
          %695 = vmatpush1.msra.mxu0 0.0
          %696 = vmatprep.subr.mxu0 0.0
          %697 = vmatpush1.msra.mxu0 0.0
          %698 = vmatprep.subr.mxu0 0.0
          %699 = vmatpush1.msra.mxu0 0.0
          %700 = vmatprep.subr.mxu0 0.0
          %701 = vmatpush1.msra.mxu0 0.0
          %702 = vmatprep.subr.mxu0 0.0
          %703 = vmatpush1.msra.mxu0 0.0
          %704 = vmatprep.subr.mxu0 0.0
          %705 = vmatpush1.msra.mxu0 0.0
          %706 = vmatprep.mubr.f32.mxu0 0.0
          %707 = vmatmul.mubr.f32.gmra.mrb[0].mxu0 %v505
          %v708 = vpop.f32.mrb[0].mxu0
          %v709 = vadd.f32 0.0, %v708
          %v710 = vpop.f32.mrb[0].mxu0
          %711 = vmatprep.mubr.f32.mxu0 0.0
          %712 = vmatmul.mubr.f32.gmra.mrb[0].mxu0 %v508
          %v713 = vpop.f32.mrb[0].mxu0
          %v714 = vadd.f32 0.0, %v713
          %v715 = vpop.f32.mrb[0].mxu0
          %716 = vmatprep.mubr.f32.mxu0 0.0
          %717 = vmatmul.mubr.f32.gmra.mrb[0].mxu0 %v511
          %v718 = vpop.f32.mrb[0].mxu0
          %v719 = vadd.f32 0.0, %v718
          %v720 = vpop.f32.mrb[0].mxu0
          %721 = vmatprep.mubr.f32.mxu0 0.0
          %722 = vmatmul.mubr.f32.gmra.mrb[0].mxu0 %v514
          %v723 = vpop.f32.mrb[0].mxu0
          %v724 = vadd.f32 0.0, %v723
          %v725 = vpop.f32.mrb[0].mxu0
          %726 = vdwg.mxu0
          %v727 = vmul.f32 %v709, %v601
          %v728 = vmul.f32 %v714, %v601
          %v729 = vmul.f32 %v719, %v601
          %v730 = vmul.f32 %v724, %v601
          %v731 = vadd.f32 %v727, 1e-05
          %v732 = vadd.f32 %v728, 1e-05
          %v733 = vadd.f32 %v729, 1e-05
          %v734 = vadd.f32 %v730, 1e-05
          %v735 = vrsqrt.pop %v731
          %v736 = vrsqrt.pop %v732
          %v737 = vrsqrt.pop %v733
          %v738 = vrsqrt.pop %v734
          %740 = vset.pattern.permute.xlu0 0
          %741 = vperm.xlu0 %740, %v735
          %v742 = vpop.permute.xlu0 %741
          %745 = vset.pattern.permute.xlu0 0
          %746 = vperm.xlu0 %745, %v736
          %v747 = vpop.permute.xlu0 %746
          %750 = vset.pattern.permute.xlu0 0
          %751 = vperm.xlu0 %750, %v737
          %v752 = vpop.permute.xlu0 %751
          %755 = vset.pattern.permute.xlu0 0
          %756 = vperm.xlu0 %755, %v738
          %v757 = vpop.permute.xlu0 %756
          %v759 = vmul.f32 %v626, %v742
          %v760 = vmul.f32 %v627, %v747
          %v761 = vmul.f32 %v628, %v752
          %v762 = vmul.f32 %v629, %v757
          %764 = vset.pattern.permute.xlu0 0
          %765 = vperm.xlu0 %764, %v488
          %v766 = vpop.permute.xlu0 %765
          %769 = vset.pattern.permute.xlu0 0
          %770 = vperm.xlu0 %769, %v489
          %v771 = vpop.permute.xlu0 %770
          %774 = vset.pattern.permute.xlu0 0
          %775 = vperm.xlu0 %774, %v490
          %v776 = vpop.permute.xlu0 %775
          %779 = vset.pattern.permute.xlu0 0
          %780 = vperm.xlu0 %779, %v491
          %v781 = vpop.permute.xlu0 %780
          %v783 = vmul.f32 %v759, %v766
          %v784 = vmul.f32 %v760, %v771
          %v785 = vmul.f32 %v761, %v776
          %v786 = vmul.f32 %v762, %v781
          %788 = vset.pattern.permute.xlu0 0
          %789 = vperm.xlu0 %788, %v492
          %v790 = vpop.permute.xlu0 %789
          %793 = vset.pattern.permute.xlu0 0
          %794 = vperm.xlu0 %793, %v493
          %v795 = vpop.permute.xlu0 %794
          %798 = vset.pattern.permute.xlu0 0
          %799 = vperm.xlu0 %798, %v494
          %v800 = vpop.permute.xlu0 %799
          %803 = vset.pattern.permute.xlu0 0
          %804 = vperm.xlu0 %803, %v495
          %v805 = vpop.permute.xlu0 %804
          %v807 = vadd.f32 %v783, %v790
          %v808 = vadd.f32 %v784, %v795
          %v809 = vadd.f32 %v785, %v800
          %v810 = vadd.f32 %v786, %v805
          %v811 = vmax.f32 %v807, 0.0
          %v812 = vmax.f32 %v808, 0.0
          %v813 = vmax.f32 %v809, 0.0
          %v814 = vmax.f32 %v810, 0.0
          %v815 = vpack.c.bf16 %v812, %v811
          %v816 = vpack.c.bf16 %v814, %v813
          %817 = vst [vmem:[#allocation2] sm:$0xff] %v815
          %818 = vst [vmem:[#allocation2 + $0x8] sm:$0xff] %v816
        $region56: #{transition_up.3} parent=51 // pred_fallthru
          _
        %v819 = vld [vmem:[%s389] sm:$0xff]
        %v820 = vld [vmem:[%s389 + $0x8] sm:$0xff]
        %v821 = vld [vmem:[%s389 + $0x10] sm:$0xff]
        %v822 = vld [vmem:[%s389 + $0x18] sm:$0xff]
        %v823 = vld [vmem:[%s389 + $0x20] sm:$0xff]
        %v824 = vld [vmem:[%s389 + $0x28] sm:$0xff]
        %v825 = vld [vmem:[%s389 + $0x30] sm:$0xff]
        %v826 = vld [vmem:[%s389 + $0x38] sm:$0xff]
        %v827 = vld [vmem:[%s389 + $0x40] sm:$0xff]
        %v828 = vld [vmem:[%s389 + $0x48] sm:$0xff]
        %v829 = vld [vmem:[%s389 + $0x50] sm:$0xff]
        %v830 = vld [vmem:[%s389 + $0x58] sm:$0xff]
        %v831 = vld [vmem:[%s389 + $0x60] sm:$0xff]
        %v832 = vld [vmem:[%s389 + $0x68] sm:$0xff]
        %v833 = vld [vmem:[%s389 + $0x70] sm:$0xff]
        %v834 = vld [vmem:[%s389 + $0x78] sm:$0xff]
        %v835 = vld [vmem:[%s398] sm:$0x77]
        %837 = vset.pattern.permute.xlu0 0
        %838 = vperm.xlu0 %837, %v819
        %v839 = vpop.permute.xlu0 %838
        %842 = vset.pattern.permute.xlu0 0
        %843 = vperm.xlu0 %842, %v820
        %v844 = vpop.permute.xlu0 %843
        %847 = vset.pattern.permute.xlu0 0
        %848 = vperm.xlu0 %847, %v821
        %v849 = vpop.permute.xlu0 %848
        %852 = vset.pattern.permute.xlu0 0
        %853 = vperm.xlu0 %852, %v822
        %v854 = vpop.permute.xlu0 %853
        %857 = vset.pattern.permute.xlu0 0
        %858 = vperm.xlu0 %857, %v823
        %v859 = vpop.permute.xlu0 %858
        %862 = vset.pattern.permute.xlu0 0
        %863 = vperm.xlu0 %862, %v824
        %v864 = vpop.permute.xlu0 %863
        %867 = vset.pattern.permute.xlu0 0
        %868 = vperm.xlu0 %867, %v825
        %v869 = vpop.permute.xlu0 %868
        %872 = vset.pattern.permute.xlu0 0
        %873 = vperm.xlu0 %872, %v826
        %v874 = vpop.permute.xlu0 %873
        %877 = vset.pattern.permute.xlu0 0
        %878 = vperm.xlu0 %877, %v827
        %v879 = vpop.permute.xlu0 %878
        %882 = vset.pattern.permute.xlu0 0
        %883 = vperm.xlu0 %882, %v828
        %v884 = vpop.permute.xlu0 %883
        %887 = vset.pattern.permute.xlu0 0
        %888 = vperm.xlu0 %887, %v829
        %v889 = vpop.permute.xlu0 %888
        %892 = vset.pattern.permute.xlu0 0
        %893 = vperm.xlu0 %892, %v830
        %v894 = vpop.permute.xlu0 %893
        %897 = vset.pattern.permute.xlu0 0
        %898 = vperm.xlu0 %897, %v831
        %v899 = vpop.permute.xlu0 %898
        %902 = vset.pattern.permute.xlu0 0
        %903 = vperm.xlu0 %902, %v832
        %v904 = vpop.permute.xlu0 %903
        %907 = vset.pattern.permute.xlu0 0
        %908 = vperm.xlu0 %907, %v833
        %v909 = vpop.permute.xlu0 %908
        %912 = vset.pattern.permute.xlu0 0
        %913 = vperm.xlu0 %912, %v834
        %v914 = vpop.permute.xlu0 %913
        %v917 = vlaneseq
        %v918 = vshrl.u32 %v917, 7
        %v919 = vsub.s32 0, %v918
        %v920 = vrot.slane %v835, %v919
        %v921 = vlaneseq
        %v922 = vshrl.u32 %v921, 7
        %v923 = vsub.s32 4, %v922
        %v924 = vrot.slane %v835, %v923
        %v927 = vlaneseq
        %v928 = vshrl.u32 %v927, 7
        %v929 = vsub.s32 0, %v928
        %v930 = vrot.slane %v920, %v929
        %v931 = vlaneseq
        %v932 = vshrl.u32 %v931, 7
        %v933 = vsub.s32 0, %v932
        %v934 = vrot.slane %v924, %v933
        %v935 = vsub.f32 %v839, %v930
        %v936 = vsub.f32 %v839, %v934
        %v937 = vsub.f32 %v844, %v930
        %v938 = vsub.f32 %v844, %v934
        %v939 = vsub.f32 %v849, %v930
        %v940 = vsub.f32 %v849, %v934
        %v941 = vsub.f32 %v854, %v930
        %v942 = vsub.f32 %v854, %v934
        %v943 = vsub.f32 %v859, %v930
        %v944 = vsub.f32 %v859, %v934
        %v945 = vsub.f32 %v864, %v930
        %v946 = vsub.f32 %v864, %v934
        %v947 = vsub.f32 %v869, %v930
        %v948 = vsub.f32 %v869, %v934
        %v949 = vsub.f32 %v874, %v930
        %v950 = vsub.f32 %v874, %v934
        %v951 = vsub.f32 %v879, %v930
        %v952 = vsub.f32 %v879, %v934
        %v953 = vsub.f32 %v884, %v930
        %v954 = vsub.f32 %v884, %v934
        %v955 = vsub.f32 %v889, %v930
        %v956 = vsub.f32 %v889, %v934
        %v957 = vsub.f32 %v894, %v930
        %v958 = vsub.f32 %v894, %v934
        %v959 = vsub.f32 %v899, %v930
        %v960 = vsub.f32 %v899, %v934
        %v961 = vsub.f32 %v904, %v930
        %v962 = vsub.f32 %v904, %v934
        %v963 = vsub.f32 %v909, %v930
        %v964 = vsub.f32 %v909, %v934
        %v965 = vsub.f32 %v914, %v930
        %v966 = vsub.f32 %v914, %v934
        %v967 = vmul.f32 %v935, %v935
        %v968 = vmul.f32 %v936, %v936
        %v969 = vmul.f32 %v937, %v937
        %v970 = vmul.f32 %v938, %v938
        %v971 = vmul.f32 %v939, %v939
        %v972 = vmul.f32 %v940, %v940
        %v973 = vmul.f32 %v941, %v941
        %v974 = vmul.f32 %v942, %v942
        %v975 = vmul.f32 %v943, %v943
        %v976 = vmul.f32 %v944, %v944
        %v977 = vmul.f32 %v945, %v945
        %v978 = vmul.f32 %v946, %v946
        %v979 = vmul.f32 %v947, %v947
        %v980 = vmul.f32 %v948, %v948
        %v981 = vmul.f32 %v949, %v949
        %v982 = vmul.f32 %v950, %v950
        %v983 = vmul.f32 %v951, %v951
        %v984 = vmul.f32 %v952, %v952
        %v985 = vmul.f32 %v953, %v953
        %v986 = vmul.f32 %v954, %v954
        %v987 = vmul.f32 %v955, %v955
        %v988 = vmul.f32 %v956, %v956
        %v989 = vmul.f32 %v957, %v957
        %v990 = vmul.f32 %v958, %v958
        %v991 = vmul.f32 %v959, %v959
        %v992 = vmul.f32 %v960, %v960
        %v993 = vmul.f32 %v961, %v961
        %v994 = vmul.f32 %v962, %v962
        %v995 = vmul.f32 %v963, %v963
        %v996 = vmul.f32 %v964, %v964
        %v997 = vmul.f32 %v965, %v965
        %v998 = vmul.f32 %v966, %v966
        %v999 = vadd.f32 %v967, 0.0
        %v1000 = vadd.f32 %v968, 0.0
        %v1001 = vadd.f32 %v969, 0.0
        %v1002 = vadd.f32 %v970, 0.0
        %v1003 = vadd.f32 %v971, 0.0
        %v1004 = vadd.f32 %v972, 0.0
        %v1005 = vadd.f32 %v973, 0.0
        %v1006 = vadd.f32 %v974, 0.0
        %v1007 = vadd.f32 %v975, 0.0
        %v1008 = vadd.f32 %v976, 0.0
        %v1009 = vadd.f32 %v977, 0.0
        %v1010 = vadd.f32 %v978, 0.0
        %v1011 = vadd.f32 %v979, 0.0
        %v1012 = vadd.f32 %v980, 0.0
        %v1013 = vadd.f32 %v981, 0.0
        %v1014 = vadd.f32 %v982, 0.0
        %v1015 = vadd.f32 %v983, 0.0
        %v1016 = vadd.f32 %v984, 0.0
        %v1017 = vadd.f32 %v985, 0.0
        %v1018 = vadd.f32 %v986, 0.0
        %v1019 = vadd.f32 %v987, 0.0
        %v1020 = vadd.f32 %v988, 0.0
        %v1021 = vadd.f32 %v989, 0.0
        %v1022 = vadd.f32 %v990, 0.0
        %v1023 = vadd.f32 %v991, 0.0
        %v1024 = vadd.f32 %v992, 0.0
        %v1025 = vadd.f32 %v993, 0.0
        %v1026 = vadd.f32 %v994, 0.0
        %v1027 = vadd.f32 %v995, 0.0
        %v1028 = vadd.f32 %v996, 0.0
        %v1029 = vadd.f32 %v997, 0.0
        %v1030 = vadd.f32 %v998, 0.0
        %1031 = vset.pattern.permute.xlu0 1
        %1032 = vperm.xlu0 %1031, %v819
        %v1033 = vpop.permute.xlu0 %1032
        %1035 = vset.pattern.permute.xlu0 1
        %1036 = vperm.xlu0 %1035, %v820
        %v1037 = vpop.permute.xlu0 %1036
        %1039 = vset.pattern.permute.xlu0 1
        %1040 = vperm.xlu0 %1039, %v821
        %v1041 = vpop.permute.xlu0 %1040
        %1043 = vset.pattern.permute.xlu0 1
        %1044 = vperm.xlu0 %1043, %v822
        %v1045 = vpop.permute.xlu0 %1044
        %1047 = vset.pattern.permute.xlu0 1
        %1048 = vperm.xlu0 %1047, %v823
        %v1049 = vpop.permute.xlu0 %1048
        %1051 = vset.pattern.permute.xlu0 1
        %1052 = vperm.xlu0 %1051, %v824
        %v1053 = vpop.permute.xlu0 %1052
        %1055 = vset.pattern.permute.xlu0 1
        %1056 = vperm.xlu0 %1055, %v825
        %v1057 = vpop.permute.xlu0 %1056
        %1059 = vset.pattern.permute.xlu0 1
        %1060 = vperm.xlu0 %1059, %v826
        %v1061 = vpop.permute.xlu0 %1060
        %1063 = vset.pattern.permute.xlu0 1
        %1064 = vperm.xlu0 %1063, %v827
        %v1065 = vpop.permute.xlu0 %1064
        %1067 = vset.pattern.permute.xlu0 1
        %1068 = vperm.xlu0 %1067, %v828
        %v1069 = vpop.permute.xlu0 %1068
        %1071 = vset.pattern.permute.xlu0 1
        %1072 = vperm.xlu0 %1071, %v829
        %v1073 = vpop.permute.xlu0 %1072
        %1075 = vset.pattern.permute.xlu0 1
        %1076 = vperm.xlu0 %1075, %v830
        %v1077 = vpop.permute.xlu0 %1076
        %1079 = vset.pattern.permute.xlu0 1
        %1080 = vperm.xlu0 %1079, %v831
        %v1081 = vpop.permute.xlu0 %1080
        %1083 = vset.pattern.permute.xlu0 1
        %1084 = vperm.xlu0 %1083, %v832
        %v1085 = vpop.permute.xlu0 %1084
        %1087 = vset.pattern.permute.xlu0 1
        %1088 = vperm.xlu0 %1087, %v833
        %v1089 = vpop.permute.xlu0 %1088
        %1091 = vset.pattern.permute.xlu0 1
        %1092 = vperm.xlu0 %1091, %v834
        %v1093 = vpop.permute.xlu0 %1092
        %v1095 = vlaneseq
        %v1096 = vshrl.u32 %v1095, 7
        %v1097 = vsub.s32 1, %v1096
        %v1098 = vrot.slane %v835, %v1097
        %v1099 = vlaneseq
        %v1100 = vshrl.u32 %v1099, 7
        %v1101 = vsub.s32 5, %v1100
        %v1102 = vrot.slane %v835, %v1101
        %v1105 = vlaneseq
        %v1106 = vshrl.u32 %v1105, 7
        %v1107 = vsub.s32 1, %v1106
        %v1108 = vrot.slane %v1098, %v1107
        %v1109 = vlaneseq
        %v1110 = vshrl.u32 %v1109, 7
        %v1111 = vsub.s32 1, %v1110
        %v1112 = vrot.slane %v1102, %v1111
        %v1113 = vsub.f32 %v1033, %v1108
        %v1114 = vsub.f32 %v1033, %v1112
        %v1115 = vsub.f32 %v1037, %v1108
        %v1116 = vsub.f32 %v1037, %v1112
        %v1117 = vsub.f32 %v1041, %v1108
        %v1118 = vsub.f32 %v1041, %v1112
        %v1119 = vsub.f32 %v1045, %v1108
        %v1120 = vsub.f32 %v1045, %v1112
        %v1121 = vsub.f32 %v1049, %v1108
        %v1122 = vsub.f32 %v1049, %v1112
        %v1123 = vsub.f32 %v1053, %v1108
        %v1124 = vsub.f32 %v1053, %v1112
        %v1125 = vsub.f32 %v1057, %v1108
        %v1126 = vsub.f32 %v1057, %v1112
        %v1127 = vsub.f32 %v1061, %v1108
        %v1128 = vsub.f32 %v1061, %v1112
        %v1129 = vsub.f32 %v1065, %v1108
        %v1130 = vsub.f32 %v1065, %v1112
        %v1131 = vsub.f32 %v1069, %v1108
        %v1132 = vsub.f32 %v1069, %v1112
        %v1133 = vsub.f32 %v1073, %v1108
        %v1134 = vsub.f32 %v1073, %v1112
        %v1135 = vsub.f32 %v1077, %v1108
        %v1136 = vsub.f32 %v1077, %v1112
        %v1137 = vsub.f32 %v1081, %v1108
        %v1138 = vsub.f32 %v1081, %v1112
        %v1139 = vsub.f32 %v1085, %v1108
        %v1140 = vsub.f32 %v1085, %v1112
        %v1141 = vsub.f32 %v1089, %v1108
        %v1142 = vsub.f32 %v1089, %v1112
        %v1143 = vsub.f32 %v1093, %v1108
        %v1144 = vsub.f32 %v1093, %v1112
        %v1145 = vmul.f32 %v1113, %v1113
        %v1146 = vmul.f32 %v1114, %v1114
        %v1147 = vmul.f32 %v1115, %v1115
        %v1148 = vmul.f32 %v1116, %v1116
        %v1149 = vmul.f32 %v1117, %v1117
        %v1150 = vmul.f32 %v1118, %v1118
        %v1151 = vmul.f32 %v1119, %v1119
        %v1152 = vmul.f32 %v1120, %v1120
        %v1153 = vmul.f32 %v1121, %v1121
        %v1154 = vmul.f32 %v1122, %v1122
        %v1155 = vmul.f32 %v1123, %v1123
        %v1156 = vmul.f32 %v1124, %v1124
        %v1157 = vmul.f32 %v1125, %v1125
        %v1158 = vmul.f32 %v1126, %v1126
        %v1159 = vmul.f32 %v1127, %v1127
        %v1160 = vmul.f32 %v1128, %v1128
        %v1161 = vmul.f32 %v1129, %v1129
        %v1162 = vmul.f32 %v1130, %v1130
        %v1163 = vmul.f32 %v1131, %v1131
        %v1164 = vmul.f32 %v1132, %v1132
        %v1165 = vmul.f32 %v1133, %v1133
        %v1166 = vmul.f32 %v1134, %v1134
        %v1167 = vmul.f32 %v1135, %v1135
        %v1168 = vmul.f32 %v1136, %v1136
        %v1169 = vmul.f32 %v1137, %v1137
        %v1170 = vmul.f32 %v1138, %v1138
        %v1171 = vmul.f32 %v1139, %v1139
        %v1172 = vmul.f32 %v1140, %v1140
        %v1173 = vmul.f32 %v1141, %v1141
        %v1174 = vmul.f32 %v1142, %v1142
        %v1175 = vmul.f32 %v1143, %v1143
        %v1176 = vmul.f32 %v1144, %v1144
        %v1177 = vadd.f32 %v999, %v1145
        %v1178 = vadd.f32 %v1000, %v1146
        %v1179 = vadd.f32 %v1001, %v1147
        %v1180 = vadd.f32 %v1002, %v1148
        %v1181 = vadd.f32 %v1003, %v1149
        %v1182 = vadd.f32 %v1004, %v1150
        %v1183 = vadd.f32 %v1005, %v1151
        %v1184 = vadd.f32 %v1006, %v1152
        %v1185 = vadd.f32 %v1007, %v1153
        %v1186 = vadd.f32 %v1008, %v1154
        %v1187 = vadd.f32 %v1009, %v1155
        %v1188 = vadd.f32 %v1010, %v1156
        %v1189 = vadd.f32 %v1011, %v1157
        %v1190 = vadd.f32 %v1012, %v1158
        %v1191 = vadd.f32 %v1013, %v1159
        %v1192 = vadd.f32 %v1014, %v1160
        %v1193 = vadd.f32 %v1015, %v1161
        %v1194 = vadd.f32 %v1016, %v1162
        %v1195 = vadd.f32 %v1017, %v1163
        %v1196 = vadd.f32 %v1018, %v1164
        %v1197 = vadd.f32 %v1019, %v1165
        %v1198 = vadd.f32 %v1020, %v1166
        %v1199 = vadd.f32 %v1021, %v1167
        %v1200 = vadd.f32 %v1022, %v1168
        %v1201 = vadd.f32 %v1023, %v1169
        %v1202 = vadd.f32 %v1024, %v1170
        %v1203 = vadd.f32 %v1025, %v1171
        %v1204 = vadd.f32 %v1026, %v1172
        %v1205 = vadd.f32 %v1027, %v1173
        %v1206 = vadd.f32 %v1028, %v1174
        %v1207 = vadd.f32 %v1029, %v1175
        %v1208 = vadd.f32 %v1030, %v1176
        %1209 = vset.pattern.permute.xlu0 2
        %1210 = vperm.xlu0 %1209, %v819
        %v1211 = vpop.permute.xlu0 %1210
        %1213 = vset.pattern.permute.xlu0 2
        %1214 = vperm.xlu0 %1213, %v820
        %v1215 = vpop.permute.xlu0 %1214
        %1217 = vset.pattern.permute.xlu0 2
        %1218 = vperm.xlu0 %1217, %v821
        %v1219 = vpop.permute.xlu0 %1218
        %1221 = vset.pattern.permute.xlu0 2
        %1222 = vperm.xlu0 %1221, %v822
        %v1223 = vpop.permute.xlu0 %1222
        %1225 = vset.pattern.permute.xlu0 2
        %1226 = vperm.xlu0 %1225, %v823
        %v1227 = vpop.permute.xlu0 %1226
        %1229 = vset.pattern.permute.xlu0 2
        %1230 = vperm.xlu0 %1229, %v824
        %v1231 = vpop.permute.xlu0 %1230
        %1233 = vset.pattern.permute.xlu0 2
        %1234 = vperm.xlu0 %1233, %v825
        %v1235 = vpop.permute.xlu0 %1234
        %1237 = vset.pattern.permute.xlu0 2
        %1238 = vperm.xlu0 %1237, %v826
        %v1239 = vpop.permute.xlu0 %1238
        %1241 = vset.pattern.permute.xlu0 2
        %1242 = vperm.xlu0 %1241, %v827
        %v1243 = vpop.permute.xlu0 %1242
        %1245 = vset.pattern.permute.xlu0 2
        %1246 = vperm.xlu0 %1245, %v828
        %v1247 = vpop.permute.xlu0 %1246
        %1249 = vset.pattern.permute.xlu0 2
        %1250 = vperm.xlu0 %1249, %v829
        %v1251 = vpop.permute.xlu0 %1250
        %1253 = vset.pattern.permute.xlu0 2
        %1254 = vperm.xlu0 %1253, %v830
        %v1255 = vpop.permute.xlu0 %1254
        %1257 = vset.pattern.permute.xlu0 2
        %1258 = vperm.xlu0 %1257, %v831
        %v1259 = vpop.permute.xlu0 %1258
        %1261 = vset.pattern.permute.xlu0 2
        %1262 = vperm.xlu0 %1261, %v832
        %v1263 = vpop.permute.xlu0 %1262
        %1265 = vset.pattern.permute.xlu0 2
        %1266 = vperm.xlu0 %1265, %v833
        %v1267 = vpop.permute.xlu0 %1266
        %1269 = vset.pattern.permute.xlu0 2
        %1270 = vperm.xlu0 %1269, %v834
        %v1271 = vpop.permute.xlu0 %1270
        %v1273 = vlaneseq
        %v1274 = vshrl.u32 %v1273, 7
        %v1275 = vsub.s32 2, %v1274
        %v1276 = vrot.slane %v835, %v1275
        %v1277 = vlaneseq
        %v1278 = vshrl.u32 %v1277, 7
        %v1279 = vsub.s32 6, %v1278
        %v1280 = vrot.slane %v835, %v1279
        %v1283 = vlaneseq
        %v1284 = vshrl.u32 %v1283, 7
        %v1285 = vsub.s32 2, %v1284
        %v1286 = vrot.slane %v1276, %v1285
        %v1287 = vlaneseq
        %v1288 = vshrl.u32 %v1287, 7
        %v1289 = vsub.s32 2, %v1288
        %v1290 = vrot.slane %v1280, %v1289
        %v1291 = vsub.f32 %v1211, %v1286
        %v1292 = vsub.f32 %v1211, %v1290
        %v1293 = vsub.f32 %v1215, %v1286
        %v1294 = vsub.f32 %v1215, %v1290
        %v1295 = vsub.f32 %v1219, %v1286
        %v1296 = vsub.f32 %v1219, %v1290
        %v1297 = vsub.f32 %v1223, %v1286
        %v1298 = vsub.f32 %v1223, %v1290
        %v1299 = vsub.f32 %v1227, %v1286
        %v1300 = vsub.f32 %v1227, %v1290
        %v1301 = vsub.f32 %v1231, %v1286
        %v1302 = vsub.f32 %v1231, %v1290
        %v1303 = vsub.f32 %v1235, %v1286
        %v1304 = vsub.f32 %v1235, %v1290
        %v1305 = vsub.f32 %v1239, %v1286
        %v1306 = vsub.f32 %v1239, %v1290
        %v1307 = vsub.f32 %v1243, %v1286
        %v1308 = vsub.f32 %v1243, %v1290
        %v1309 = vsub.f32 %v1247, %v1286
        %v1310 = vsub.f32 %v1247, %v1290
        %v1311 = vsub.f32 %v1251, %v1286
        %v1312 = vsub.f32 %v1251, %v1290
        %v1313 = vsub.f32 %v1255, %v1286
        %v1314 = vsub.f32 %v1255, %v1290
        %v1315 = vsub.f32 %v1259, %v1286
        %v1316 = vsub.f32 %v1259, %v1290
        %v1317 = vsub.f32 %v1263, %v1286
        %v1318 = vsub.f32 %v1263, %v1290
        %v1319 = vsub.f32 %v1267, %v1286
        %v1320 = vsub.f32 %v1267, %v1290
        %v1321 = vsub.f32 %v1271, %v1286
        %v1322 = vsub.f32 %v1271, %v1290
        %v1323 = vmul.f32 %v1291, %v1291
        %v1324 = vmul.f32 %v1292, %v1292
        %v1325 = vmul.f32 %v1293, %v1293
        %v1326 = vmul.f32 %v1294, %v1294
        %v1327 = vmul.f32 %v1295, %v1295
        %v1328 = vmul.f32 %v1296, %v1296
        %v1329 = vmul.f32 %v1297, %v1297
        %v1330 = vmul.f32 %v1298, %v1298
        %v1331 = vmul.f32 %v1299, %v1299
        %v1332 = vmul.f32 %v1300, %v1300
        %v1333 = vmul.f32 %v1301, %v1301
        %v1334 = vmul.f32 %v1302, %v1302
        %v1335 = vmul.f32 %v1303, %v1303
        %v1336 = vmul.f32 %v1304, %v1304
        %v1337 = vmul.f32 %v1305, %v1305
        %v1338 = vmul.f32 %v1306, %v1306
        %v1339 = vmul.f32 %v1307, %v1307
        %v1340 = vmul.f32 %v1308, %v1308
        %v1341 = vmul.f32 %v1309, %v1309
        %v1342 = vmul.f32 %v1310, %v1310
        %v1343 = vmul.f32 %v1311, %v1311
        %v1344 = vmul.f32 %v1312, %v1312
        %v1345 = vmul.f32 %v1313, %v1313
        %v1346 = vmul.f32 %v1314, %v1314
        %v1347 = vmul.f32 %v1315, %v1315
        %v1348 = vmul.f32 %v1316, %v1316
        %v1349 = vmul.f32 %v1317, %v1317
        %v1350 = vmul.f32 %v1318, %v1318
        %v1351 = vmul.f32 %v1319, %v1319
        %v1352 = vmul.f32 %v1320, %v1320
        %v1353 = vmul.f32 %v1321, %v1321
        %v1354 = vmul.f32 %v1322, %v1322
        %v1355 = vadd.f32 %v1177, %v1323
        %v1356 = vadd.f32 %v1178, %v1324
        %v1357 = vadd.f32 %v1179, %v1325
        %v1358 = vadd.f32 %v1180, %v1326
        %v1359 = vadd.f32 %v1181, %v1327
        %v1360 = vadd.f32 %v1182, %v1328
        %v1361 = vadd.f32 %v1183, %v1329
        %v1362 = vadd.f32 %v1184, %v1330
        %v1363 = vadd.f32 %v1185, %v1331
        %v1364 = vadd.f32 %v1186, %v1332
        %v1365 = vadd.f32 %v1187, %v1333
        %v1366 = vadd.f32 %v1188, %v1334
        %v1367 = vadd.f32 %v1189, %v1335
        %v1368 = vadd.f32 %v1190, %v1336
        %v1369 = vadd.f32 %v1191, %v1337
        %v1370 = vadd.f32 %v1192, %v1338
        %v1371 = vadd.f32 %v1193, %v1339
        %v1372 = vadd.f32 %v1194, %v1340
        %v1373 = vadd.f32 %v1195, %v1341
        %v1374 = vadd.f32 %v1196, %v1342
        %v1375 = vadd.f32 %v1197, %v1343
        %v1376 = vadd.f32 %v1198, %v1344
        %v1377 = vadd.f32 %v1199, %v1345
        %v1378 = vadd.f32 %v1200, %v1346
        %v1379 = vadd.f32 %v1201, %v1347
        %v1380 = vadd.f32 %v1202, %v1348
        %v1381 = vadd.f32 %v1203, %v1349
        %v1382 = vadd.f32 %v1204, %v1350
        %v1383 = vadd.f32 %v1205, %v1351
        %v1384 = vadd.f32 %v1206, %v1352
        %v1385 = vadd.f32 %v1207, %v1353
        %v1386 = vadd.f32 %v1208, %v1354
        %v1387 = vlaneseq
        %v1388 = vshrl.u32 %v1387, 7
        %v1389 = vadd.s32 %v1388, 8
        %v1390 = vadd.s32 %v1388, 16
        %v1391 = vadd.s32 %v1388, 24
        %v1392 = vadd.s32 %v1388, 32
        %v1393 = vadd.s32 %v1388, 40
        %v1394 = vadd.s32 %v1388, 48
        %v1395 = vadd.s32 %v1388, 56
        %v1396 = vadd.s32 %v1388, 64
        %v1397 = vadd.s32 %v1388, 72
        %v1398 = vadd.s32 %v1388, 80
        %v1399 = vadd.s32 %v1388, 88
        %v1400 = vadd.s32 %v1388, 96
        %v1401 = vadd.s32 %v1388, 104
        %v1402 = vadd.s32 %v1388, 112
        %v1403 = vadd.s32 %v1388, 120
        %v1404 = vmin.f32 %v1355, %v1359
        %v1405 = vmin.f32 %v1357, %v1361
        %v1406 = vmin.f32 %v1404, %v1363
        %v1407 = vmin.f32 %v1405, %v1365
        %v1408 = vmin.f32 %v1406, %v1367
        %v1409 = vmin.f32 %v1407, %v1369
        %v1410 = vmin.f32 %v1408, %v1371
        %v1411 = vmin.f32 %v1409, %v1373
        %v1412 = vmin.f32 %v1410, %v1375
        %v1413 = vmin.f32 %v1411, %v1377
        %v1414 = vmin.f32 %v1412, %v1379
        %v1415 = vmin.f32 %v1413, %v1381
        %v1416 = vmin.f32 %v1414, %v1383
        %v1417 = vmin.f32 %v1415, %v1385
        %v1418 = vmin.f32 %v1416, %v1417
        %v1419 = vrot.slane %v1418, 4
        %v1420 = vmin.f32 %v1418, %v1419
        %v1421 = vrot.slane %v1420, 2
        %v1422 = vmin.f32 %v1420, %v1421
        %v1423 = vrot.slane %v1422, 1
        %v1424 = vmin.f32 %v1422, %v1423
        %v1425 = vmin.f32 %v1356, %v1360
        %v1426 = vmin.f32 %v1358, %v1362
        %v1427 = vmin.f32 %v1425, %v1364
        %v1428 = vmin.f32 %v1426, %v1366
        %v1429 = vmin.f32 %v1427, %v1368
        %v1430 = vmin.f32 %v1428, %v1370
        %v1431 = vmin.f32 %v1429, %v1372
        %v1432 = vmin.f32 %v1430, %v1374
        %v1433 = vmin.f32 %v1431, %v1376
        %v1434 = vmin.f32 %v1432, %v1378
        %v1435 = vmin.f32 %v1433, %v1380
        %v1436 = vmin.f32 %v1434, %v1382
        %v1437 = vmin.f32 %v1435, %v1384
        %v1438 = vmin.f32 %v1436, %v1386
        %v1439 = vmin.f32 %v1437, %v1438
        %v1440 = vrot.slane %v1439, 4
        %v1441 = vmin.f32 %v1439, %v1440
        %v1442 = vrot.slane %v1441, 2
        %v1443 = vmin.f32 %v1441, %v1442
        %v1444 = vrot.slane %v1443, 1
        %v1445 = vmin.f32 %v1443, %v1444
        %vm1446 = vcmp.le.f32.partialorder %v1355, %v1424
        %vm1447 = vcmp.le.f32.partialorder %v1356, %v1445
        %vm1448 = vcmp.le.f32.partialorder %v1357, %v1424
        %vm1449 = vcmp.le.f32.partialorder %v1358, %v1445
        %vm1450 = vcmp.le.f32.partialorder %v1359, %v1424
        %vm1451 = vcmp.le.f32.partialorder %v1360, %v1445
        %vm1452 = vcmp.le.f32.partialorder %v1361, %v1424
        %vm1453 = vcmp.le.f32.partialorder %v1362, %v1445
        %vm1454 = vcmp.le.f32.partialorder %v1363, %v1424
        %vm1455 = vcmp.le.f32.partialorder %v1364, %v1445
        %vm1456 = vcmp.le.f32.partialorder %v1365, %v1424
        %vm1457 = vcmp.le.f32.partialorder %v1366, %v1445
        %vm1458 = vcmp.le.f32.partialorder %v1367, %v1424
        %vm1459 = vcmp.le.f32.partialorder %v1368, %v1445
        %vm1460 = vcmp.le.f32.partialorder %v1369, %v1424
        %vm1461 = vcmp.le.f32.partialorder %v1370, %v1445
        %vm1462 = vcmp.le.f32.partialorder %v1371, %v1424
        %vm1463 = vcmp.le.f32.partialorder %v1372, %v1445
        %vm1464 = vcmp.le.f32.partialorder %v1373, %v1424
        %vm1465 = vcmp.le.f32.partialorder %v1374, %v1445
        %vm1466 = vcmp.le.f32.partialorder %v1375, %v1424
        %vm1467 = vcmp.le.f32.partialorder %v1376, %v1445
        %vm1468 = vcmp.le.f32.partialorder %v1377, %v1424
        %vm1469 = vcmp.le.f32.partialorder %v1378, %v1445
        %vm1470 = vcmp.le.f32.partialorder %v1379, %v1424
        %vm1471 = vcmp.le.f32.partialorder %v1380, %v1445
        %vm1472 = vcmp.le.f32.partialorder %v1381, %v1424
        %vm1473 = vcmp.le.f32.partialorder %v1382, %v1445
        %vm1474 = vcmp.le.f32.partialorder %v1383, %v1424
        %vm1475 = vcmp.le.f32.partialorder %v1384, %v1445
        %vm1476 = vcmp.le.f32.partialorder %v1385, %v1424
        %vm1477 = vcmp.le.f32.partialorder %v1386, %v1445
        %v1478 = vsel %vm1446, %v1388, 128
        %v1479 = vsel %vm1447, %v1388, 128
        %v1480 = vsel %vm1448, %v1389, 128
        %v1481 = vsel %vm1449, %v1389, 128
        %v1482 = vsel %vm1450, %v1390, 128
        %v1483 = vsel %vm1451, %v1390, 128
        %v1484 = vsel %vm1452, %v1391, 128
        %v1485 = vsel %vm1453, %v1391, 128
        %v1486 = vsel %vm1454, %v1392, 128
        %v1487 = vsel %vm1455, %v1392, 128
        %v1488 = vsel %vm1456, %v1393, 128
        %v1489 = vsel %vm1457, %v1393, 128
        %v1490 = vsel %vm1458, %v1394, 128
        %v1491 = vsel %vm1459, %v1394, 128
        %v1492 = vsel %vm1460, %v1395, 128
        %v1493 = vsel %vm1461, %v1395, 128
        %v1494 = vsel %vm1462, %v1396, 128
        %v1495 = vsel %vm1463, %v1396, 128
        %v1496 = vsel %vm1464, %v1397, 128
        %v1497 = vsel %vm1465, %v1397, 128
        %v1498 = vsel %vm1466, %v1398, 128
        %v1499 = vsel %vm1467, %v1398, 128
        %v1500 = vsel %vm1468, %v1399, 128
        %v1501 = vsel %vm1469, %v1399, 128
        %v1502 = vsel %vm1470, %v1400, 128
        %v1503 = vsel %vm1471, %v1400, 128
        %v1504 = vsel %vm1472, %v1401, 128
        %v1505 = vsel %vm1473, %v1401, 128
        %v1506 = vsel %vm1474, %v1402, 128
        %v1507 = vsel %vm1475, %v1402, 128
        %v1508 = vsel %vm1476, %v1403, 128
        %v1509 = vsel %vm1477, %v1403, 128
        %vm1510 = vcmp.lt.s32.totalorder %v1478, %v1482
        %v1511 = vsel %vm1510, %v1478, %v1482
        %vm1512 = vcmp.lt.s32.totalorder %v1480, %v1484
        %v1513 = vsel %vm1512, %v1480, %v1484
        %vm1514 = vcmp.lt.s32.totalorder %v1511, %v1486
        %v1515 = vsel %vm1514, %v1511, %v1486
        %vm1516 = vcmp.lt.s32.totalorder %v1513, %v1488
        %v1517 = vsel %vm1516, %v1513, %v1488
        %vm1518 = vcmp.lt.s32.totalorder %v1515, %v1490
        %v1519 = vsel %vm1518, %v1515, %v1490
        %vm1520 = vcmp.lt.s32.totalorder %v1517, %v1492
        %v1521 = vsel %vm1520, %v1517, %v1492
        %vm1522 = vcmp.lt.s32.totalorder %v1519, %v1494
        %v1523 = vsel %vm1522, %v1519, %v1494
        %vm1524 = vcmp.lt.s32.totalorder %v1521, %v1496
        %v1525 = vsel %vm1524, %v1521, %v1496
        %vm1526 = vcmp.lt.s32.totalorder %v1523, %v1498
        %v1527 = vsel %vm1526, %v1523, %v1498
        %vm1528 = vcmp.lt.s32.totalorder %v1525, %v1500
        %v1529 = vsel %vm1528, %v1525, %v1500
        %vm1530 = vcmp.lt.s32.totalorder %v1527, %v1502
        %v1531 = vsel %vm1530, %v1527, %v1502
        %vm1532 = vcmp.lt.s32.totalorder %v1529, %v1504
        %v1533 = vsel %vm1532, %v1529, %v1504
        %vm1534 = vcmp.lt.s32.totalorder %v1531, %v1506
        %v1535 = vsel %vm1534, %v1531, %v1506
        %vm1536 = vcmp.lt.s32.totalorder %v1533, %v1508
        %v1537 = vsel %vm1536, %v1533, %v1508
        %vm1538 = vcmp.lt.s32.totalorder %v1535, %v1537
        %v1539 = vsel %vm1538, %v1535, %v1537
        %v1540 = vrot.slane %v1539, 4
        %vm1541 = vcmp.lt.s32.totalorder %v1539, %v1540
        %v1542 = vsel %vm1541, %v1539, %v1540
        %v1543 = vrot.slane %v1542, 2
        %vm1544 = vcmp.lt.s32.totalorder %v1542, %v1543
        %v1545 = vsel %vm1544, %v1542, %v1543
        %v1546 = vrot.slane %v1545, 1
        %vm1547 = vcmp.lt.s32.totalorder %v1545, %v1546
        %v1548 = vsel %vm1547, %v1545, %v1546
        %vm1549 = vcmp.lt.s32.totalorder %v1479, %v1483
        %v1550 = vsel %vm1549, %v1479, %v1483
        %vm1551 = vcmp.lt.s32.totalorder %v1481, %v1485
        %v1552 = vsel %vm1551, %v1481, %v1485
        %vm1553 = vcmp.lt.s32.totalorder %v1550, %v1487
        %v1554 = vsel %vm1553, %v1550, %v1487
        %vm1555 = vcmp.lt.s32.totalorder %v1552, %v1489
        %v1556 = vsel %vm1555, %v1552, %v1489
        %vm1557 = vcmp.lt.s32.totalorder %v1554, %v1491
        %v1558 = vsel %vm1557, %v1554, %v1491
        %vm1559 = vcmp.lt.s32.totalorder %v1556, %v1493
        %v1560 = vsel %vm1559, %v1556, %v1493
        %vm1561 = vcmp.lt.s32.totalorder %v1558, %v1495
        %v1562 = vsel %vm1561, %v1558, %v1495
        %vm1563 = vcmp.lt.s32.totalorder %v1560, %v1497
        %v1564 = vsel %vm1563, %v1560, %v1497
        %vm1565 = vcmp.lt.s32.totalorder %v1562, %v1499
        %v1566 = vsel %vm1565, %v1562, %v1499
        %vm1567 = vcmp.lt.s32.totalorder %v1564, %v1501
        %v1568 = vsel %vm1567, %v1564, %v1501
        %vm1569 = vcmp.lt.s32.totalorder %v1566, %v1503
        %v1570 = vsel %vm1569, %v1566, %v1503
        %vm1571 = vcmp.lt.s32.totalorder %v1568, %v1505
        %v1572 = vsel %vm1571, %v1568, %v1505
        %vm1573 = vcmp.lt.s32.totalorder %v1570, %v1507
        %v1574 = vsel %vm1573, %v1570, %v1507
        %vm1575 = vcmp.lt.s32.totalorder %v1572, %v1509
        %v1576 = vsel %vm1575, %v1572, %v1509
        %vm1577 = vcmp.lt.s32.totalorder %v1574, %v1576
        %v1578 = vsel %vm1577, %v1574, %v1576
        %v1579 = vrot.slane %v1578, 4
        %vm1580 = vcmp.lt.s32.totalorder %v1578, %v1579
        %v1581 = vsel %vm1580, %v1578, %v1579
        %v1582 = vrot.slane %v1581, 2
        %vm1583 = vcmp.lt.s32.totalorder %v1581, %v1582
        %v1584 = vsel %vm1583, %v1581, %v1582
        %v1585 = vrot.slane %v1584, 1
        %vm1586 = vcmp.lt.s32.totalorder %v1584, %v1585
        %v1587 = vsel %vm1586, %v1584, %v1585
        %vm1588 = vcmp.eq.s32.totalorder %v1388, %v1548
        %vm1589 = vcmp.eq.s32.totalorder %v1388, %v1587
        %vm1590 = vcmp.eq.s32.totalorder %v1389, %v1548
        %vm1591 = vcmp.eq.s32.totalorder %v1389, %v1587
        %vm1592 = vcmp.eq.s32.totalorder %v1390, %v1548
        %vm1593 = vcmp.eq.s32.totalorder %v1390, %v1587
        %vm1594 = vcmp.eq.s32.totalorder %v1391, %v1548
        %vm1595 = vcmp.eq.s32.totalorder %v1391, %v1587
        %vm1596 = vcmp.eq.s32.totalorder %v1392, %v1548
        %vm1597 = vcmp.eq.s32.totalorder %v1392, %v1587
        %vm1598 = vcmp.eq.s32.totalorder %v1393, %v1548
        %vm1599 = vcmp.eq.s32.totalorder %v1393, %v1587
        %vm1600 = vcmp.eq.s32.totalorder %v1394, %v1548
        %vm1601 = vcmp.eq.s32.totalorder %v1394, %v1587
        %vm1602 = vcmp.eq.s32.totalorder %v1395, %v1548
        %vm1603 = vcmp.eq.s32.totalorder %v1395, %v1587
        %vm1604 = vcmp.eq.s32.totalorder %v1396, %v1548
        %vm1605 = vcmp.eq.s32.totalorder %v1396, %v1587
        %vm1606 = vcmp.eq.s32.totalorder %v1397, %v1548
        %vm1607 = vcmp.eq.s32.totalorder %v1397, %v1587
        %vm1608 = vcmp.eq.s32.totalorder %v1398, %v1548
        %vm1609 = vcmp.eq.s32.totalorder %v1398, %v1587
        %vm1610 = vcmp.eq.s32.totalorder %v1399, %v1548
        %vm1611 = vcmp.eq.s32.totalorder %v1399, %v1587
        %vm1612 = vcmp.eq.s32.totalorder %v1400, %v1548
        %vm1613 = vcmp.eq.s32.totalorder %v1400, %v1587
        %vm1614 = vcmp.eq.s32.totalorder %v1401, %v1548
        %vm1615 = vcmp.eq.s32.totalorder %v1401, %v1587
        %vm1616 = vcmp.eq.s32.totalorder %v1402, %v1548
        %vm1617 = vcmp.eq.s32.totalorder %v1402, %v1587
        %vm1618 = vcmp.eq.s32.totalorder %v1403, %v1548
        %vm1619 = vcmp.eq.s32.totalorder %v1403, %v1587
        %v1620 = vadd.f32 %v1424, 1e-08
        %v1621 = vadd.f32 %v1445, 1e-08
        %v1622 = vrcp.pop %v1620
        %v1623 = vmul.f32 1.0, %v1622
        %v1624 = vrcp.pop %v1621
        %v1625 = vmul.f32 1.0, %v1624
        %v1626 = vsel %vm1588, %v1623, 0.0
        %v1627 = vsel %vm1589, %v1625, 0.0
        %v1628 = vsel %vm1590, %v1623, 0.0
        %v1629 = vsel %vm1591, %v1625, 0.0
        %v1630 = vsel %vm1592, %v1623, 0.0
        %v1631 = vsel %vm1593, %v1625, 0.0
        %v1632 = vsel %vm1594, %v1623, 0.0
        %v1633 = vsel %vm1595, %v1625, 0.0
        %v1634 = vsel %vm1596, %v1623, 0.0
        %v1635 = vsel %vm1597, %v1625, 0.0
        %v1636 = vsel %vm1598, %v1623, 0.0
        %v1637 = vsel %vm1599, %v1625, 0.0
        %v1638 = vsel %vm1600, %v1623, 0.0
        %v1639 = vsel %vm1601, %v1625, 0.0
        %v1640 = vsel %vm1602, %v1623, 0.0
        %v1641 = vsel %vm1603, %v1625, 0.0
        %v1642 = vsel %vm1604, %v1623, 0.0
        %v1643 = vsel %vm1605, %v1625, 0.0
        %v1644 = vsel %vm1606, %v1623, 0.0
        %v1645 = vsel %vm1607, %v1625, 0.0
        %v1646 = vsel %vm1608, %v1623, 0.0
        %v1647 = vsel %vm1609, %v1625, 0.0
        %v1648 = vsel %vm1610, %v1623, 0.0
        %v1649 = vsel %vm1611, %v1625, 0.0
        %v1650 = vsel %vm1612, %v1623, 0.0
        %v1651 = vsel %vm1613, %v1625, 0.0
        %v1652 = vsel %vm1614, %v1623, 0.0
        %v1653 = vsel %vm1615, %v1625, 0.0
        %v1654 = vsel %vm1616, %v1623, 0.0
        %v1655 = vsel %vm1617, %v1625, 0.0
        %v1656 = vsel %vm1618, %v1623, 0.0
        %v1657 = vsel %vm1619, %v1625, 0.0
        %v1658 = vadd.f32 %v1626, 0.0
        %v1659 = vadd.f32 %v1627, 0.0
        %v1660 = vadd.f32 %v1628, 0.0
        %v1661 = vadd.f32 %v1629, 0.0
        %v1662 = vadd.f32 %v1630, 0.0
        %v1663 = vadd.f32 %v1631, 0.0
        %v1664 = vadd.f32 %v1632, 0.0
        %v1665 = vadd.f32 %v1633, 0.0
        %v1666 = vadd.f32 %v1634, 0.0
        %v1667 = vadd.f32 %v1635, 0.0
        %v1668 = vadd.f32 %v1636, 0.0
        %v1669 = vadd.f32 %v1637, 0.0
        %v1670 = vadd.f32 %v1638, 0.0
        %v1671 = vadd.f32 %v1639, 0.0
        %v1672 = vadd.f32 %v1640, 0.0
        %v1673 = vadd.f32 %v1641, 0.0
        %v1674 = vadd.f32 %v1642, 0.0
        %v1675 = vadd.f32 %v1643, 0.0
        %v1676 = vadd.f32 %v1644, 0.0
        %v1677 = vadd.f32 %v1645, 0.0
        %v1678 = vadd.f32 %v1646, 0.0
        %v1679 = vadd.f32 %v1647, 0.0
        %v1680 = vadd.f32 %v1648, 0.0
        %v1681 = vadd.f32 %v1649, 0.0
        %v1682 = vadd.f32 %v1650, 0.0
        %v1683 = vadd.f32 %v1651, 0.0
        %v1684 = vadd.f32 %v1652, 0.0
        %v1685 = vadd.f32 %v1653, 0.0
        %v1686 = vadd.f32 %v1654, 0.0
        %v1687 = vadd.f32 %v1655, 0.0
        %v1688 = vadd.f32 %v1656, 0.0
        %v1689 = vadd.f32 %v1657, 0.0
        %v1690 = vadd.f32 %v1623, 0.0
        %v1691 = vadd.f32 %v1625, 0.0
        %v1692 = vsel %vm1588, 1e+30, %v1355
        %v1693 = vsel %vm1589, 1e+30, %v1356
        %v1694 = vsel %vm1590, 1e+30, %v1357
        %v1695 = vsel %vm1591, 1e+30, %v1358
        %v1696 = vsel %vm1592, 1e+30, %v1359
        %v1697 = vsel %vm1593, 1e+30, %v1360
        %v1698 = vsel %vm1594, 1e+30, %v1361
        %v1699 = vsel %vm1595, 1e+30, %v1362
        %v1700 = vsel %vm1596, 1e+30, %v1363
        %v1701 = vsel %vm1597, 1e+30, %v1364
        %v1702 = vsel %vm1598, 1e+30, %v1365
        %v1703 = vsel %vm1599, 1e+30, %v1366
        %v1704 = vsel %vm1600, 1e+30, %v1367
        %v1705 = vsel %vm1601, 1e+30, %v1368
        %v1706 = vsel %vm1602, 1e+30, %v1369
        %v1707 = vsel %vm1603, 1e+30, %v1370
        %v1708 = vsel %vm1604, 1e+30, %v1371
        %v1709 = vsel %vm1605, 1e+30, %v1372
        %v1710 = vsel %vm1606, 1e+30, %v1373
        %v1711 = vsel %vm1607, 1e+30, %v1374
        %v1712 = vsel %vm1608, 1e+30, %v1375
        %v1713 = vsel %vm1609, 1e+30, %v1376
        %v1714 = vsel %vm1610, 1e+30, %v1377
        %v1715 = vsel %vm1611, 1e+30, %v1378
        %v1716 = vsel %vm1612, 1e+30, %v1379
        %v1717 = vsel %vm1613, 1e+30, %v1380
        %v1718 = vsel %vm1614, 1e+30, %v1381
        %v1719 = vsel %vm1615, 1e+30, %v1382
        %v1720 = vsel %vm1616, 1e+30, %v1383
        %v1721 = vsel %vm1617, 1e+30, %v1384
        %v1722 = vsel %vm1618, 1e+30, %v1385
        %v1723 = vsel %vm1619, 1e+30, %v1386
        %v1724 = vmin.f32 %v1692, %v1696
        %v1725 = vmin.f32 %v1694, %v1698
        %v1726 = vmin.f32 %v1724, %v1700
        %v1727 = vmin.f32 %v1725, %v1702
        %v1728 = vmin.f32 %v1726, %v1704
        %v1729 = vmin.f32 %v1727, %v1706
        %v1730 = vmin.f32 %v1728, %v1708
        %v1731 = vmin.f32 %v1729, %v1710
        %v1732 = vmin.f32 %v1730, %v1712
        %v1733 = vmin.f32 %v1731, %v1714
        %v1734 = vmin.f32 %v1732, %v1716
        %v1735 = vmin.f32 %v1733, %v1718
        %v1736 = vmin.f32 %v1734, %v1720
        %v1737 = vmin.f32 %v1735, %v1722
        %v1738 = vmin.f32 %v1736, %v1737
        %v1739 = vrot.slane %v1738, 4
        %v1740 = vmin.f32 %v1738, %v1739
        %v1741 = vrot.slane %v1740, 2
        %v1742 = vmin.f32 %v1740, %v1741
        %v1743 = vrot.slane %v1742, 1
        %v1744 = vmin.f32 %v1742, %v1743
        %v1745 = vmin.f32 %v1693, %v1697
        %v1746 = vmin.f32 %v1695, %v1699
        %v1747 = vmin.f32 %v1745, %v1701
        %v1748 = vmin.f32 %v1746, %v1703
        %v1749 = vmin.f32 %v1747, %v1705
        %v1750 = vmin.f32 %v1748, %v1707
        %v1751 = vmin.f32 %v1749, %v1709
        %v1752 = vmin.f32 %v1750, %v1711
        %v1753 = vmin.f32 %v1751, %v1713
        %v1754 = vmin.f32 %v1752, %v1715
        %v1755 = vmin.f32 %v1753, %v1717
        %v1756 = vmin.f32 %v1754, %v1719
        %v1757 = vmin.f32 %v1755, %v1721
        %v1758 = vmin.f32 %v1756, %v1723
        %v1759 = vmin.f32 %v1757, %v1758
        %v1760 = vrot.slane %v1759, 4
        %v1761 = vmin.f32 %v1759, %v1760
        %v1762 = vrot.slane %v1761, 2
        %v1763 = vmin.f32 %v1761, %v1762
        %v1764 = vrot.slane %v1763, 1
        %v1765 = vmin.f32 %v1763, %v1764
        %vm1766 = vcmp.le.f32.partialorder %v1692, %v1744
        %vm1767 = vcmp.le.f32.partialorder %v1693, %v1765
        %vm1768 = vcmp.le.f32.partialorder %v1694, %v1744
        %vm1769 = vcmp.le.f32.partialorder %v1695, %v1765
        %vm1770 = vcmp.le.f32.partialorder %v1696, %v1744
        %vm1771 = vcmp.le.f32.partialorder %v1697, %v1765
        %vm1772 = vcmp.le.f32.partialorder %v1698, %v1744
        %vm1773 = vcmp.le.f32.partialorder %v1699, %v1765
        %vm1774 = vcmp.le.f32.partialorder %v1700, %v1744
        %vm1775 = vcmp.le.f32.partialorder %v1701, %v1765
        %vm1776 = vcmp.le.f32.partialorder %v1702, %v1744
        %vm1777 = vcmp.le.f32.partialorder %v1703, %v1765
        %vm1778 = vcmp.le.f32.partialorder %v1704, %v1744
        %vm1779 = vcmp.le.f32.partialorder %v1705, %v1765
        %vm1780 = vcmp.le.f32.partialorder %v1706, %v1744
        %vm1781 = vcmp.le.f32.partialorder %v1707, %v1765
        %vm1782 = vcmp.le.f32.partialorder %v1708, %v1744
        %vm1783 = vcmp.le.f32.partialorder %v1709, %v1765
        %vm1784 = vcmp.le.f32.partialorder %v1710, %v1744
        %vm1785 = vcmp.le.f32.partialorder %v1711, %v1765
        %vm1786 = vcmp.le.f32.partialorder %v1712, %v1744
        %vm1787 = vcmp.le.f32.partialorder %v1713, %v1765
        %vm1788 = vcmp.le.f32.partialorder %v1714, %v1744
        %vm1789 = vcmp.le.f32.partialorder %v1715, %v1765
        %vm1790 = vcmp.le.f32.partialorder %v1716, %v1744
        %vm1791 = vcmp.le.f32.partialorder %v1717, %v1765
        %vm1792 = vcmp.le.f32.partialorder %v1718, %v1744
        %vm1793 = vcmp.le.f32.partialorder %v1719, %v1765
        %vm1794 = vcmp.le.f32.partialorder %v1720, %v1744
        %vm1795 = vcmp.le.f32.partialorder %v1721, %v1765
        %vm1796 = vcmp.le.f32.partialorder %v1722, %v1744
        %vm1797 = vcmp.le.f32.partialorder %v1723, %v1765
        %v1798 = vsel %vm1766, %v1388, 128
        %v1799 = vsel %vm1767, %v1388, 128
        %v1800 = vsel %vm1768, %v1389, 128
        %v1801 = vsel %vm1769, %v1389, 128
        %v1802 = vsel %vm1770, %v1390, 128
        %v1803 = vsel %vm1771, %v1390, 128
        %v1804 = vsel %vm1772, %v1391, 128
        %v1805 = vsel %vm1773, %v1391, 128
        %v1806 = vsel %vm1774, %v1392, 128
        %v1807 = vsel %vm1775, %v1392, 128
        %v1808 = vsel %vm1776, %v1393, 128
        %v1809 = vsel %vm1777, %v1393, 128
        %v1810 = vsel %vm1778, %v1394, 128
        %v1811 = vsel %vm1779, %v1394, 128
        %v1812 = vsel %vm1780, %v1395, 128
        %v1813 = vsel %vm1781, %v1395, 128
        %v1814 = vsel %vm1782, %v1396, 128
        %v1815 = vsel %vm1783, %v1396, 128
        %v1816 = vsel %vm1784, %v1397, 128
        %v1817 = vsel %vm1785, %v1397, 128
        %v1818 = vsel %vm1786, %v1398, 128
        %v1819 = vsel %vm1787, %v1398, 128
        %v1820 = vsel %vm1788, %v1399, 128
        %v1821 = vsel %vm1789, %v1399, 128
        %v1822 = vsel %vm1790, %v1400, 128
        %v1823 = vsel %vm1791, %v1400, 128
        %v1824 = vsel %vm1792, %v1401, 128
        %v1825 = vsel %vm1793, %v1401, 128
        %v1826 = vsel %vm1794, %v1402, 128
        %v1827 = vsel %vm1795, %v1402, 128
        %v1828 = vsel %vm1796, %v1403, 128
        %v1829 = vsel %vm1797, %v1403, 128
        %vm1830 = vcmp.lt.s32.totalorder %v1798, %v1802
        %v1831 = vsel %vm1830, %v1798, %v1802
        %vm1832 = vcmp.lt.s32.totalorder %v1800, %v1804
        %v1833 = vsel %vm1832, %v1800, %v1804
        %vm1834 = vcmp.lt.s32.totalorder %v1831, %v1806
        %v1835 = vsel %vm1834, %v1831, %v1806
        %vm1836 = vcmp.lt.s32.totalorder %v1833, %v1808
        %v1837 = vsel %vm1836, %v1833, %v1808
        %vm1838 = vcmp.lt.s32.totalorder %v1835, %v1810
        %v1839 = vsel %vm1838, %v1835, %v1810
        %vm1840 = vcmp.lt.s32.totalorder %v1837, %v1812
        %v1841 = vsel %vm1840, %v1837, %v1812
        %vm1842 = vcmp.lt.s32.totalorder %v1839, %v1814
        %v1843 = vsel %vm1842, %v1839, %v1814
        %vm1844 = vcmp.lt.s32.totalorder %v1841, %v1816
        %v1845 = vsel %vm1844, %v1841, %v1816
        %vm1846 = vcmp.lt.s32.totalorder %v1843, %v1818
        %v1847 = vsel %vm1846, %v1843, %v1818
        %vm1848 = vcmp.lt.s32.totalorder %v1845, %v1820
        %v1849 = vsel %vm1848, %v1845, %v1820
        %vm1850 = vcmp.lt.s32.totalorder %v1847, %v1822
        %v1851 = vsel %vm1850, %v1847, %v1822
        %vm1852 = vcmp.lt.s32.totalorder %v1849, %v1824
        %v1853 = vsel %vm1852, %v1849, %v1824
        %vm1854 = vcmp.lt.s32.totalorder %v1851, %v1826
        %v1855 = vsel %vm1854, %v1851, %v1826
        %vm1856 = vcmp.lt.s32.totalorder %v1853, %v1828
        %v1857 = vsel %vm1856, %v1853, %v1828
        %vm1858 = vcmp.lt.s32.totalorder %v1855, %v1857
        %v1859 = vsel %vm1858, %v1855, %v1857
        %v1860 = vrot.slane %v1859, 4
        %vm1861 = vcmp.lt.s32.totalorder %v1859, %v1860
        %v1862 = vsel %vm1861, %v1859, %v1860
        %v1863 = vrot.slane %v1862, 2
        %vm1864 = vcmp.lt.s32.totalorder %v1862, %v1863
        %v1865 = vsel %vm1864, %v1862, %v1863
        %v1866 = vrot.slane %v1865, 1
        %vm1867 = vcmp.lt.s32.totalorder %v1865, %v1866
        %v1868 = vsel %vm1867, %v1865, %v1866
        %vm1869 = vcmp.lt.s32.totalorder %v1799, %v1803
        %v1870 = vsel %vm1869, %v1799, %v1803
        %vm1871 = vcmp.lt.s32.totalorder %v1801, %v1805
        %v1872 = vsel %vm1871, %v1801, %v1805
        %vm1873 = vcmp.lt.s32.totalorder %v1870, %v1807
        %v1874 = vsel %vm1873, %v1870, %v1807
        %vm1875 = vcmp.lt.s32.totalorder %v1872, %v1809
        %v1876 = vsel %vm1875, %v1872, %v1809
        %vm1877 = vcmp.lt.s32.totalorder %v1874, %v1811
        %v1878 = vsel %vm1877, %v1874, %v1811
        %vm1879 = vcmp.lt.s32.totalorder %v1876, %v1813
        %v1880 = vsel %vm1879, %v1876, %v1813
        %vm1881 = vcmp.lt.s32.totalorder %v1878, %v1815
        %v1882 = vsel %vm1881, %v1878, %v1815
        %vm1883 = vcmp.lt.s32.totalorder %v1880, %v1817
        %v1884 = vsel %vm1883, %v1880, %v1817
        %vm1885 = vcmp.lt.s32.totalorder %v1882, %v1819
        %v1886 = vsel %vm1885, %v1882, %v1819
        %vm1887 = vcmp.lt.s32.totalorder %v1884, %v1821
        %v1888 = vsel %vm1887, %v1884, %v1821
        %vm1889 = vcmp.lt.s32.totalorder %v1886, %v1823
        %v1890 = vsel %vm1889, %v1886, %v1823
        %vm1891 = vcmp.lt.s32.totalorder %v1888, %v1825
        %v1892 = vsel %vm1891, %v1888, %v1825
        %vm1893 = vcmp.lt.s32.totalorder %v1890, %v1827
        %v1894 = vsel %vm1893, %v1890, %v1827
        %vm1895 = vcmp.lt.s32.totalorder %v1892, %v1829
        %v1896 = vsel %vm1895, %v1892, %v1829
        %vm1897 = vcmp.lt.s32.totalorder %v1894, %v1896
        %v1898 = vsel %vm1897, %v1894, %v1896
        %v1899 = vrot.slane %v1898, 4
        %vm1900 = vcmp.lt.s32.totalorder %v1898, %v1899
        %v1901 = vsel %vm1900, %v1898, %v1899
        %v1902 = vrot.slane %v1901, 2
        %vm1903 = vcmp.lt.s32.totalorder %v1901, %v1902
        %v1904 = vsel %vm1903, %v1901, %v1902
        %v1905 = vrot.slane %v1904, 1
        %vm1906 = vcmp.lt.s32.totalorder %v1904, %v1905
        %v1907 = vsel %vm1906, %v1904, %v1905
        %vm1908 = vcmp.eq.s32.totalorder %v1388, %v1868
        %vm1909 = vcmp.eq.s32.totalorder %v1388, %v1907
        %vm1910 = vcmp.eq.s32.totalorder %v1389, %v1868
        %vm1911 = vcmp.eq.s32.totalorder %v1389, %v1907
        %vm1912 = vcmp.eq.s32.totalorder %v1390, %v1868
        %vm1913 = vcmp.eq.s32.totalorder %v1390, %v1907
        %vm1914 = vcmp.eq.s32.totalorder %v1391, %v1868
        %vm1915 = vcmp.eq.s32.totalorder %v1391, %v1907
        %vm1916 = vcmp.eq.s32.totalorder %v1392, %v1868
        %vm1917 = vcmp.eq.s32.totalorder %v1392, %v1907
        %vm1918 = vcmp.eq.s32.totalorder %v1393, %v1868
        %vm1919 = vcmp.eq.s32.totalorder %v1393, %v1907
        %vm1920 = vcmp.eq.s32.totalorder %v1394, %v1868
        %vm1921 = vcmp.eq.s32.totalorder %v1394, %v1907
        %vm1922 = vcmp.eq.s32.totalorder %v1395, %v1868
        %vm1923 = vcmp.eq.s32.totalorder %v1395, %v1907
        %vm1924 = vcmp.eq.s32.totalorder %v1396, %v1868
        %vm1925 = vcmp.eq.s32.totalorder %v1396, %v1907
        %vm1926 = vcmp.eq.s32.totalorder %v1397, %v1868
        %vm1927 = vcmp.eq.s32.totalorder %v1397, %v1907
        %vm1928 = vcmp.eq.s32.totalorder %v1398, %v1868
        %vm1929 = vcmp.eq.s32.totalorder %v1398, %v1907
        %vm1930 = vcmp.eq.s32.totalorder %v1399, %v1868
        %vm1931 = vcmp.eq.s32.totalorder %v1399, %v1907
        %vm1932 = vcmp.eq.s32.totalorder %v1400, %v1868
        %vm1933 = vcmp.eq.s32.totalorder %v1400, %v1907
        %vm1934 = vcmp.eq.s32.totalorder %v1401, %v1868
        %vm1935 = vcmp.eq.s32.totalorder %v1401, %v1907
        %vm1936 = vcmp.eq.s32.totalorder %v1402, %v1868
        %vm1937 = vcmp.eq.s32.totalorder %v1402, %v1907
        %vm1938 = vcmp.eq.s32.totalorder %v1403, %v1868
        %vm1939 = vcmp.eq.s32.totalorder %v1403, %v1907
        %v1940 = vadd.f32 %v1744, 1e-08
        %v1941 = vadd.f32 %v1765, 1e-08
        %v1942 = vrcp.pop %v1940
        %v1943 = vmul.f32 1.0, %v1942
        %v1944 = vrcp.pop %v1941
        %v1945 = vmul.f32 1.0, %v1944
        %v1946 = vsel %vm1908, %v1943, 0.0
        %v1947 = vsel %vm1909, %v1945, 0.0
        %v1948 = vsel %vm1910, %v1943, 0.0
        %v1949 = vsel %vm1911, %v1945, 0.0
        %v1950 = vsel %vm1912, %v1943, 0.0
        %v1951 = vsel %vm1913, %v1945, 0.0
        %v1952 = vsel %vm1914, %v1943, 0.0
        %v1953 = vsel %vm1915, %v1945, 0.0
        %v1954 = vsel %vm1916, %v1943, 0.0
        %v1955 = vsel %vm1917, %v1945, 0.0
        %v1956 = vsel %vm1918, %v1943, 0.0
        %v1957 = vsel %vm1919, %v1945, 0.0
        %v1958 = vsel %vm1920, %v1943, 0.0
        %v1959 = vsel %vm1921, %v1945, 0.0
        %v1960 = vsel %vm1922, %v1943, 0.0
        %v1961 = vsel %vm1923, %v1945, 0.0
        %v1962 = vsel %vm1924, %v1943, 0.0
        %v1963 = vsel %vm1925, %v1945, 0.0
        %v1964 = vsel %vm1926, %v1943, 0.0
        %v1965 = vsel %vm1927, %v1945, 0.0
        %v1966 = vsel %vm1928, %v1943, 0.0
        %v1967 = vsel %vm1929, %v1945, 0.0
        %v1968 = vsel %vm1930, %v1943, 0.0
        %v1969 = vsel %vm1931, %v1945, 0.0
        %v1970 = vsel %vm1932, %v1943, 0.0
        %v1971 = vsel %vm1933, %v1945, 0.0
        %v1972 = vsel %vm1934, %v1943, 0.0
        %v1973 = vsel %vm1935, %v1945, 0.0
        %v1974 = vsel %vm1936, %v1943, 0.0
        %v1975 = vsel %vm1937, %v1945, 0.0
        %v1976 = vsel %vm1938, %v1943, 0.0
        %v1977 = vsel %vm1939, %v1945, 0.0
        %v1978 = vadd.f32 %v1658, %v1946
        %v1979 = vadd.f32 %v1659, %v1947
        %v1980 = vadd.f32 %v1660, %v1948
        %v1981 = vadd.f32 %v1661, %v1949
        %v1982 = vadd.f32 %v1662, %v1950
        %v1983 = vadd.f32 %v1663, %v1951
        %v1984 = vadd.f32 %v1664, %v1952
        %v1985 = vadd.f32 %v1665, %v1953
        %v1986 = vadd.f32 %v1666, %v1954
        %v1987 = vadd.f32 %v1667, %v1955
        %v1988 = vadd.f32 %v1668, %v1956
        %v1989 = vadd.f32 %v1669, %v1957
        %v1990 = vadd.f32 %v1670, %v1958
        %v1991 = vadd.f32 %v1671, %v1959
        %v1992 = vadd.f32 %v1672, %v1960
        %v1993 = vadd.f32 %v1673, %v1961
        %v1994 = vadd.f32 %v1674, %v1962
        %v1995 = vadd.f32 %v1675, %v1963
        %v1996 = vadd.f32 %v1676, %v1964
        %v1997 = vadd.f32 %v1677, %v1965
        %v1998 = vadd.f32 %v1678, %v1966
        %v1999 = vadd.f32 %v1679, %v1967
        %v2000 = vadd.f32 %v1680, %v1968
        %v2001 = vadd.f32 %v1681, %v1969
        %v2002 = vadd.f32 %v1682, %v1970
        %v2003 = vadd.f32 %v1683, %v1971
        %v2004 = vadd.f32 %v1684, %v1972
        %v2005 = vadd.f32 %v1685, %v1973
        %v2006 = vadd.f32 %v1686, %v1974
        %v2007 = vadd.f32 %v1687, %v1975
        %v2008 = vadd.f32 %v1688, %v1976
        %v2009 = vadd.f32 %v1689, %v1977
        %v2010 = vadd.f32 %v1690, %v1943
        %v2011 = vadd.f32 %v1691, %v1945
        %v2012 = vsel %vm1908, 1e+30, %v1692
        %v2013 = vsel %vm1909, 1e+30, %v1693
        %v2014 = vsel %vm1910, 1e+30, %v1694
        %v2015 = vsel %vm1911, 1e+30, %v1695
        %v2016 = vsel %vm1912, 1e+30, %v1696
        %v2017 = vsel %vm1913, 1e+30, %v1697
        %v2018 = vsel %vm1914, 1e+30, %v1698
        %v2019 = vsel %vm1915, 1e+30, %v1699
        %v2020 = vsel %vm1916, 1e+30, %v1700
        %v2021 = vsel %vm1917, 1e+30, %v1701
        %v2022 = vsel %vm1918, 1e+30, %v1702
        %v2023 = vsel %vm1919, 1e+30, %v1703
        %v2024 = vsel %vm1920, 1e+30, %v1704
        %v2025 = vsel %vm1921, 1e+30, %v1705
        %v2026 = vsel %vm1922, 1e+30, %v1706
        %v2027 = vsel %vm1923, 1e+30, %v1707
        %v2028 = vsel %vm1924, 1e+30, %v1708
        %v2029 = vsel %vm1925, 1e+30, %v1709
        %v2030 = vsel %vm1926, 1e+30, %v1710
        %v2031 = vsel %vm1927, 1e+30, %v1711
        %v2032 = vsel %vm1928, 1e+30, %v1712
        %v2033 = vsel %vm1929, 1e+30, %v1713
        %v2034 = vsel %vm1930, 1e+30, %v1714
        %v2035 = vsel %vm1931, 1e+30, %v1715
        %v2036 = vsel %vm1932, 1e+30, %v1716
        %v2037 = vsel %vm1933, 1e+30, %v1717
        %v2038 = vsel %vm1934, 1e+30, %v1718
        %v2039 = vsel %vm1935, 1e+30, %v1719
        %v2040 = vsel %vm1936, 1e+30, %v1720
        %v2041 = vsel %vm1937, 1e+30, %v1721
        %v2042 = vsel %vm1938, 1e+30, %v1722
        %v2043 = vsel %vm1939, 1e+30, %v1723
        %v2044 = vmin.f32 %v2012, %v2016
        %v2045 = vmin.f32 %v2014, %v2018
        %v2046 = vmin.f32 %v2044, %v2020
        %v2047 = vmin.f32 %v2045, %v2022
        %v2048 = vmin.f32 %v2046, %v2024
        %v2049 = vmin.f32 %v2047, %v2026
        %v2050 = vmin.f32 %v2048, %v2028
        %v2051 = vmin.f32 %v2049, %v2030
        %v2052 = vmin.f32 %v2050, %v2032
        %v2053 = vmin.f32 %v2051, %v2034
        %v2054 = vmin.f32 %v2052, %v2036
        %v2055 = vmin.f32 %v2053, %v2038
        %v2056 = vmin.f32 %v2054, %v2040
        %v2057 = vmin.f32 %v2055, %v2042
        %v2058 = vmin.f32 %v2056, %v2057
        %v2059 = vrot.slane %v2058, 4
        %v2060 = vmin.f32 %v2058, %v2059
        %v2061 = vrot.slane %v2060, 2
        %v2062 = vmin.f32 %v2060, %v2061
        %v2063 = vrot.slane %v2062, 1
        %v2064 = vmin.f32 %v2062, %v2063
        %v2065 = vmin.f32 %v2013, %v2017
        %v2066 = vmin.f32 %v2015, %v2019
        %v2067 = vmin.f32 %v2065, %v2021
        %v2068 = vmin.f32 %v2066, %v2023
        %v2069 = vmin.f32 %v2067, %v2025
        %v2070 = vmin.f32 %v2068, %v2027
        %v2071 = vmin.f32 %v2069, %v2029
        %v2072 = vmin.f32 %v2070, %v2031
        %v2073 = vmin.f32 %v2071, %v2033
        %v2074 = vmin.f32 %v2072, %v2035
        %v2075 = vmin.f32 %v2073, %v2037
        %v2076 = vmin.f32 %v2074, %v2039
        %v2077 = vmin.f32 %v2075, %v2041
        %v2078 = vmin.f32 %v2076, %v2043
        %v2079 = vmin.f32 %v2077, %v2078
        %v2080 = vrot.slane %v2079, 4
        %v2081 = vmin.f32 %v2079, %v2080
        %v2082 = vrot.slane %v2081, 2
        %v2083 = vmin.f32 %v2081, %v2082
        %v2084 = vrot.slane %v2083, 1
        %v2085 = vmin.f32 %v2083, %v2084
        %vm2086 = vcmp.le.f32.partialorder %v2012, %v2064
        %vm2087 = vcmp.le.f32.partialorder %v2013, %v2085
        %vm2088 = vcmp.le.f32.partialorder %v2014, %v2064
        %vm2089 = vcmp.le.f32.partialorder %v2015, %v2085
        %vm2090 = vcmp.le.f32.partialorder %v2016, %v2064
        %vm2091 = vcmp.le.f32.partialorder %v2017, %v2085
        %vm2092 = vcmp.le.f32.partialorder %v2018, %v2064
        %vm2093 = vcmp.le.f32.partialorder %v2019, %v2085
        %vm2094 = vcmp.le.f32.partialorder %v2020, %v2064
        %vm2095 = vcmp.le.f32.partialorder %v2021, %v2085
        %vm2096 = vcmp.le.f32.partialorder %v2022, %v2064
        %vm2097 = vcmp.le.f32.partialorder %v2023, %v2085
        %vm2098 = vcmp.le.f32.partialorder %v2024, %v2064
        %vm2099 = vcmp.le.f32.partialorder %v2025, %v2085
        %vm2100 = vcmp.le.f32.partialorder %v2026, %v2064
        %vm2101 = vcmp.le.f32.partialorder %v2027, %v2085
        %vm2102 = vcmp.le.f32.partialorder %v2028, %v2064
        %vm2103 = vcmp.le.f32.partialorder %v2029, %v2085
        %vm2104 = vcmp.le.f32.partialorder %v2030, %v2064
        %vm2105 = vcmp.le.f32.partialorder %v2031, %v2085
        %vm2106 = vcmp.le.f32.partialorder %v2032, %v2064
        %vm2107 = vcmp.le.f32.partialorder %v2033, %v2085
        %vm2108 = vcmp.le.f32.partialorder %v2034, %v2064
        %vm2109 = vcmp.le.f32.partialorder %v2035, %v2085
        %vm2110 = vcmp.le.f32.partialorder %v2036, %v2064
        %vm2111 = vcmp.le.f32.partialorder %v2037, %v2085
        %vm2112 = vcmp.le.f32.partialorder %v2038, %v2064
        %vm2113 = vcmp.le.f32.partialorder %v2039, %v2085
        %vm2114 = vcmp.le.f32.partialorder %v2040, %v2064
        %vm2115 = vcmp.le.f32.partialorder %v2041, %v2085
        %vm2116 = vcmp.le.f32.partialorder %v2042, %v2064
        %vm2117 = vcmp.le.f32.partialorder %v2043, %v2085
        %v2118 = vsel %vm2086, %v1388, 128
        %v2119 = vsel %vm2087, %v1388, 128
        %v2120 = vsel %vm2088, %v1389, 128
        %v2121 = vsel %vm2089, %v1389, 128
        %v2122 = vsel %vm2090, %v1390, 128
        %v2123 = vsel %vm2091, %v1390, 128
        %v2124 = vsel %vm2092, %v1391, 128
        %v2125 = vsel %vm2093, %v1391, 128
        %v2126 = vsel %vm2094, %v1392, 128
        %v2127 = vsel %vm2095, %v1392, 128
        %v2128 = vsel %vm2096, %v1393, 128
        %v2129 = vsel %vm2097, %v1393, 128
        %v2130 = vsel %vm2098, %v1394, 128
        %v2131 = vsel %vm2099, %v1394, 128
        %v2132 = vsel %vm2100, %v1395, 128
        %v2133 = vsel %vm2101, %v1395, 128
        %v2134 = vsel %vm2102, %v1396, 128
        %v2135 = vsel %vm2103, %v1396, 128
        %v2136 = vsel %vm2104, %v1397, 128
        %v2137 = vsel %vm2105, %v1397, 128
        %v2138 = vsel %vm2106, %v1398, 128
        %v2139 = vsel %vm2107, %v1398, 128
        %v2140 = vsel %vm2108, %v1399, 128
        %v2141 = vsel %vm2109, %v1399, 128
        %v2142 = vsel %vm2110, %v1400, 128
        %v2143 = vsel %vm2111, %v1400, 128
        %v2144 = vsel %vm2112, %v1401, 128
        %v2145 = vsel %vm2113, %v1401, 128
        %v2146 = vsel %vm2114, %v1402, 128
        %v2147 = vsel %vm2115, %v1402, 128
        %v2148 = vsel %vm2116, %v1403, 128
        %v2149 = vsel %vm2117, %v1403, 128
        %vm2150 = vcmp.lt.s32.totalorder %v2118, %v2122
        %v2151 = vsel %vm2150, %v2118, %v2122
        %vm2152 = vcmp.lt.s32.totalorder %v2120, %v2124
        %v2153 = vsel %vm2152, %v2120, %v2124
        %vm2154 = vcmp.lt.s32.totalorder %v2151, %v2126
        %v2155 = vsel %vm2154, %v2151, %v2126
        %vm2156 = vcmp.lt.s32.totalorder %v2153, %v2128
        %v2157 = vsel %vm2156, %v2153, %v2128
        %vm2158 = vcmp.lt.s32.totalorder %v2155, %v2130
        %v2159 = vsel %vm2158, %v2155, %v2130
        %vm2160 = vcmp.lt.s32.totalorder %v2157, %v2132
        %v2161 = vsel %vm2160, %v2157, %v2132
        %vm2162 = vcmp.lt.s32.totalorder %v2159, %v2134
        %v2163 = vsel %vm2162, %v2159, %v2134
        %vm2164 = vcmp.lt.s32.totalorder %v2161, %v2136
        %v2165 = vsel %vm2164, %v2161, %v2136
        %vm2166 = vcmp.lt.s32.totalorder %v2163, %v2138
        %v2167 = vsel %vm2166, %v2163, %v2138
        %vm2168 = vcmp.lt.s32.totalorder %v2165, %v2140
        %v2169 = vsel %vm2168, %v2165, %v2140
        %vm2170 = vcmp.lt.s32.totalorder %v2167, %v2142
        %v2171 = vsel %vm2170, %v2167, %v2142
        %vm2172 = vcmp.lt.s32.totalorder %v2169, %v2144
        %v2173 = vsel %vm2172, %v2169, %v2144
        %vm2174 = vcmp.lt.s32.totalorder %v2171, %v2146
        %v2175 = vsel %vm2174, %v2171, %v2146
        %vm2176 = vcmp.lt.s32.totalorder %v2173, %v2148
        %v2177 = vsel %vm2176, %v2173, %v2148
        %vm2178 = vcmp.lt.s32.totalorder %v2175, %v2177
        %v2179 = vsel %vm2178, %v2175, %v2177
        %v2180 = vrot.slane %v2179, 4
        %vm2181 = vcmp.lt.s32.totalorder %v2179, %v2180
        %v2182 = vsel %vm2181, %v2179, %v2180
        %v2183 = vrot.slane %v2182, 2
        %vm2184 = vcmp.lt.s32.totalorder %v2182, %v2183
        %v2185 = vsel %vm2184, %v2182, %v2183
        %v2186 = vrot.slane %v2185, 1
        %vm2187 = vcmp.lt.s32.totalorder %v2185, %v2186
        %v2188 = vsel %vm2187, %v2185, %v2186
        %vm2189 = vcmp.lt.s32.totalorder %v2119, %v2123
        %v2190 = vsel %vm2189, %v2119, %v2123
        %vm2191 = vcmp.lt.s32.totalorder %v2121, %v2125
        %v2192 = vsel %vm2191, %v2121, %v2125
        %vm2193 = vcmp.lt.s32.totalorder %v2190, %v2127
        %v2194 = vsel %vm2193, %v2190, %v2127
        %vm2195 = vcmp.lt.s32.totalorder %v2192, %v2129
        %v2196 = vsel %vm2195, %v2192, %v2129
        %vm2197 = vcmp.lt.s32.totalorder %v2194, %v2131
        %v2198 = vsel %vm2197, %v2194, %v2131
        %vm2199 = vcmp.lt.s32.totalorder %v2196, %v2133
        %v2200 = vsel %vm2199, %v2196, %v2133
        %vm2201 = vcmp.lt.s32.totalorder %v2198, %v2135
        %v2202 = vsel %vm2201, %v2198, %v2135
        %vm2203 = vcmp.lt.s32.totalorder %v2200, %v2137
        %v2204 = vsel %vm2203, %v2200, %v2137
        %vm2205 = vcmp.lt.s32.totalorder %v2202, %v2139
        %v2206 = vsel %vm2205, %v2202, %v2139
        %vm2207 = vcmp.lt.s32.totalorder %v2204, %v2141
        %v2208 = vsel %vm2207, %v2204, %v2141
        %vm2209 = vcmp.lt.s32.totalorder %v2206, %v2143
        %v2210 = vsel %vm2209, %v2206, %v2143
        %vm2211 = vcmp.lt.s32.totalorder %v2208, %v2145
        %v2212 = vsel %vm2211, %v2208, %v2145
        %vm2213 = vcmp.lt.s32.totalorder %v2210, %v2147
        %v2214 = vsel %vm2213, %v2210, %v2147
        %vm2215 = vcmp.lt.s32.totalorder %v2212, %v2149
        %v2216 = vsel %vm2215, %v2212, %v2149
        %vm2217 = vcmp.lt.s32.totalorder %v2214, %v2216
        %v2218 = vsel %vm2217, %v2214, %v2216
        %v2219 = vrot.slane %v2218, 4
        %vm2220 = vcmp.lt.s32.totalorder %v2218, %v2219
        %v2221 = vsel %vm2220, %v2218, %v2219
        %v2222 = vrot.slane %v2221, 2
        %vm2223 = vcmp.lt.s32.totalorder %v2221, %v2222
        %v2224 = vsel %vm2223, %v2221, %v2222
        %v2225 = vrot.slane %v2224, 1
        %vm2226 = vcmp.lt.s32.totalorder %v2224, %v2225
        %v2227 = vsel %vm2226, %v2224, %v2225
        %vm2228 = vcmp.eq.s32.totalorder %v1388, %v2188
        %vm2229 = vcmp.eq.s32.totalorder %v1388, %v2227
        %vm2230 = vcmp.eq.s32.totalorder %v1389, %v2188
        %vm2231 = vcmp.eq.s32.totalorder %v1389, %v2227
        %vm2232 = vcmp.eq.s32.totalorder %v1390, %v2188
        %vm2233 = vcmp.eq.s32.totalorder %v1390, %v2227
        %vm2234 = vcmp.eq.s32.totalorder %v1391, %v2188
        %vm2235 = vcmp.eq.s32.totalorder %v1391, %v2227
        %vm2236 = vcmp.eq.s32.totalorder %v1392, %v2188
        %vm2237 = vcmp.eq.s32.totalorder %v1392, %v2227
        %vm2238 = vcmp.eq.s32.totalorder %v1393, %v2188
        %vm2239 = vcmp.eq.s32.totalorder %v1393, %v2227
        %vm2240 = vcmp.eq.s32.totalorder %v1394, %v2188
        %vm2241 = vcmp.eq.s32.totalorder %v1394, %v2227
        %vm2242 = vcmp.eq.s32.totalorder %v1395, %v2188
        %vm2243 = vcmp.eq.s32.totalorder %v1395, %v2227
        %vm2244 = vcmp.eq.s32.totalorder %v1396, %v2188
        %vm2245 = vcmp.eq.s32.totalorder %v1396, %v2227
        %vm2246 = vcmp.eq.s32.totalorder %v1397, %v2188
        %vm2247 = vcmp.eq.s32.totalorder %v1397, %v2227
        %vm2248 = vcmp.eq.s32.totalorder %v1398, %v2188
        %vm2249 = vcmp.eq.s32.totalorder %v1398, %v2227
        %vm2250 = vcmp.eq.s32.totalorder %v1399, %v2188
        %vm2251 = vcmp.eq.s32.totalorder %v1399, %v2227
        %vm2252 = vcmp.eq.s32.totalorder %v1400, %v2188
        %vm2253 = vcmp.eq.s32.totalorder %v1400, %v2227
        %vm2254 = vcmp.eq.s32.totalorder %v1401, %v2188
        %vm2255 = vcmp.eq.s32.totalorder %v1401, %v2227
        %vm2256 = vcmp.eq.s32.totalorder %v1402, %v2188
        %vm2257 = vcmp.eq.s32.totalorder %v1402, %v2227
        %vm2258 = vcmp.eq.s32.totalorder %v1403, %v2188
        %vm2259 = vcmp.eq.s32.totalorder %v1403, %v2227
        %v2260 = vadd.f32 %v2064, 1e-08
        %v2261 = vadd.f32 %v2085, 1e-08
        %v2262 = vrcp.pop %v2260
        %v2263 = vmul.f32 1.0, %v2262
        %v2264 = vrcp.pop %v2261
        %v2265 = vmul.f32 1.0, %v2264
        %v2266 = vsel %vm2228, %v2263, 0.0
        %v2267 = vsel %vm2229, %v2265, 0.0
        %v2268 = vsel %vm2230, %v2263, 0.0
        %v2269 = vsel %vm2231, %v2265, 0.0
        %v2270 = vsel %vm2232, %v2263, 0.0
        %v2271 = vsel %vm2233, %v2265, 0.0
        %v2272 = vsel %vm2234, %v2263, 0.0
        %v2273 = vsel %vm2235, %v2265, 0.0
        %v2274 = vsel %vm2236, %v2263, 0.0
        %v2275 = vsel %vm2237, %v2265, 0.0
        %v2276 = vsel %vm2238, %v2263, 0.0
        %v2277 = vsel %vm2239, %v2265, 0.0
        %v2278 = vsel %vm2240, %v2263, 0.0
        %v2279 = vsel %vm2241, %v2265, 0.0
        %v2280 = vsel %vm2242, %v2263, 0.0
        %v2281 = vsel %vm2243, %v2265, 0.0
        %v2282 = vsel %vm2244, %v2263, 0.0
        %v2283 = vsel %vm2245, %v2265, 0.0
        %v2284 = vsel %vm2246, %v2263, 0.0
        %v2285 = vsel %vm2247, %v2265, 0.0
        %v2286 = vsel %vm2248, %v2263, 0.0
        %v2287 = vsel %vm2249, %v2265, 0.0
        %v2288 = vsel %vm2250, %v2263, 0.0
        %v2289 = vsel %vm2251, %v2265, 0.0
        %v2290 = vsel %vm2252, %v2263, 0.0
        %v2291 = vsel %vm2253, %v2265, 0.0
        %v2292 = vsel %vm2254, %v2263, 0.0
        %v2293 = vsel %vm2255, %v2265, 0.0
        %v2294 = vsel %vm2256, %v2263, 0.0
        %v2295 = vsel %vm2257, %v2265, 0.0
        %v2296 = vsel %vm2258, %v2263, 0.0
        %v2297 = vsel %vm2259, %v2265, 0.0
        %v2298 = vadd.f32 %v1978, %v2266
        %v2299 = vadd.f32 %v1979, %v2267
        %v2300 = vadd.f32 %v1980, %v2268
        %v2301 = vadd.f32 %v1981, %v2269
        %v2302 = vadd.f32 %v1982, %v2270
        %v2303 = vadd.f32 %v1983, %v2271
        %v2304 = vadd.f32 %v1984, %v2272
        %v2305 = vadd.f32 %v1985, %v2273
        %v2306 = vadd.f32 %v1986, %v2274
        %v2307 = vadd.f32 %v1987, %v2275
        %v2308 = vadd.f32 %v1988, %v2276
        %v2309 = vadd.f32 %v1989, %v2277
        %v2310 = vadd.f32 %v1990, %v2278
        %v2311 = vadd.f32 %v1991, %v2279
        %v2312 = vadd.f32 %v1992, %v2280
        %v2313 = vadd.f32 %v1993, %v2281
        %v2314 = vadd.f32 %v1994, %v2282
        %v2315 = vadd.f32 %v1995, %v2283
        %v2316 = vadd.f32 %v1996, %v2284
        %v2317 = vadd.f32 %v1997, %v2285
        %v2318 = vadd.f32 %v1998, %v2286
        %v2319 = vadd.f32 %v1999, %v2287
        %v2320 = vadd.f32 %v2000, %v2288
        %v2321 = vadd.f32 %v2001, %v2289
        %v2322 = vadd.f32 %v2002, %v2290
        %v2323 = vadd.f32 %v2003, %v2291
        %v2324 = vadd.f32 %v2004, %v2292
        %v2325 = vadd.f32 %v2005, %v2293
        %v2326 = vadd.f32 %v2006, %v2294
        %v2327 = vadd.f32 %v2007, %v2295
        %v2328 = vadd.f32 %v2008, %v2296
        %v2329 = vadd.f32 %v2009, %v2297
        %v2330 = vadd.f32 %v2010, %v2263
        %v2331 = vadd.f32 %v2011, %v2265
        %v2332 = vrcp.pop %v2330
        %v2333 = vmul.f32 1.0, %v2332
        %v2334 = vrcp.pop %v2331
        %v2335 = vmul.f32 1.0, %v2334
        %v2336 = vmul.f32 %v2298, %v2333
        %v2337 = vmul.f32 %v2299, %v2335
        %v2338 = vmul.f32 %v2300, %v2333
        %v2339 = vmul.f32 %v2301, %v2335
        %v2340 = vmul.f32 %v2302, %v2333
        %v2341 = vmul.f32 %v2303, %v2335
        %v2342 = vmul.f32 %v2304, %v2333
        %v2343 = vmul.f32 %v2305, %v2335
        %v2344 = vmul.f32 %v2306, %v2333
        %v2345 = vmul.f32 %v2307, %v2335
        %v2346 = vmul.f32 %v2308, %v2333
        %v2347 = vmul.f32 %v2309, %v2335
        %v2348 = vmul.f32 %v2310, %v2333
        %v2349 = vmul.f32 %v2311, %v2335
        %v2350 = vmul.f32 %v2312, %v2333
        %v2351 = vmul.f32 %v2313, %v2335
        %v2352 = vmul.f32 %v2314, %v2333
        %v2353 = vmul.f32 %v2315, %v2335
        %v2354 = vmul.f32 %v2316, %v2333
        %v2355 = vmul.f32 %v2317, %v2335
        %v2356 = vmul.f32 %v2318, %v2333
        %v2357 = vmul.f32 %v2319, %v2335
        %v2358 = vmul.f32 %v2320, %v2333
        %v2359 = vmul.f32 %v2321, %v2335
        %v2360 = vmul.f32 %v2322, %v2333
        %v2361 = vmul.f32 %v2323, %v2335
        %v2362 = vmul.f32 %v2324, %v2333
        %v2363 = vmul.f32 %v2325, %v2335
        %v2364 = vmul.f32 %v2326, %v2333
        %v2365 = vmul.f32 %v2327, %v2335
        %v2366 = vmul.f32 %v2328, %v2333
        %v2367 = vmul.f32 %v2329, %v2335
        %v2368 = vpack.c.bf16 %v2338, %v2336
        %v2369 = vpack.c.bf16 %v2339, %v2337
        %v2370 = vpack.c.bf16 %v2342, %v2340
        %v2371 = vpack.c.bf16 %v2343, %v2341
        %v2372 = vpack.c.bf16 %v2346, %v2344
        %v2373 = vpack.c.bf16 %v2347, %v2345
        %v2374 = vpack.c.bf16 %v2350, %v2348
        %v2375 = vpack.c.bf16 %v2351, %v2349
        %v2376 = vpack.c.bf16 %v2354, %v2352
        %v2377 = vpack.c.bf16 %v2355, %v2353
        %v2378 = vpack.c.bf16 %v2358, %v2356
        %v2379 = vpack.c.bf16 %v2359, %v2357
        %v2380 = vpack.c.bf16 %v2362, %v2360
        %v2381 = vpack.c.bf16 %v2363, %v2361
        %v2382 = vpack.c.bf16 %v2366, %v2364
        %v2383 = vpack.c.bf16 %v2367, %v2365
        %v2384 = vld [vmem:[#allocation2] sm:$0xff]
        %v2385 = vld [vmem:[#allocation2 + $0x8] sm:$0xff]
        %2386 = vmatprep.subr.bf16.mxu0 %v2369
        %2387 = vmatpush1.bf16.msra.mxu0 %v2368
        %2388 = vmatprep.subr.bf16.mxu0 %v2371
        %2389 = vmatpush1.bf16.msra.mxu0 %v2370
        %2390 = vmatprep.subr.bf16.mxu0 %v2373
        %2391 = vmatpush1.bf16.msra.mxu0 %v2372
        %2392 = vmatprep.subr.bf16.mxu0 %v2375
        %2393 = vmatpush1.bf16.msra.mxu0 %v2374
        %2394 = vmatprep.subr.bf16.mxu0 %v2377
        %2395 = vmatpush1.bf16.msra.mxu0 %v2376
        %2396 = vmatprep.subr.bf16.mxu0 %v2379
        %2397 = vmatpush1.bf16.msra.mxu0 %v2378
        %2398 = vmatprep.subr.bf16.mxu0 %v2381
        %2399 = vmatpush1.bf16.msra.mxu0 %v2380
        %2400 = vmatprep.subr.bf16.mxu0 %v2383
        %2401 = vmatpush1.bf16.msra.mxu0 %v2382
        %2402 = vmatprep.subr.bf16.mxu0 0
        %2403 = vmatpush1.bf16.msra.mxu0 0
        %2404 = vmatprep.subr.bf16.mxu0 0
        %2405 = vmatpush1.bf16.msra.mxu0 0
        %2406 = vmatprep.subr.bf16.mxu0 0
        %2407 = vmatpush1.bf16.msra.mxu0 0
        %2408 = vmatprep.subr.bf16.mxu0 0
        %2409 = vmatpush1.bf16.msra.mxu0 0
        %2410 = vmatprep.subr.bf16.mxu0 0
        %2411 = vmatpush1.bf16.msra.mxu0 0
        %2412 = vmatprep.subr.bf16.mxu0 0
        %2413 = vmatpush1.bf16.msra.mxu0 0
        %2414 = vmatprep.subr.bf16.mxu0 0
        %2415 = vmatpush1.bf16.msra.mxu0 0
        %2416 = vmatprep.subr.bf16.mxu0 0
        %2417 = vmatpush1.bf16.msra.mxu0 0
        %2418 = vmatprep.mubr.bf16.mxu0 0
        %2419 = vmatmul.mubr.bf16.gmra.mrb[0].mxu0 %v2384
        %v2420 = vpop.f32.mrb[0].mxu0
        %v2421 = vadd.f32 0.0, %v2420
        %v2422 = vpop.f32.mrb[0].mxu0
        %v2423 = vadd.f32 0.0, %v2422
        %v2424 = vpop.f32.mrb[0].mxu0
        %v2425 = vadd.f32 0.0, %v2424
        %v2426 = vpop.f32.mrb[0].mxu0
        %v2427 = vadd.f32 0.0, %v2426
        %2428 = vmatprep.mubr.bf16.mxu0 0
        %2429 = vmatmul.mubr.bf16.gmra.mrb[0].mxu0 %v2385
        %v2430 = vpop.f32.mrb[0].mxu0
        %v2431 = vadd.f32 0.0, %v2430
        %v2432 = vpop.f32.mrb[0].mxu0
        %v2433 = vadd.f32 0.0, %v2432
        %v2434 = vpop.f32.mrb[0].mxu0
        %v2435 = vadd.f32 0.0, %v2434
        %v2436 = vpop.f32.mrb[0].mxu0
        %v2437 = vadd.f32 0.0, %v2436
        %2438 = vdwg.mxu0
        %v2439 = vld [vmem:[%s408] sm:$0xff]
        %v2440 = vld [vmem:[%s408 + $0x8] sm:$0xff]
        %v2441 = vld [vmem:[%s408 + $0x10] sm:$0xff]
        %v2442 = vld [vmem:[%s408 + $0x18] sm:$0xff]
        %v2443 = vld [vmem:[%s408 + $0x20] sm:$0xff]
        %v2444 = vld [vmem:[%s408 + $0x28] sm:$0xff]
        %v2445 = vld [vmem:[%s408 + $0x30] sm:$0xff]
        %v2446 = vld [vmem:[%s408 + $0x38] sm:$0xff]
        %v2447 = vadd.f32 %v2439, %v2421
        %v2448 = vadd.f32 %v2440, %v2423
        %v2449 = vadd.f32 %v2441, %v2425
        %v2450 = vadd.f32 %v2442, %v2427
        %v2451 = vadd.f32 %v2443, %v2431
        %v2452 = vadd.f32 %v2444, %v2433
        %v2453 = vadd.f32 %v2445, %v2435
        %v2454 = vadd.f32 %v2446, %v2437
        %2455 = vst [vmem:[%s379] sm:$0xff] %v2447
        %2456 = vst [vmem:[%s379 + $0x8] sm:$0xff] %v2448
        %2457 = vst [vmem:[%s379 + $0x10] sm:$0xff] %v2449
        %2458 = vst [vmem:[%s379 + $0x18] sm:$0xff] %v2450
        %2459 = vst [vmem:[%s379 + $0x20] sm:$0xff] %v2451
        %2460 = vst [vmem:[%s379 + $0x28] sm:$0xff] %v2452
        %2461 = vst [vmem:[%s379 + $0x30] sm:$0xff] %v2453
        %2462 = vst [vmem:[%s379 + $0x38] sm:$0xff] %v2454
        %s2463 = sand.u32 %s236, 1
        %s2464 = scalar_lea.sflag [#allocation4], %s2463
        %s2465 = sand.u32 %s236, 1
        %s2466 = smul.addr %s2465, 64
        %s2467 = scalar_lea.vmem [#allocation3], %s2466
        // Predicated region
        $region57: #{transition_up.3} parent=51 // pred_check
          %p2468 = pneg %p246
        $region58: #{transition_up.3} parent=51 // pred_check_branch
          %2470 = sbr.rel (%p2468) target = $region60
        $region59: #{transition_up.3} parent=51 // pred_region
          %s2471 = smul.u32 2, %s27
          %s2473 = ssub.s32 1024, 1024
          %2474 = vsyncadd %s2464, %s2473
          %s2475 = smul.addr %s26, 8
          %s2476 = sadd.s32 %s2471, %s2475
          %s2477 = smul.addr %s2476, 128
          %s2478 = scalar_lea.hbm %s8, %s2477
          %s2479 = sshll.u32 %s2467, 4
          %s2480 = int_to_ptr.vmem [resolvable:$true] %s2479
          %2485 = dma.vmem_to_hbm [thread:$0]  %s2480, 1024, %s2478, %s2464, 256, 256, 16
        $region60: #{transition_up.3} parent=51 // pred_fallthru
          _
      $region52: #{transition_up.3} parent=5 // pred_fallthru
        _
      %p2486 = scmp.le.s32.totalorder 2, %s17
      // Predicated region
      $region61: #{transition_up.3} parent=5 // pred_check
        %p2487 = pneg %p2486
      $region62: #{transition_up.3} parent=5 // pred_check_branch
        %2489 = sbr.rel (%p2487) target = $region64
      $region63: #{transition_up.3} parent=5 // pred_region
        %s2490 = ssub.s32 %s17, 2
        // Predicated region
        $region65: #{transition_up.3} parent=63 // pred_check
          %p2491 = pneg %p252
        $region66: #{transition_up.3} parent=63 // pred_check_branch
          %2493 = sbr.rel (%p2491) target = $region68
        $region67: #{transition_up.3} parent=63 // pred_region
          %s2494 = sand.u32 %s237, 1
          %s2495 = scalar_lea.sflag [#allocation4], %s2494
          %s2496 = sand.u32 %s237, 1
          %s2497 = smul.addr %s2496, 64
          %s2498 = scalar_lea.vmem [#allocation3], %s2497
          %2499 = dma.done %s2495, 1024
        $region68: #{transition_up.3} parent=63 // pred_fallthru
          _
      $region64: #{transition_up.3} parent=5 // pred_fallthru
        _
    $region6: #{transition_up.3} parent=1 // loop_footer
      %s21 = sadd.s32 1, %s17
    $region7: #{transition_up.3} parent=1 // loop_footer_branch
      %16 = sbr.rel target = $region3
    $region8: #{transition_up.3} parent=1 // loop_exit
      _
    %2500 = vsyncpa [#allocation4], 1
    %s2501 = scalar_lea.sflag [#allocation4], 1
    %2502 = vsyncpa %s2501, 1

</llo_original>
